<compile_context>
chip_gen: v7x
topology: tpu7x:2x2x1
jax: 0.10.0
libtpu: 0.0.40
codegen_flags: <defaults>
</compile_context>

<pallas_src>
import functools

import numpy as np
import jax
import jax.numpy as jnp
from jax.experimental import pallas as pl
from jax.experimental.pallas import tpu as pltpu

LANE = 128


def make_divisible(x, divisible_by=8):
    return int(np.ceil(x * 1.0 / divisible_by) * divisible_by)


def _round_up(x, m):
    return ((x + m - 1) // m) * m


def _act(name, x):
    if name == "relu":
        return jnp.maximum(x, 0.0)
    if name == "hard_swish":
        return x * jnp.clip(x + 3.0, 0.0, 6.0) * (1.0 / 6.0)
    if name == "hard_sigmoid":
        return jnp.clip(x + 3.0, 0.0, 6.0) * (1.0 / 6.0)
    if name in ("", None):
        return x
    raise ValueError(f"unknown act {name}")


def _depthwise_dtype():
    """bf16 VPU path on v6e/v7x, f32 elsewhere (v5e and older have no bf16 VALU)."""
    try:
        kind = jax.devices()[0].device_kind.lower()
    except Exception:
        return jnp.float32
    if ("v6" in kind) or ("v7" in kind) or ("7x" in kind):
        return jnp.bfloat16
    return jnp.float32


def _vmem_limit_bytes(Hp, Wpad, Ho, Wo, Cin_p, Cmid_p, Cout_p, S, dw_dtype, params):
    """Scoped-VMEM limit sized from the real footprint, with headroom."""
    f32 = 4
    dwb = np.dtype(dw_dtype).itemsize
    wacc = (Wo - 1) * S + 1
    est = (
        2 * Hp * Wpad * Cin_p * f32                        # double-buffered x block
        + 2 * Ho * Wo * Cout_p * f32                       # double-buffered out block
        + 2 * Hp * Wpad * f32                              # double-buffered mask
        + 2 * sum(int(np.prod(p.shape)) * p.dtype.itemsize for p in params.values())
        + Hp * Wpad * Cmid_p * (f32 + dwb)                 # expand result + h
        + Hp * wacc * Cmid_p * dwb                         # live column-shifted view
        + 2 * Ho * wacc * Cmid_p * f32                     # depthwise accumulator (+tmp)
        + 2 * Ho * Wo * Cout_p * f32                       # project output / residual tmp
    )
    try:
        cap = int(pltpu.get_tpu_info().vmem_capacity_bytes)
    except Exception:
        cap = 64 * 1024 * 1024
    return int(min(int(0.9 * cap), max(32 * 1024 * 1024, 2 * est)))


# ----------------------------------------------------------------------------
# Pallas kernel: one (spatially pre-padded) batch element per grid step.
# ----------------------------------------------------------------------------
def _res_bottleneck_kernel(x_ref, mask_ref, w_exp_ref, b_exp_ref,
                           w_dw_ref, b_dw_ref, w_se1_ref, b_se1_ref,
                           w_se2_ref, b_se2_ref, w_pw_ref, b_pw_ref,
                           out_ref, *, K, S, P, Wl, H, W, act, first_conv,
                           use_se, shortcut, dw_dtype):
    _, Hp, Wpad, Cin = x_ref.shape         # spatially + channel padded input
    _, Ho, Wo, Cout = out_ref.shape        # channel padded output
    Cmid = w_dw_ref.shape[-1]

    xp = x_ref[0]                          # (Hp, Wpad, Cin) f32, border is zero

    # ---- expand: 1x1 conv (+folded BN) + act  ->  (Hp, Wpad, Cmid) ----
    if first_conv:
        h = jnp.dot(xp.reshape(Hp * Wpad, Cin).astype(jnp.bfloat16),
                    w_exp_ref[...],                        # bf16 MXU operands
                    preferred_element_type=jnp.float32) + b_exp_ref[...]
        h = _act(act, h).reshape(Hp, Wpad, Cmid).astype(dw_dtype)
        # re-zero the spatial border (the folded-BN bias polluted the zero pad)
        h = h * mask_ref[...].astype(dw_dtype)
    else:
        h = xp.astype(dw_dtype)            # Cin == Cmid, border already zero

    # ---- depthwise KxK conv (+folded BN), bf16 mul / f32 accumulate ----
    w_dw = w_dw_ref[...].astype(dw_dtype)  # (K, K, Cmid), loaded once
    Wacc = (Wo - 1) * S + 1                # stride-1 columns actually needed
    base = Wl - P                          # first input column for output col 0
    row_hi = (Ho - 1) * S + 1
    acc = jnp.zeros((Ho, Wacc, Cmid), jnp.float32) + b_dw_ref[...]
    for dx in range(K):
        # one sublane-crossing column shift per dx (hoisted out of the dy loop)
        hc = h[:, base + dx: base + dx + Wacc, :]
        for dy in range(K):
            # row subsampling before the accumulate: no S^2 wasted work
            acc = acc + hc[dy: dy + row_hi: S] * w_dw[dy, dx]
    acc = _act(act, acc)
    if S > 1:
        acc = acc[:, ::S, :]               # single W subsample at the very end
    # acc: (Ho, Wo, Cmid) f32

    # ---- Squeeze-and-Excite ----
    if use_se:
        inv_hw = 1.0 / float(Ho * Wo)
        pooled = jnp.sum(acc.reshape(Ho * Wo, Cmid), axis=0, keepdims=True) * inv_hw
        s = jnp.dot(pooled.astype(jnp.bfloat16), w_se1_ref[...],
                    preferred_element_type=jnp.float32) + b_se1_ref[...]
        s = _act("relu", s)
        s = jnp.dot(s.astype(jnp.bfloat16), w_se2_ref[...],
                    preferred_element_type=jnp.float32) + b_se2_ref[...]
        s = _act("hard_sigmoid", s)
        acc = acc * s.reshape(1, 1, Cmid)

    # ---- project: 1x1 conv (+folded BN), no activation ----
    out = jnp.dot(acc.reshape(Ho * Wo, Cmid).astype(jnp.bfloat16), w_pw_ref[...],
                  preferred_element_type=jnp.float32) + b_pw_ref[...]
    out = out.reshape(Ho, Wo, Cout)

    if shortcut:
        # Wl is a multiple of 8 when shortcut=True -> tile-aligned residual add
        out = out + xp[P:P + H, Wl:Wl + W, :]

    out_ref[0] = out.astype(out_ref.dtype)   # lane-dense (Cout % 128 == 0) store


# ----------------------------------------------------------------------------
# Wrapper: logical NHWC in / logical NHWC out.  Does the one-time channel and
# spatial zero padding (HBM side) and slices the padded channels back off.
# ----------------------------------------------------------------------------
def res_bottleneck_pallas(x_nhwc, params, cfg):
    N, H, W, Cin = x_nhwc.shape
    K, S = cfg["kernel_size"], cfg["stride"]
    P = (K - 1) // 2
    Ho = (H + 2 * P - K) // S + 1
    Wo = (W + 2 * P - K) // S + 1

    Cin_p = params["w_exp"].shape[0]
    Cmid_p = params["w_dw"].shape[-1]
    Cout_p = params["w_pw"].shape[-1]

    first_conv = cfg["first_conv"]
    shortcut = cfg["shortcut"]
    if not first_conv:
        assert Cin_p == Cmid_p, "first_conv=False requires num_in == num_mid"
    if shortcut:
        assert S == 1 and Cin_p == Cout_p and Cin == cfg["num_out"]

    dw_dtype = _depthwise_dtype()

    # Spatial zero pad once in HBM.  The left column pad is rounded up to a
    # full sublane tile (8) when the residual add is taken so the shortcut
    # slice is tile aligned; the total width is rounded up to a multiple of 8
    # so the in-kernel (Hp, Wpad, C) <-> (Hp*Wpad, C) reshapes stay aligned.
    Hp = H + 2 * P
    Wl = _round_up(P, 8) if shortcut else P
    Wpad = _round_up(Wl + W + P, 8)
    xp = jnp.pad(x_nhwc, ((0, 0), (P, P), (Wl, Wpad - Wl - W), (0, Cin_p - Cin)))

    # Interior mask (1 inside the original HxW window, 0 on the zero pad); only
    # used on the first_conv path, where the folded-BN bias pollutes the pad.
    ri = np.arange(Hp)
    ci = np.arange(Wpad)
    interior = (((ri >= P) & (ri < P + H))[:, None]
                & ((ci >= Wl) & (ci < Wl + W))[None, :])
    mask = jnp.asarray(interior[:, :, None].astype(np.float32))   # (Hp, Wpad, 1)

    kernel = functools.partial(
        _res_bottleneck_kernel, K=K, S=S, P=P, Wl=Wl, H=H, W=W, act=cfg["act"],
        first_conv=first_conv, use_se=cfg["use_se"], shortcut=shortcut,
        dw_dtype=dw_dtype)

    def full(shape):
        nd = len(shape)
        return pl.BlockSpec(shape, lambda n, _nd=nd: (0,) * _nd)

    in_specs = [
        pl.BlockSpec((1, Hp, Wpad, Cin_p), lambda n: (n, 0, 0, 0)),
        full(mask.shape),
        full(params["w_exp"].shape), full(params["b_exp"].shape),
        full(params["w_dw"].shape), full(params["b_dw"].shape),
        full(params["w_se1"].shape), full(params["b_se1"].shape),
        full(params["w_se2"].shape), full(params["b_se2"].shape),
        full(params["w_pw"].shape), full(params["b_pw"].shape),
    ]
    out_spec = pl.BlockSpec((1, Ho, Wo, Cout_p), lambda n: (n, 0, 0, 0))

    vmem_limit = _vmem_limit_bytes(Hp, Wpad, Ho, Wo, Cin_p, Cmid_p, Cout_p,
                                   S, dw_dtype, params)

    out_p = pl.pallas_call(
        kernel,
        out_shape=jax.ShapeDtypeStruct((N, Ho, Wo, Cout_p), x_nhwc.dtype),
        grid_spec=pltpu.PrefetchScalarGridSpec(
            num_scalar_prefetch=0,
            grid=(N,),
            in_specs=in_specs,
            out_specs=out_spec),
        compiler_params=pltpu.CompilerParams(
            dimension_semantics=("parallel",),      # shard batch across cores
            vmem_limit_bytes=vmem_limit),
    )(xp, mask,
      params["w_exp"], params["b_exp"],
      params["w_dw"], params["b_dw"],
      params["w_se1"], params["b_se1"],
      params["w_se2"], params["b_se2"],
      params["w_pw"], params["b_pw"])

    return out_p[..., :cfg["num_out"]]


# ----------------------------------------------------------------------------
# Pure-JAX reference.  mm_dtype / dw_dtype let it either mirror the kernel's
# mixed-precision math exactly (tight check) or run in full f32 (sanity check
# against precision drift of the bf16 paths).
# ----------------------------------------------------------------------------
def res_bottleneck_ref(x_nhwc, params, cfg, *, mm_dtype=jnp.bfloat16,
                       dw_dtype=jnp.bfloat16):
    N, H, W, Cin = x_nhwc.shape
    K, S = cfg["kernel_size"], cfg["stride"]
    P = (K - 1) // 2
    Ho = (H + 2 * P - K) // S + 1
    Wo = (W + 2 * P - K) // S + 1
    Cin_p = params["w_exp"].shape[0]
    Cmid_p = params["w_dw"].shape[-1]

    def mm(a, w):
        return jnp.dot(a.astype(mm_dtype), w.astype(mm_dtype),
                       preferred_element_type=jnp.float32)

    x = jnp.pad(x_nhwc, ((0, 0), (0, 0), (0, 0), (0, Cin_p - Cin)))

    if cfg["first_conv"]:
        h = mm(x.reshape(N * H * W, Cin_p), params["w_exp"]) + params["b_exp"]
        h = _act(cfg["act"], h).reshape(N, H, W, Cmid_p)
    else:
        h = x
    h = h.astype(dw_dtype)

    hp = jnp.pad(h, ((0, 0), (P, P), (P, P), (0, 0)))
    w_dw = params["w_dw"].astype(dw_dtype)
    acc = jnp.zeros((N, Ho, Wo, Cmid_p), jnp.float32) + params["b_dw"]
    for dx in range(K):                       # same accumulation order as kernel
        for dy in range(K):
            acc = acc + hp[:, dy:dy + (Ho - 1) * S + 1:S,
                           dx:dx + (Wo - 1) * S + 1:S, :] * w_dw[dy, dx]
    acc = _act(cfg["act"], acc)

    if cfg["use_se"]:
        pooled = (jnp.sum(acc.reshape(N, Ho * Wo, Cmid_p), axis=1)
                  * (1.0 / float(Ho * Wo)))
        s = _act("relu", mm(pooled, params["w_se1"]) + params["b_se1"])
        s = _act("hard_sigmoid", mm(s, params["w_se2"]) + params["b_se2"])
        acc = acc * s[:, None, None, :]

    out = (mm(acc.reshape(N * Ho * Wo, Cmid_p), params["w_pw"])
           + params["b_pw"]).reshape(N, Ho, Wo, -1)
    if cfg["shortcut"]:
        out = out + x
    return out[..., :cfg["num_out"]]


# ----------------------------------------------------------------------------
# Parameter construction: eval-mode BN folded into convs, channels padded to
# multiples of 128 (lane-dense), matmul weights stored in bf16.
# ----------------------------------------------------------------------------
def _fold_bn(w, gamma, beta, mean, var, eps=1e-5):
    scale = gamma / jnp.sqrt(var + eps)
    return w * scale, (beta - mean * scale)


def init_params(key, num_in, num_mid, num_out, kernel_size):
    num_se = make_divisible(num_mid // 4)
    ci, cm, cs, co = (_round_up(c, LANE) for c in (num_in, num_mid, num_se, num_out))
    keys = iter(jax.random.split(key, 32))

    def rnd(shape, sd=0.2):
        return sd * jax.random.normal(next(keys), shape, jnp.float32)

    def bn(c):
        gamma = 1.0 + 0.1 * jax.random.normal(next(keys), (c,), jnp.float32)
        beta = 0.05 * jax.random.normal(next(keys), (c,), jnp.float32)
        mean = 0.02 * jax.random.normal(next(keys), (c,), jnp.float32)
        var = 1.0 + 0.1 * jax.random.uniform(next(keys), (c,), jnp.float32)
        return gamma, beta, mean, var

    def pad_mat(w, r, c):
        return jnp.pad(w, ((0, r - w.shape[0]), (0, c - w.shape[1])))

    def pad_vec(b, c):
        return jnp.pad(b, ((0, c - b.shape[0]),)).reshape(1, c)

    w_exp, b_exp = _fold_bn(rnd((num_in, num_mid)), *bn(num_mid))
    w_dw, b_dw = _fold_bn(rnd((kernel_size, kernel_size, num_mid)), *bn(num_mid))
    w_se1, b_se1 = rnd((num_mid, num_se)), rnd((num_se,), 0.05)
    w_se2, b_se2 = rnd((num_se, num_mid)), rnd((num_mid,), 0.05)
    w_pw, b_pw = _fold_bn(rnd((num_mid, num_out)), *bn(num_out))

    return {
        # 1x1-conv (MXU) weights: channel-padded, bf16 operands
        "w_exp": pad_mat(w_exp, ci, cm).astype(jnp.bfloat16),
        "b_exp": pad_vec(b_exp, cm),
        "w_se1": pad_mat(w_se1, cm, cs).astype(jnp.bfloat16),
        "b_se1": pad_vec(b_se1, cs),
        "w_se2": pad_mat(w_se2, cs, cm).astype(jnp.bfloat16),
        "b_se2": pad_vec(b_se2, cm),
        "w_pw": pad_mat(w_pw, cm, co).astype(jnp.bfloat16),
        "b_pw": pad_vec(b_pw, co),
        # depthwise conv weights stored f32; cast in-kernel per chip generation
        "w_dw": jnp.pad(w_dw, ((0, 0), (0, 0), (0, cm - num_mid))),
        "b_dw": pad_vec(b_dw, cm),
    }


if __name__ == "__main__":
    configs = [
        # ResBottleneck(kernel_size=3, num_in=8,  num_mid=16, num_out=8,
        #               use_se=True,  act='relu',       strides=1)  -> residual path
        dict(num_in=8, num_mid=16, num_out=8, kernel_size=3, stride=1,
             use_se=True, act="relu"),
        # ResBottleneck(kernel_size=3, num_in=16, num_mid=16, num_out=24,
        #               use_se=False, act='hard_swish', strides=1)  -> no expand / no SE / no shortcut
        dict(num_in=16, num_mid=16, num_out=24, kernel_size=3, stride=1,
             use_se=False, act="hard_swish"),
    ]

    N, H, W = 2, 16, 16
    dw_dtype = _depthwise_dtype()
    root = jax.random.PRNGKey(0)

    for c in configs:
        root, kx, kp = jax.random.split(root, 3)
        cfg = {
            "kernel_size": c["kernel_size"],
            "stride": c["stride"],
            "act": c["act"],
            "use_se": c["use_se"],
            "first_conv": c["num_in"] != c["num_mid"],
            "shortcut": (c["num_in"] == c["num_out"]) and (c["stride"] == 1),
            "num_out": c["num_out"],
        }

        x_nchw = jax.random.normal(kx, (N, c["num_in"], H, W), jnp.float32)  # PyTorch layout
        params = init_params(kp, c["num_in"], c["num_mid"], c["num_out"],
                             c["kernel_size"])

        x_nhwc = jnp.transpose(x_nchw, (0, 2, 3, 1))                 # kernel layout
        out_nhwc = jax.block_until_ready(res_bottleneck_pallas(x_nhwc, params, cfg))
        out_nchw = jnp.transpose(out_nhwc, (0, 3, 1, 2))             # back to NCHW
        assert out_nchw.shape == (N, c["num_out"], H, W)

        # Tight check against a reference that mirrors the kernel's precision.
        ref_mirror = res_bottleneck_ref(x_nhwc, params, cfg,
                                        mm_dtype=jnp.bfloat16, dw_dtype=dw_dtype)
        np.testing.assert_allclose(np.asarray(out_nhwc), np.asarray(ref_mirror),
                                   rtol=1e-2, atol=1e-2)

        # Loose sanity check against a full-f32 reference (bf16 drift bound).
        ref_f32 = res_bottleneck_ref(x_nhwc, params, cfg,
                                     mm_dtype=jnp.float32, dw_dtype=jnp.float32)
        np.testing.assert_allclose(np.asarray(out_nhwc), np.asarray(ref_f32),
                                   rtol=5e-2, atol=5e-2)

    print("KERNEL_OK")
</pallas_src>

<mosaic_0001>
module attributes {stable_mosaic.version = 11 : i64} {
  func.func @_res_bottleneck_kernel(%arg0: i32, %arg1: memref<1x18x32x128xf32, #tpu.memory_space<vmem>>, %arg2: memref<18x32x1xf32, #tpu.memory_space<vmem>>, %arg3: memref<128x128xbf16, #tpu.memory_space<vmem>>, %arg4: memref<1x128xf32, #tpu.memory_space<vmem>>, %arg5: memref<3x3x128xf32, #tpu.memory_space<vmem>>, %arg6: memref<1x128xf32, #tpu.memory_space<vmem>>, %arg7: memref<128x128xbf16, #tpu.memory_space<vmem>>, %arg8: memref<1x128xf32, #tpu.memory_space<vmem>>, %arg9: memref<128x128xbf16, #tpu.memory_space<vmem>>, %arg10: memref<1x128xf32, #tpu.memory_space<vmem>>, %arg11: memref<128x128xbf16, #tpu.memory_space<vmem>>, %arg12: memref<1x128xf32, #tpu.memory_space<vmem>>, %arg13: memref<1x16x16x128xf32, #tpu.memory_space<vmem>>) attributes {dimension_semantics = [#tpu.dimension_semantics<parallel>], iteration_bounds = array<i64: 2>, scalar_prefetch = 0 : i64, scratch_operands = 0 : i64, tpu.core_type = #tpu.core_type<tc>, window_params = [{transform_indices = @transform_0, window_bounds = array<i64: 1, 18, 32, 128>}, {pipeline_mode = #tpu.pipeline_mode<synchronous>, transform_indices = @transform_1, window_bounds = array<i64: 18, 32, 1>}, {pipeline_mode = #tpu.pipeline_mode<synchronous>, transform_indices = @transform_2, window_bounds = array<i64: 128, 128>}, {pipeline_mode = #tpu.pipeline_mode<synchronous>, transform_indices = @transform_3, window_bounds = array<i64: 1, 128>}, {pipeline_mode = #tpu.pipeline_mode<synchronous>, transform_indices = @transform_4, window_bounds = array<i64: 3, 3, 128>}, {pipeline_mode = #tpu.pipeline_mode<synchronous>, transform_indices = @transform_5, window_bounds = array<i64: 1, 128>}, {pipeline_mode = #tpu.pipeline_mode<synchronous>, transform_indices = @transform_6, window_bounds = array<i64: 128, 128>}, {pipeline_mode = #tpu.pipeline_mode<synchronous>, transform_indices = @transform_7, window_bounds = array<i64: 1, 128>}, {pipeline_mode = #tpu.pipeline_mode<synchronous>, transform_indices = @transform_8, window_bounds = array<i64: 128, 128>}, {pipeline_mode = #tpu.pipeline_mode<synchronous>, transform_indices = @transform_9, window_bounds = array<i64: 1, 128>}, {pipeline_mode = #tpu.pipeline_mode<synchronous>, transform_indices = @transform_10, window_bounds = array<i64: 128, 128>}, {pipeline_mode = #tpu.pipeline_mode<synchronous>, transform_indices = @transform_11, window_bounds = array<i64: 1, 128>}, {transform_indices = @transform_12, window_bounds = array<i64: 1, 16, 16, 128>}]} {
    %c0 = arith.constant 0 : index
    %c0_0 = arith.constant 0 : index
    %c0_1 = arith.constant 0 : index
    %c0_2 = arith.constant 0 : index
    %0 = vector.load %arg1[%c0, %c0_0, %c0_1, %c0_2] : memref<1x18x32x128xf32, #tpu.memory_space<vmem>>, vector<1x18x32x128xf32>
    %1 = vector.shape_cast %0 : vector<1x18x32x128xf32> to vector<18x32x128xf32>
    %2 = vector.shape_cast %1 : vector<18x32x128xf32> to vector<576x128xf32>
    %3 = arith.truncf %2 : vector<576x128xf32> to vector<576x128xbf16>
    %c0_3 = arith.constant 0 : index
    %c0_4 = arith.constant 0 : index
    %4 = vector.load %arg3[%c0_3, %c0_4] : memref<128x128xbf16, #tpu.memory_space<vmem>>, vector<128x128xbf16>
    %cst = arith.constant dense<0.000000e+00> : vector<576x128xf32>
    %5 = tpu.matmul %3, %4, %cst {dimension_numbers = #tpu.dot_dimension_numbers<[1], [0], [0], [1], [0, 0, 1, 1], [], []>} : vector<576x128xbf16>, vector<128x128xbf16>, vector<576x128xf32> -> vector<576x128xf32>
    %c0_5 = arith.constant 0 : index
    %c0_6 = arith.constant 0 : index
    %6 = vector.load %arg4[%c0_5, %c0_6] : memref<1x128xf32, #tpu.memory_space<vmem>>, vector<1x128xf32>
    %7 = vector.broadcast %6 : vector<1x128xf32> to vector<576x128xf32>
    %8 = arith.addf %5, %7 : vector<576x128xf32>
    %cst_7 = arith.constant 0.000000e+00 : f32
    %9 = vector.broadcast %cst_7 : f32 to vector<576x128xf32>
    %10 = arith.maximumf %8, %9 : vector<576x128xf32>
    %11 = vector.shape_cast %10 : vector<576x128xf32> to vector<18x32x128xf32>
    %c0_8 = arith.constant 0 : index
    %c0_9 = arith.constant 0 : index
    %c0_10 = arith.constant 0 : index
    %12 = vector.load %arg2[%c0_8, %c0_9, %c0_10] : memref<18x32x1xf32, #tpu.memory_space<vmem>>, vector<18x32x1xf32>
    %13 = vector.broadcast %12 : vector<18x32x1xf32> to vector<18x32x128xf32>
    %14 = arith.mulf %11, %13 : vector<18x32x128xf32>
    %c0_11 = arith.constant 0 : index
    %c0_12 = arith.constant 0 : index
    %c0_13 = arith.constant 0 : index
    %15 = vector.load %arg5[%c0_11, %c0_12, %c0_13] : memref<3x3x128xf32, #tpu.memory_space<vmem>>, vector<3x3x128xf32>
    %cst_14 = arith.constant 0.000000e+00 : f32
    %16 = vector.broadcast %cst_14 : f32 to vector<16x16x128xf32>
    %c0_15 = arith.constant 0 : index
    %c0_16 = arith.constant 0 : index
    %17 = vector.load %arg6[%c0_15, %c0_16] : memref<1x128xf32, #tpu.memory_space<vmem>>, vector<1x128xf32>
    %18 = vector.shape_cast %17 : vector<1x128xf32> to vector<1x1x128xf32>
    %19 = vector.broadcast %18 : vector<1x1x128xf32> to vector<16x16x128xf32>
    %20 = arith.addf %16, %19 : vector<16x16x128xf32>
    %21 = vector.extract_strided_slice %14 {offsets = [0, 7, 0], sizes = [18, 16, 128], strides = [1, 1, 1]} : vector<18x32x128xf32> to vector<18x16x128xf32>
    %22 = vector.extract_strided_slice %21 {offsets = [0, 0, 0], sizes = [16, 16, 128], strides = [1, 1, 1]} : vector<18x16x128xf32> to vector<16x16x128xf32>
    %23 = vector.extract_strided_slice %15 {offsets = [0, 0, 0], sizes = [1, 1, 128], strides = [1, 1, 1]} : vector<3x3x128xf32> to vector<1x1x128xf32>
    %24 = vector.shape_cast %23 : vector<1x1x128xf32> to vector<128xf32>
    %25 = vector.shape_cast %24 : vector<128xf32> to vector<1x1x128xf32>
    %26 = vector.broadcast %25 : vector<1x1x128xf32> to vector<16x16x128xf32>
    %27 = arith.mulf %22, %26 : vector<16x16x128xf32>
    %28 = arith.addf %20, %27 : vector<16x16x128xf32>
    %29 = vector.extract_strided_slice %21 {offsets = [1, 0, 0], sizes = [16, 16, 128], strides = [1, 1, 1]} : vector<18x16x128xf32> to vector<16x16x128xf32>
    %30 = vector.extract_strided_slice %15 {offsets = [1, 0, 0], sizes = [1, 1, 128], strides = [1, 1, 1]} : vector<3x3x128xf32> to vector<1x1x128xf32>
    %31 = vector.shape_cast %30 : vector<1x1x128xf32> to vector<128xf32>
    %32 = vector.shape_cast %31 : vector<128xf32> to vector<1x1x128xf32>
    %33 = vector.broadcast %32 : vector<1x1x128xf32> to vector<16x16x128xf32>
    %34 = arith.mulf %29, %33 : vector<16x16x128xf32>
    %35 = arith.addf %28, %34 : vector<16x16x128xf32>
    %36 = vector.extract_strided_slice %21 {offsets = [2, 0, 0], sizes = [16, 16, 128], strides = [1, 1, 1]} : vector<18x16x128xf32> to vector<16x16x128xf32>
    %37 = vector.extract_strided_slice %15 {offsets = [2, 0, 0], sizes = [1, 1, 128], strides = [1, 1, 1]} : vector<3x3x128xf32> to vector<1x1x128xf32>
    %38 = vector.shape_cast %37 : vector<1x1x128xf32> to vector<128xf32>
    %39 = vector.shape_cast %38 : vector<128xf32> to vector<1x1x128xf32>
    %40 = vector.broadcast %39 : vector<1x1x128xf32> to vector<16x16x128xf32>
    %41 = arith.mulf %36, %40 : vector<16x16x128xf32>
    %42 = arith.addf %35, %41 : vector<16x16x128xf32>
    %43 = vector.extract_strided_slice %14 {offsets = [0, 8, 0], sizes = [18, 16, 128], strides = [1, 1, 1]} : vector<18x32x128xf32> to vector<18x16x128xf32>
    %44 = vector.extract_strided_slice %43 {offsets = [0, 0, 0], sizes = [16, 16, 128], strides = [1, 1, 1]} : vector<18x16x128xf32> to vector<16x16x128xf32>
    %45 = vector.extract_strided_slice %15 {offsets = [0, 1, 0], sizes = [1, 1, 128], strides = [1, 1, 1]} : vector<3x3x128xf32> to vector<1x1x128xf32>
    %46 = vector.shape_cast %45 : vector<1x1x128xf32> to vector<128xf32>
    %47 = vector.shape_cast %46 : vector<128xf32> to vector<1x1x128xf32>
    %48 = vector.broadcast %47 : vector<1x1x128xf32> to vector<16x16x128xf32>
    %49 = arith.mulf %44, %48 : vector<16x16x128xf32>
    %50 = arith.addf %42, %49 : vector<16x16x128xf32>
    %51 = vector.extract_strided_slice %43 {offsets = [1, 0, 0], sizes = [16, 16, 128], strides = [1, 1, 1]} : vector<18x16x128xf32> to vector<16x16x128xf32>
    %52 = vector.extract_strided_slice %15 {offsets = [1, 1, 0], sizes = [1, 1, 128], strides = [1, 1, 1]} : vector<3x3x128xf32> to vector<1x1x128xf32>
    %53 = vector.shape_cast %52 : vector<1x1x128xf32> to vector<128xf32>
    %54 = vector.shape_cast %53 : vector<128xf32> to vector<1x1x128xf32>
    %55 = vector.broadcast %54 : vector<1x1x128xf32> to vector<16x16x128xf32>
    %56 = arith.mulf %51, %55 : vector<16x16x128xf32>
    %57 = arith.addf %50, %56 : vector<16x16x128xf32>
    %58 = vector.extract_strided_slice %43 {offsets = [2, 0, 0], sizes = [16, 16, 128], strides = [1, 1, 1]} : vector<18x16x128xf32> to vector<16x16x128xf32>
    %59 = vector.extract_strided_slice %15 {offsets = [2, 1, 0], sizes = [1, 1, 128], strides = [1, 1, 1]} : vector<3x3x128xf32> to vector<1x1x128xf32>
    %60 = vector.shape_cast %59 : vector<1x1x128xf32> to vector<128xf32>
    %61 = vector.shape_cast %60 : vector<128xf32> to vector<1x1x128xf32>
    %62 = vector.broadcast %61 : vector<1x1x128xf32> to vector<16x16x128xf32>
    %63 = arith.mulf %58, %62 : vector<16x16x128xf32>
    %64 = arith.addf %57, %63 : vector<16x16x128xf32>
    %65 = vector.extract_strided_slice %14 {offsets = [0, 9, 0], sizes = [18, 16, 128], strides = [1, 1, 1]} : vector<18x32x128xf32> to vector<18x16x128xf32>
    %66 = vector.extract_strided_slice %65 {offsets = [0, 0, 0], sizes = [16, 16, 128], strides = [1, 1, 1]} : vector<18x16x128xf32> to vector<16x16x128xf32>
    %67 = vector.extract_strided_slice %15 {offsets = [0, 2, 0], sizes = [1, 1, 128], strides = [1, 1, 1]} : vector<3x3x128xf32> to vector<1x1x128xf32>
    %68 = vector.shape_cast %67 : vector<1x1x128xf32> to vector<128xf32>
    %69 = vector.shape_cast %68 : vector<128xf32> to vector<1x1x128xf32>
    %70 = vector.broadcast %69 : vector<1x1x128xf32> to vector<16x16x128xf32>
    %71 = arith.mulf %66, %70 : vector<16x16x128xf32>
    %72 = arith.addf %64, %71 : vector<16x16x128xf32>
    %73 = vector.extract_strided_slice %65 {offsets = [1, 0, 0], sizes = [16, 16, 128], strides = [1, 1, 1]} : vector<18x16x128xf32> to vector<16x16x128xf32>
    %74 = vector.extract_strided_slice %15 {offsets = [1, 2, 0], sizes = [1, 1, 128], strides = [1, 1, 1]} : vector<3x3x128xf32> to vector<1x1x128xf32>
    %75 = vector.shape_cast %74 : vector<1x1x128xf32> to vector<128xf32>
    %76 = vector.shape_cast %75 : vector<128xf32> to vector<1x1x128xf32>
    %77 = vector.broadcast %76 : vector<1x1x128xf32> to vector<16x16x128xf32>
    %78 = arith.mulf %73, %77 : vector<16x16x128xf32>
    %79 = arith.addf %72, %78 : vector<16x16x128xf32>
    %80 = vector.extract_strided_slice %65 {offsets = [2, 0, 0], sizes = [16, 16, 128], strides = [1, 1, 1]} : vector<18x16x128xf32> to vector<16x16x128xf32>
    %81 = vector.extract_strided_slice %15 {offsets = [2, 2, 0], sizes = [1, 1, 128], strides = [1, 1, 1]} : vector<3x3x128xf32> to vector<1x1x128xf32>
    %82 = vector.shape_cast %81 : vector<1x1x128xf32> to vector<128xf32>
    %83 = vector.shape_cast %82 : vector<128xf32> to vector<1x1x128xf32>
    %84 = vector.broadcast %83 : vector<1x1x128xf32> to vector<16x16x128xf32>
    %85 = arith.mulf %80, %84 : vector<16x16x128xf32>
    %86 = arith.addf %79, %85 : vector<16x16x128xf32>
    %cst_17 = arith.constant 0.000000e+00 : f32
    %87 = vector.broadcast %cst_17 : f32 to vector<16x16x128xf32>
    %88 = arith.maximumf %86, %87 : vector<16x16x128xf32>
    %89 = vector.shape_cast %88 : vector<16x16x128xf32> to vector<256x128xf32>
    %cst_18 = arith.constant dense<0.000000e+00> : vector<128xf32>
    %90 = vector.multi_reduction <add>, %89, %cst_18 [0] : vector<256x128xf32> to vector<128xf32>
    %91 = vector.shape_cast %90 : vector<128xf32> to vector<1x128xf32>
    %cst_19 = arith.constant 3.906250e-03 : f32
    %92 = vector.broadcast %cst_19 : f32 to vector<1x128xf32>
    %93 = arith.mulf %91, %92 : vector<1x128xf32>
    %94 = arith.truncf %93 : vector<1x128xf32> to vector<1x128xbf16>
    %c0_20 = arith.constant 0 : index
    %c0_21 = arith.constant 0 : index
    %95 = vector.load %arg7[%c0_20, %c0_21] : memref<128x128xbf16, #tpu.memory_space<vmem>>, vector<128x128xbf16>
    %cst_22 = arith.constant dense<0.000000e+00> : vector<1x128xf32>
    %96 = tpu.matmul %94, %95, %cst_22 {dimension_numbers = #tpu.dot_dimension_numbers<[1], [0], [0], [1], [0, 0, 1, 1], [], []>} : vector<1x128xbf16>, vector<128x128xbf16>, vector<1x128xf32> -> vector<1x128xf32>
    %c0_23 = arith.constant 0 : index
    %c0_24 = arith.constant 0 : index
    %97 = vector.load %arg8[%c0_23, %c0_24] : memref<1x128xf32, #tpu.memory_space<vmem>>, vector<1x128xf32>
    %98 = arith.addf %96, %97 : vector<1x128xf32>
    %cst_25 = arith.constant 0.000000e+00 : f32
    %99 = vector.broadcast %cst_25 : f32 to vector<1x128xf32>
    %100 = arith.maximumf %98, %99 : vector<1x128xf32>
    %101 = arith.truncf %100 : vector<1x128xf32> to vector<1x128xbf16>
    %c0_26 = arith.constant 0 : index
    %c0_27 = arith.constant 0 : index
    %102 = vector.load %arg9[%c0_26, %c0_27] : memref<128x128xbf16, #tpu.memory_space<vmem>>, vector<128x128xbf16>
    %cst_28 = arith.constant dense<0.000000e+00> : vector<1x128xf32>
    %103 = tpu.matmul %101, %102, %cst_28 {dimension_numbers = #tpu.dot_dimension_numbers<[1], [0], [0], [1], [0, 0, 1, 1], [], []>} : vector<1x128xbf16>, vector<128x128xbf16>, vector<1x128xf32> -> vector<1x128xf32>
    %c0_29 = arith.constant 0 : index
    %c0_30 = arith.constant 0 : index
    %104 = vector.load %arg10[%c0_29, %c0_30] : memref<1x128xf32, #tpu.memory_space<vmem>>, vector<1x128xf32>
    %105 = arith.addf %103, %104 : vector<1x128xf32>
    %cst_31 = arith.constant 3.000000e+00 : f32
    %106 = vector.broadcast %cst_31 : f32 to vector<1x128xf32>
    %107 = arith.addf %105, %106 : vector<1x128xf32>
    %cst_32 = arith.constant 0.000000e+00 : f32
    %cst_33 = arith.constant 6.000000e+00 : f32
    %108 = vector.broadcast %cst_32 : f32 to vector<1x128xf32>
    %109 = arith.maximumf %108, %107 : vector<1x128xf32>
    %110 = vector.broadcast %cst_33 : f32 to vector<1x128xf32>
    %111 = arith.minimumf %110, %109 : vector<1x128xf32>
    %cst_34 = arith.constant 0.166666672 : f32
    %112 = vector.broadcast %cst_34 : f32 to vector<1x128xf32>
    %113 = arith.mulf %111, %112 : vector<1x128xf32>
    %114 = vector.shape_cast %113 : vector<1x128xf32> to vector<1x1x128xf32>
    %115 = vector.broadcast %114 : vector<1x1x128xf32> to vector<16x16x128xf32>
    %116 = arith.mulf %88, %115 : vector<16x16x128xf32>
    %117 = vector.shape_cast %116 : vector<16x16x128xf32> to vector<256x128xf32>
    %118 = arith.truncf %117 : vector<256x128xf32> to vector<256x128xbf16>
    %c0_35 = arith.constant 0 : index
    %c0_36 = arith.constant 0 : index
    %119 = vector.load %arg11[%c0_35, %c0_36] : memref<128x128xbf16, #tpu.memory_space<vmem>>, vector<128x128xbf16>
    %cst_37 = arith.constant dense<0.000000e+00> : vector<256x128xf32>
    %120 = tpu.matmul %118, %119, %cst_37 {dimension_numbers = #tpu.dot_dimension_numbers<[1], [0], [0], [1], [0, 0, 1, 1], [], []>} : vector<256x128xbf16>, vector<128x128xbf16>, vector<256x128xf32> -> vector<256x128xf32>
    %c0_38 = arith.constant 0 : index
    %c0_39 = arith.constant 0 : index
    %121 = vector.load %arg12[%c0_38, %c0_39] : memref<1x128xf32, #tpu.memory_space<vmem>>, vector<1x128xf32>
    %122 = vector.broadcast %121 : vector<1x128xf32> to vector<256x128xf32>
    %123 = arith.addf %120, %122 : vector<256x128xf32>
    %124 = vector.shape_cast %123 : vector<256x128xf32> to vector<16x16x128xf32>
    %125 = vector.extract_strided_slice %1 {offsets = [1, 8, 0], sizes = [16, 16, 128], strides = [1, 1, 1]} : vector<18x32x128xf32> to vector<16x16x128xf32>
    %126 = arith.addf %124, %125 : vector<16x16x128xf32>
    %c0_40 = arith.constant 0 : index
    %c0_41 = arith.constant 0 : index
    %c0_42 = arith.constant 0 : index
    %c0_43 = arith.constant 0 : index
    %127 = vector.load %arg13[%c0_40, %c0_41, %c0_42, %c0_43] : memref<1x16x16x128xf32, #tpu.memory_space<vmem>>, vector<1x16x16x128xf32>
    %128 = vector.shape_cast %127 : vector<1x16x16x128xf32> to vector<16x16x128xf32>
    %129 = vector.shape_cast %126 : vector<16x16x128xf32> to vector<1x16x16x128xf32>
    tpu.vector_store %arg13[%c0_40, %c0_41, %c0_42, %c0_43], %129 {strides = array<i32>} : memref<1x16x16x128xf32, #tpu.memory_space<vmem>>, vector<1x16x16x128xf32>,
    return
  }
  func.func @transform_0(%arg0: i32) -> (i32, i32, i32, i32) {
    %c0_i32 = arith.constant 0 : i32
    %c0_i32_0 = arith.constant 0 : i32
    %c0_i32_1 = arith.constant 0 : i32
    %c0_i32_2 = arith.constant 0 : i32
    return %arg0, %c0_i32, %c0_i32_0, %c0_i32_1 : i32, i32, i32, i32
  }
  func.func @transform_1(%arg0: i32) -> (i32, i32, i32) {
    %c0_i32 = arith.constant 0 : i32
    %c0_i32_0 = arith.constant 0 : i32
    %c0_i32_1 = arith.constant 0 : i32
    %c0_i32_2 = arith.constant 0 : i32
    return %c0_i32, %c0_i32_0, %c0_i32_1 : i32, i32, i32
  }
  func.func @transform_2(%arg0: i32) -> (i32, i32) {
    %c0_i32 = arith.constant 0 : i32
    %c0_i32_0 = arith.constant 0 : i32
    %c0_i32_1 = arith.constant 0 : i32
    return %c0_i32, %c0_i32_0 : i32, i32
  }
  func.func @transform_3(%arg0: i32) -> (i32, i32) {
    %c0_i32 = arith.constant 0 : i32
    %c0_i32_0 = arith.constant 0 : i32
    %c0_i32_1 = arith.constant 0 : i32
    return %c0_i32, %c0_i32_0 : i32, i32
  }
  func.func @transform_4(%arg0: i32) -> (i32, i32, i32) {
    %c0_i32 = arith.constant 0 : i32
    %c0_i32_0 = arith.constant 0 : i32
    %c0_i32_1 = arith.constant 0 : i32
    %c0_i32_2 = arith.constant 0 : i32
    return %c0_i32, %c0_i32_0, %c0_i32_1 : i32, i32, i32
  }
  func.func @transform_5(%arg0: i32) -> (i32, i32) {
    %c0_i32 = arith.constant 0 : i32
    %c0_i32_0 = arith.constant 0 : i32
    %c0_i32_1 = arith.constant 0 : i32
    return %c0_i32, %c0_i32_0 : i32, i32
  }
  func.func @transform_6(%arg0: i32) -> (i32, i32) {
    %c0_i32 = arith.constant 0 : i32
    %c0_i32_0 = arith.constant 0 : i32
    %c0_i32_1 = arith.constant 0 : i32
    return %c0_i32, %c0_i32_0 : i32, i32
  }
  func.func @transform_7(%arg0: i32) -> (i32, i32) {
    %c0_i32 = arith.constant 0 : i32
    %c0_i32_0 = arith.constant 0 : i32
    %c0_i32_1 = arith.constant 0 : i32
    return %c0_i32, %c0_i32_0 : i32, i32
  }
  func.func @transform_8(%arg0: i32) -> (i32, i32) {
    %c0_i32 = arith.constant 0 : i32
    %c0_i32_0 = arith.constant 0 : i32
    %c0_i32_1 = arith.constant 0 : i32
    return %c0_i32, %c0_i32_0 : i32, i32
  }
  func.func @transform_9(%arg0: i32) -> (i32, i32) {
    %c0_i32 = arith.constant 0 : i32
    %c0_i32_0 = arith.constant 0 : i32
    %c0_i32_1 = arith.constant 0 : i32
    return %c0_i32, %c0_i32_0 : i32, i32
  }
  func.func @transform_10(%arg0: i32) -> (i32, i32) {
    %c0_i32 = arith.constant 0 : i32
    %c0_i32_0 = arith.constant 0 : i32
    %c0_i32_1 = arith.constant 0 : i32
    return %c0_i32, %c0_i32_0 : i32, i32
  }
  func.func @transform_11(%arg0: i32) -> (i32, i32) {
    %c0_i32 = arith.constant 0 : i32
    %c0_i32_0 = arith.constant 0 : i32
    %c0_i32_1 = arith.constant 0 : i32
    return %c0_i32, %c0_i32_0 : i32, i32
  }
  func.func @transform_12(%arg0: i32) -> (i32, i32, i32, i32) {
    %c0_i32 = arith.constant 0 : i32
    %c0_i32_0 = arith.constant 0 : i32
    %c0_i32_1 = arith.constant 0 : i32
    %c0_i32_2 = arith.constant 0 : i32
    return %arg0, %c0_i32, %c0_i32_0, %c0_i32_1 : i32, i32, i32, i32
  }
}

</mosaic_0001>

<llo_original>
// kernel: tpu_custom_call.1
$region0: #{tpu_custom_call.1}
  #allocation0 [shape = 'u32[]', space=smem, size = 0x4, offset = 0x4, fixed_abs, tag = 'smem constant byte address 0x4 - core index']
  #allocation1 [shape = 'u32[144,128]{1,0:T(1,128)}', space=vmem, size = 0x12000, scoped, tag = 'internal scratch']
  %s0 = inlined_call_operand.hbm [shape: f32[2,18,32,128], index: 0, kind: input, shape index: {}]
  %s1 = inlined_call_operand.vmem [shape: f32[18,32,1], index: 1, kind: input, shape index: {}]
  %s2 = inlined_call_operand.vmem [shape: bf16[128,128], index: 2, kind: input, shape index: {}]
  %s3 = inlined_call_operand.vmem [shape: f32[1,128], index: 3, kind: input, shape index: {}]
  %s4 = inlined_call_operand.vmem [shape: f32[3,3,128], index: 4, kind: input, shape index: {}]
  %s5 = inlined_call_operand.vmem [shape: f32[1,128], index: 5, kind: input, shape index: {}]
  %s6 = inlined_call_operand.vmem [shape: bf16[128,128], index: 6, kind: input, shape index: {}]
  %s7 = inlined_call_operand.vmem [shape: f32[1,128], index: 7, kind: input, shape index: {}]
  %s8 = inlined_call_operand.vmem [shape: bf16[128,128], index: 8, kind: input, shape index: {}]
  %s9 = inlined_call_operand.vmem [shape: f32[1,128], index: 9, kind: input, shape index: {}]
  %s10 = inlined_call_operand.vmem [shape: bf16[128,128], index: 10, kind: input, shape index: {}]
  %s11 = inlined_call_operand.vmem [shape: f32[1,128], index: 11, kind: input, shape index: {}]
  %s12 = inlined_call_operand.hbm [shape: f32[2,16,16,128], index: 12, kind: output, shape index: {}]
  %s13 = sld [smem:[#allocation0]]
  $region85: #{tpu_custom_call.1} parent=0
    _
  %s15 = ssub.s32 1, %s13
  %s16 = scalar_select 0, %s15, %s13
  $region1: #{tpu_custom_call.1} parent=0
    #allocation2 [shape = 'u8[589824]{0}', space=vmem, size = 0x90000, scoped, tag = 'input window, operand 0']
    #allocation3 [shape = 's32[2]{0}', space=sflag, size = 0x8, scoped, tag = 'scoped memory for tpu_custom_call.1']
    #allocation4 [shape = 's32[2]{0}', space=sflag, size = 0x8, scoped, tag = 'scoped memory for tpu_custom_call.1']
    #allocation5 [shape = 'u8[262144]{0}', space=vmem, size = 0x40000, scoped, tag = 'output window, operand 0']
    %17 = vsyncpa [#allocation3], 0
    %s18 = scalar_lea.sflag [#allocation3], 1
    %19 = vsyncpa %s18, 0
    %20 = vsyncpa [#allocation4], 0
    %s21 = scalar_lea.sflag [#allocation4], 1
    %22 = vsyncpa %s21, 0
    loop: start=0, step=1, limit=4
    $region2: #{tpu_custom_call.1} parent=1 // loop_pre_header
      _
    $region3: #{tpu_custom_call.1} parent=1 // loop_header
      %s24 = sphi 0, %s28
      %p25 = scmp.ge.s32.totalorder %s24, 4
      %s34 = sphi 0, %s36
      %s37 = sphi 0, %s34
      %s38 = sphi 0, %s37
      %s54 = sphi 0, %s38
      %s58 = sphi 0, %s58
      %s60 = sphi 0, %s58
      %s61 = sphi 0, %s60
      %s75 = sphi 0, %s61
      %s79 = sphi 0, %s79
      %s81 = sphi 0, %s79
      %s82 = sphi 0, %s81
      %s96 = sphi 0, %s82
      %s100 = sphi 0, %s100
      %s102 = sphi 0, %s100
      %s103 = sphi 0, %s102
      %s117 = sphi 0, %s103
      %s121 = sphi 0, %s121
      %s123 = sphi 0, %s121
      %s124 = sphi 0, %s123
      %s138 = sphi 0, %s124
      %s142 = sphi 0, %s142
      %s144 = sphi 0, %s142
      %s145 = sphi 0, %s144
      %s159 = sphi 0, %s145
      %s163 = sphi 0, %s163
      %s165 = sphi 0, %s163
      %s166 = sphi 0, %s165
      %s180 = sphi 0, %s166
      %s184 = sphi 0, %s184
      %s186 = sphi 0, %s184
      %s187 = sphi 0, %s186
      %s201 = sphi 0, %s187
      %s205 = sphi 0, %s205
      %s207 = sphi 0, %s205
      %s208 = sphi 0, %s207
      %s222 = sphi 0, %s208
      %s226 = sphi 0, %s226
      %s228 = sphi 0, %s226
      %s229 = sphi 0, %s228
      %s243 = sphi 0, %s229
      %s247 = sphi 0, %s247
      %s249 = sphi 0, %s247
      %s250 = sphi 0, %s249
      %s264 = sphi 0, %s250
      %s268 = sphi 0, %s268
      %s270 = sphi 0, %s268
      %s271 = sphi 0, %s270
      %s285 = sphi 0, %s271
      %s291 = sphi 0, %s293
      %s294 = sphi 0, %s291
      %s295 = sphi 0, %s294
      %s311 = sphi 0, %s295
    $region4: #{tpu_custom_call.1} parent=1 // loop_header_branch
      %27 = sbr.rel (%p25) target = $region8
    $region5: #{tpu_custom_call.1} parent=1 // loop_body
      %s29 = ssub.s32 %s24, 1
      %s30 = ssub.s32 %s24, 2
      %s31 = sadd.s32 %s24, 1
      %s32 = ssub.s32 %s24, %s31
      %p33 = scmp.eq.s32.totalorder %s32, 0
      %s35 = sadd.s32 %s34, 1
      %s36 = scalar_select %p33, %s34, %s35
      %p39 = pneg %p33
      %p40 = scmp.eq.s32.totalorder %s24, 1
      %p41 = por %p39, %p40
      %p42 = scmp.ne.s32.totalorder %s34, %s37
      %p43 = scmp.eq.s32.totalorder %s24, 0
      %p44 = por %p42, %p43
      %p45 = scmp.ne.s32.totalorder %s34, %s37
      %p46 = scmp.eq.s32.totalorder %s29, 1
      %p47 = por %p45, %p46
      %p48 = scmp.ne.s32.totalorder %s37, %s38
      %p49 = scmp.eq.s32.totalorder %s29, 0
      %p50 = por %p48, %p49
      %p51 = scmp.ne.s32.totalorder %s37, %s38
      %p52 = scmp.eq.s32.totalorder %s30, 1
      %p53 = por %p51, %p52
      %p55 = scmp.ne.s32.totalorder %s38, %s54
      %p56 = scmp.eq.s32.totalorder %s30, 0
      %p57 = por %p55, %p56
      %s59 = sadd.s32 %s58, 1
      %p62 = scmp.eq.s32.totalorder %s24, 1
      %p63 = scmp.ne.s32.totalorder %s58, %s60
      %p64 = scmp.eq.s32.totalorder %s24, 0
      %p65 = por %p63, %p64
      %p66 = scmp.ne.s32.totalorder %s58, %s60
      %p67 = scmp.eq.s32.totalorder %s29, 1
      %p68 = por %p66, %p67
      %p69 = scmp.ne.s32.totalorder %s60, %s61
      %p70 = scmp.eq.s32.totalorder %s29, 0
      %p71 = por %p69, %p70
      %p72 = scmp.ne.s32.totalorder %s60, %s61
      %p73 = scmp.eq.s32.totalorder %s30, 1
      %p74 = por %p72, %p73
      %p76 = scmp.ne.s32.totalorder %s61, %s75
      %p77 = scmp.eq.s32.totalorder %s30, 0
      %p78 = por %p76, %p77
      %s80 = sadd.s32 %s79, 1
      %p83 = scmp.eq.s32.totalorder %s24, 1
      %p84 = scmp.ne.s32.totalorder %s79, %s81
      %p85 = scmp.eq.s32.totalorder %s24, 0
      %p86 = por %p84, %p85
      %p87 = scmp.ne.s32.totalorder %s79, %s81
      %p88 = scmp.eq.s32.totalorder %s29, 1
      %p89 = por %p87, %p88
      %p90 = scmp.ne.s32.totalorder %s81, %s82
      %p91 = scmp.eq.s32.totalorder %s29, 0
      %p92 = por %p90, %p91
      %p93 = scmp.ne.s32.totalorder %s81, %s82
      %p94 = scmp.eq.s32.totalorder %s30, 1
      %p95 = por %p93, %p94
      %p97 = scmp.ne.s32.totalorder %s82, %s96
      %p98 = scmp.eq.s32.totalorder %s30, 0
      %p99 = por %p97, %p98
      %s101 = sadd.s32 %s100, 1
      %p104 = scmp.eq.s32.totalorder %s24, 1
      %p105 = scmp.ne.s32.totalorder %s100, %s102
      %p106 = scmp.eq.s32.totalorder %s24, 0
      %p107 = por %p105, %p106
      %p108 = scmp.ne.s32.totalorder %s100, %s102
      %p109 = scmp.eq.s32.totalorder %s29, 1
      %p110 = por %p108, %p109
      %p111 = scmp.ne.s32.totalorder %s102, %s103
      %p112 = scmp.eq.s32.totalorder %s29, 0
      %p113 = por %p111, %p112
      %p114 = scmp.ne.s32.totalorder %s102, %s103
      %p115 = scmp.eq.s32.totalorder %s30, 1
      %p116 = por %p114, %p115
      %p118 = scmp.ne.s32.totalorder %s103, %s117
      %p119 = scmp.eq.s32.totalorder %s30, 0
      %p120 = por %p118, %p119
      %s122 = sadd.s32 %s121, 1
      %p125 = scmp.eq.s32.totalorder %s24, 1
      %p126 = scmp.ne.s32.totalorder %s121, %s123
      %p127 = scmp.eq.s32.totalorder %s24, 0
      %p128 = por %p126, %p127
      %p129 = scmp.ne.s32.totalorder %s121, %s123
      %p130 = scmp.eq.s32.totalorder %s29, 1
      %p131 = por %p129, %p130
      %p132 = scmp.ne.s32.totalorder %s123, %s124
      %p133 = scmp.eq.s32.totalorder %s29, 0
      %p134 = por %p132, %p133
      %p135 = scmp.ne.s32.totalorder %s123, %s124
      %p136 = scmp.eq.s32.totalorder %s30, 1
      %p137 = por %p135, %p136
      %p139 = scmp.ne.s32.totalorder %s124, %s138
      %p140 = scmp.eq.s32.totalorder %s30, 0
      %p141 = por %p139, %p140
      %s143 = sadd.s32 %s142, 1
      %p146 = scmp.eq.s32.totalorder %s24, 1
      %p147 = scmp.ne.s32.totalorder %s142, %s144
      %p148 = scmp.eq.s32.totalorder %s24, 0
      %p149 = por %p147, %p148
      %p150 = scmp.ne.s32.totalorder %s142, %s144
      %p151 = scmp.eq.s32.totalorder %s29, 1
      %p152 = por %p150, %p151
      %p153 = scmp.ne.s32.totalorder %s144, %s145
      %p154 = scmp.eq.s32.totalorder %s29, 0
      %p155 = por %p153, %p154
      %p156 = scmp.ne.s32.totalorder %s144, %s145
      %p157 = scmp.eq.s32.totalorder %s30, 1
      %p158 = por %p156, %p157
      %p160 = scmp.ne.s32.totalorder %s145, %s159
      %p161 = scmp.eq.s32.totalorder %s30, 0
      %p162 = por %p160, %p161
      %s164 = sadd.s32 %s163, 1
      %p167 = scmp.eq.s32.totalorder %s24, 1
      %p168 = scmp.ne.s32.totalorder %s163, %s165
      %p169 = scmp.eq.s32.totalorder %s24, 0
      %p170 = por %p168, %p169
      %p171 = scmp.ne.s32.totalorder %s163, %s165
      %p172 = scmp.eq.s32.totalorder %s29, 1
      %p173 = por %p171, %p172
      %p174 = scmp.ne.s32.totalorder %s165, %s166
      %p175 = scmp.eq.s32.totalorder %s29, 0
      %p176 = por %p174, %p175
      %p177 = scmp.ne.s32.totalorder %s165, %s166
      %p178 = scmp.eq.s32.totalorder %s30, 1
      %p179 = por %p177, %p178
      %p181 = scmp.ne.s32.totalorder %s166, %s180
      %p182 = scmp.eq.s32.totalorder %s30, 0
      %p183 = por %p181, %p182
      %s185 = sadd.s32 %s184, 1
      %p188 = scmp.eq.s32.totalorder %s24, 1
      %p189 = scmp.ne.s32.totalorder %s184, %s186
      %p190 = scmp.eq.s32.totalorder %s24, 0
      %p191 = por %p189, %p190
      %p192 = scmp.ne.s32.totalorder %s184, %s186
      %p193 = scmp.eq.s32.totalorder %s29, 1
      %p194 = por %p192, %p193
      %p195 = scmp.ne.s32.totalorder %s186, %s187
      %p196 = scmp.eq.s32.totalorder %s29, 0
      %p197 = por %p195, %p196
      %p198 = scmp.ne.s32.totalorder %s186, %s187
      %p199 = scmp.eq.s32.totalorder %s30, 1
      %p200 = por %p198, %p199
      %p202 = scmp.ne.s32.totalorder %s187, %s201
      %p203 = scmp.eq.s32.totalorder %s30, 0
      %p204 = por %p202, %p203
      %s206 = sadd.s32 %s205, 1
      %p209 = scmp.eq.s32.totalorder %s24, 1
      %p210 = scmp.ne.s32.totalorder %s205, %s207
      %p211 = scmp.eq.s32.totalorder %s24, 0
      %p212 = por %p210, %p211
      %p213 = scmp.ne.s32.totalorder %s205, %s207
      %p214 = scmp.eq.s32.totalorder %s29, 1
      %p215 = por %p213, %p214
      %p216 = scmp.ne.s32.totalorder %s207, %s208
      %p217 = scmp.eq.s32.totalorder %s29, 0
      %p218 = por %p216, %p217
      %p219 = scmp.ne.s32.totalorder %s207, %s208
      %p220 = scmp.eq.s32.totalorder %s30, 1
      %p221 = por %p219, %p220
      %p223 = scmp.ne.s32.totalorder %s208, %s222
      %p224 = scmp.eq.s32.totalorder %s30, 0
      %p225 = por %p223, %p224
      %s227 = sadd.s32 %s226, 1
      %p230 = scmp.eq.s32.totalorder %s24, 1
      %p231 = scmp.ne.s32.totalorder %s226, %s228
      %p232 = scmp.eq.s32.totalorder %s24, 0
      %p233 = por %p231, %p232
      %p234 = scmp.ne.s32.totalorder %s226, %s228
      %p235 = scmp.eq.s32.totalorder %s29, 1
      %p236 = por %p234, %p235
      %p237 = scmp.ne.s32.totalorder %s228, %s229
      %p238 = scmp.eq.s32.totalorder %s29, 0
      %p239 = por %p237, %p238
      %p240 = scmp.ne.s32.totalorder %s228, %s229
      %p241 = scmp.eq.s32.totalorder %s30, 1
      %p242 = por %p240, %p241
      %p244 = scmp.ne.s32.totalorder %s229, %s243
      %p245 = scmp.eq.s32.totalorder %s30, 0
      %p246 = por %p244, %p245
      %s248 = sadd.s32 %s247, 1
      %p251 = scmp.eq.s32.totalorder %s24, 1
      %p252 = scmp.ne.s32.totalorder %s247, %s249
      %p253 = scmp.eq.s32.totalorder %s24, 0
      %p254 = por %p252, %p253
      %p255 = scmp.ne.s32.totalorder %s247, %s249
      %p256 = scmp.eq.s32.totalorder %s29, 1
      %p257 = por %p255, %p256
      %p258 = scmp.ne.s32.totalorder %s249, %s250
      %p259 = scmp.eq.s32.totalorder %s29, 0
      %p260 = por %p258, %p259
      %p261 = scmp.ne.s32.totalorder %s249, %s250
      %p262 = scmp.eq.s32.totalorder %s30, 1
      %p263 = por %p261, %p262
      %p265 = scmp.ne.s32.totalorder %s250, %s264
      %p266 = scmp.eq.s32.totalorder %s30, 0
      %p267 = por %p265, %p266
      %s269 = sadd.s32 %s268, 1
      %p272 = scmp.eq.s32.totalorder %s24, 1
      %p273 = scmp.ne.s32.totalorder %s268, %s270
      %p274 = scmp.eq.s32.totalorder %s24, 0
      %p275 = por %p273, %p274
      %p276 = scmp.ne.s32.totalorder %s268, %s270
      %p277 = scmp.eq.s32.totalorder %s29, 1
      %p278 = por %p276, %p277
      %p279 = scmp.ne.s32.totalorder %s270, %s271
      %p280 = scmp.eq.s32.totalorder %s29, 0
      %p281 = por %p279, %p280
      %p282 = scmp.ne.s32.totalorder %s270, %s271
      %p283 = scmp.eq.s32.totalorder %s30, 1
      %p284 = por %p282, %p283
      %p286 = scmp.ne.s32.totalorder %s271, %s285
      %p287 = scmp.eq.s32.totalorder %s30, 0
      %p288 = por %p286, %p287
      %s289 = ssub.s32 %s24, %s31
      %p290 = scmp.eq.s32.totalorder %s289, 0
      %s292 = sadd.s32 %s291, 1
      %s293 = scalar_select %p290, %s291, %s292
      %p296 = pneg %p290
      %p297 = scmp.eq.s32.totalorder %s24, 1
      %p298 = por %p296, %p297
      %p299 = scmp.ne.s32.totalorder %s291, %s294
      %p300 = scmp.eq.s32.totalorder %s24, 0
      %p301 = por %p299, %p300
      %p302 = scmp.ne.s32.totalorder %s291, %s294
      %p303 = scmp.eq.s32.totalorder %s29, 1
      %p304 = por %p302, %p303
      %p305 = scmp.ne.s32.totalorder %s294, %s295
      %p306 = scmp.eq.s32.totalorder %s29, 0
      %p307 = por %p305, %p306
      %p308 = scmp.ne.s32.totalorder %s294, %s295
      %p309 = scmp.eq.s32.totalorder %s30, 1
      %p310 = por %p308, %p309
      %p312 = scmp.ne.s32.totalorder %s295, %s311
      %p313 = scmp.eq.s32.totalorder %s30, 0
      %p314 = por %p312, %p313
      %p315 = scmp.le.s32.totalorder 1, %s24
      %p316 = scmp.lt.s32.totalorder %s24, 3
      %p317 = pnand %p315, %p316
      %p318 = pneg %p317
      // Predicated region
      $region9: #{tpu_custom_call.1} parent=5 // pred_check
        _
      $region10: #{tpu_custom_call.1} parent=5 // pred_check_branch
        %320 = sbr.rel (%p317) target = $region12
      $region11: #{tpu_custom_call.1} parent=5 // pred_region
        %s321 = ssub.s32 %s24, 1
        // Predicated region
        $region13: #{tpu_custom_call.1} parent=11 // pred_check
          %p322 = pneg %p71
        $region14: #{tpu_custom_call.1} parent=11 // pred_check_branch
          %324 = sbr.rel (%p322) target = $region16
        $region15: #{tpu_custom_call.1} parent=11 // pred_region
          _
        $region16: #{tpu_custom_call.1} parent=11 // pred_fallthru
          _
        // Predicated region
        $region17: #{tpu_custom_call.1} parent=11 // pred_check
          %p325 = pneg %p92
        $region18: #{tpu_custom_call.1} parent=11 // pred_check_branch
          %327 = sbr.rel (%p325) target = $region20
        $region19: #{tpu_custom_call.1} parent=11 // pred_region
          _
        $region20: #{tpu_custom_call.1} parent=11 // pred_fallthru
          _
        // Predicated region
        $region21: #{tpu_custom_call.1} parent=11 // pred_check
          %p328 = pneg %p113
        $region22: #{tpu_custom_call.1} parent=11 // pred_check_branch
          %330 = sbr.rel (%p328) target = $region24
        $region23: #{tpu_custom_call.1} parent=11 // pred_region
          _
        $region24: #{tpu_custom_call.1} parent=11 // pred_fallthru
          _
        // Predicated region
        $region25: #{tpu_custom_call.1} parent=11 // pred_check
          %p331 = pneg %p134
        $region26: #{tpu_custom_call.1} parent=11 // pred_check_branch
          %333 = sbr.rel (%p331) target = $region28
        $region27: #{tpu_custom_call.1} parent=11 // pred_region
          _
        $region28: #{tpu_custom_call.1} parent=11 // pred_fallthru
          _
        // Predicated region
        $region29: #{tpu_custom_call.1} parent=11 // pred_check
          %p334 = pneg %p155
        $region30: #{tpu_custom_call.1} parent=11 // pred_check_branch
          %336 = sbr.rel (%p334) target = $region32
        $region31: #{tpu_custom_call.1} parent=11 // pred_region
          _
        $region32: #{tpu_custom_call.1} parent=11 // pred_fallthru
          _
        // Predicated region
        $region33: #{tpu_custom_call.1} parent=11 // pred_check
          %p337 = pneg %p176
        $region34: #{tpu_custom_call.1} parent=11 // pred_check_branch
          %339 = sbr.rel (%p337) target = $region36
        $region35: #{tpu_custom_call.1} parent=11 // pred_region
          _
        $region36: #{tpu_custom_call.1} parent=11 // pred_fallthru
          _
        // Predicated region
        $region37: #{tpu_custom_call.1} parent=11 // pred_check
          %p340 = pneg %p197
        $region38: #{tpu_custom_call.1} parent=11 // pred_check_branch
          %342 = sbr.rel (%p340) target = $region40
        $region39: #{tpu_custom_call.1} parent=11 // pred_region
          _
        $region40: #{tpu_custom_call.1} parent=11 // pred_fallthru
          _
        // Predicated region
        $region41: #{tpu_custom_call.1} parent=11 // pred_check
          %p343 = pneg %p218
        $region42: #{tpu_custom_call.1} parent=11 // pred_check_branch
          %345 = sbr.rel (%p343) target = $region44
        $region43: #{tpu_custom_call.1} parent=11 // pred_region
          _
        $region44: #{tpu_custom_call.1} parent=11 // pred_fallthru
          _
        // Predicated region
        $region45: #{tpu_custom_call.1} parent=11 // pred_check
          %p346 = pneg %p239
        $region46: #{tpu_custom_call.1} parent=11 // pred_check_branch
          %348 = sbr.rel (%p346) target = $region48
        $region47: #{tpu_custom_call.1} parent=11 // pred_region
          _
        $region48: #{tpu_custom_call.1} parent=11 // pred_fallthru
          _
        // Predicated region
        $region49: #{tpu_custom_call.1} parent=11 // pred_check
          %p349 = pneg %p260
        $region50: #{tpu_custom_call.1} parent=11 // pred_check_branch
          %351 = sbr.rel (%p349) target = $region52
        $region51: #{tpu_custom_call.1} parent=11 // pred_region
          _
        $region52: #{tpu_custom_call.1} parent=11 // pred_fallthru
          _
        // Predicated region
        $region53: #{tpu_custom_call.1} parent=11 // pred_check
          %p352 = pneg %p281
        $region54: #{tpu_custom_call.1} parent=11 // pred_check_branch
          %354 = sbr.rel (%p352) target = $region56
        $region55: #{tpu_custom_call.1} parent=11 // pred_region
          _
        $region56: #{tpu_custom_call.1} parent=11 // pred_fallthru
          _
      $region12: #{tpu_custom_call.1} parent=5 // pred_fallthru
        _
      %p355 = scmp.lt.s32.totalorder %s24, 2
      // Predicated region
      $region57: #{tpu_custom_call.1} parent=5 // pred_check
        %p356 = pneg %p355
      $region58: #{tpu_custom_call.1} parent=5 // pred_check_branch
        %358 = sbr.rel (%p356) target = $region60
      $region59: #{tpu_custom_call.1} parent=5 // pred_region
        // Predicated region
        $region61: #{tpu_custom_call.1} parent=59 // pred_check
          %p359 = pneg %p44
        $region62: #{tpu_custom_call.1} parent=59 // pred_check_branch
          %361 = sbr.rel (%p359) target = $region64
        $region63: #{tpu_custom_call.1} parent=59 // pred_region
          %s362 = sand.u32 %s34, 1
          %s363 = scalar_lea.sflag [#allocation3], %s362
          %s364 = sand.u32 %s34, 1
          %s365 = smul.addr %s364, 576
          %s366 = scalar_lea.vmem [#allocation2], %s365
          %s368 = ssub.s32 9216, 9216
          %369 = vsyncadd %s363, %s368
          %s370 = smul.addr %s24, 72
          %s371 = smul.addr %s370, 128
          %s372 = scalar_lea.hbm %s0, %s371
          %s373 = sshll.u32 %s366, 4
          %s374 = int_to_ptr.vmem [resolvable:$true] %s373
          %379 = dma.hbm_to_vmem [thread:$0]  %s372, 9216, %s374, %s363, 128, 128, 8
        $region64: #{tpu_custom_call.1} parent=59 // pred_fallthru
          _
      $region60: #{tpu_custom_call.1} parent=5 // pred_fallthru
        _
      %p380 = scmp.le.s32.totalorder 1, %s24
      %p381 = scmp.lt.s32.totalorder %s24, 3
      %p382 = pnand %p380, %p381
      %p383 = pneg %p382
      // Predicated region
      $region65: #{tpu_custom_call.1} parent=5 // pred_check
        _
      $region66: #{tpu_custom_call.1} parent=5 // pred_check_branch
        %385 = sbr.rel (%p382) target = $region68
      $region67: #{tpu_custom_call.1} parent=5 // pred_region
        %s386 = ssub.s32 %s24, 1
        %s387 = sand.u32 %s37, 1
        %s388 = scalar_lea.sflag [#allocation3], %s387
        %s389 = sand.u32 %s37, 1
        %s390 = smul.addr %s389, 576
        %s391 = scalar_lea.vmem [#allocation2], %s390
        // Predicated region
        $region69: #{tpu_custom_call.1} parent=67 // pred_check
          %p392 = pneg %p50
        $region70: #{tpu_custom_call.1} parent=67 // pred_check_branch
          %394 = sbr.rel (%p392) target = $region72
        $region71: #{tpu_custom_call.1} parent=67 // pred_region
          %395 = dma.done %s388, 9216
        $region72: #{tpu_custom_call.1} parent=67 // pred_fallthru
          _
        %s396 = sand.u32 %s37, 1
        %s397 = scalar_lea.sflag [#allocation3], %s396
        %s398 = sand.u32 %s37, 1
        %s399 = smul.addr %s398, 576
        %s400 = scalar_lea.vmem [#allocation2], %s399
        %p401 = pneg %p50
        %p402 = pneg %p47
        %p403 = pneg %p71
        %p404 = pneg %p68
        %p405 = pneg %p92
        %p406 = pneg %p89
        %p407 = pneg %p113
        %p408 = pneg %p110
        %p409 = pneg %p134
        %p410 = pneg %p131
        %p411 = pneg %p155
        %p412 = pneg %p152
        %p413 = pneg %p176
        %p414 = pneg %p173
        %p415 = pneg %p197
        %p416 = pneg %p194
        %p417 = pneg %p218
        %p418 = pneg %p215
        %p419 = pneg %p239
        %p420 = pneg %p236
        %p421 = pneg %p260
        %p422 = pneg %p257
        %p423 = pneg %p281
        %p424 = pneg %p278
        %p425 = pneg %p307
        %p426 = pneg %p304
        %s427 = sand.u32 %s294, 1
        %s428 = scalar_lea.sflag [#allocation4], %s427
        %s429 = sand.u32 %s294, 1
        %s430 = smul.addr %s429, 256
        %s431 = scalar_lea.vmem [#allocation5], %s430
        %v433 = vld [vmem:[%s391] sm:$0xff]
        %v434 = vld [vmem:[%s391 + $0x8] sm:$0xff]
        %v435 = vld [vmem:[%s391 + $0x10] sm:$0xff]
        %v436 = vld [vmem:[%s391 + $0x18] sm:$0xff]
        %v437 = vld [vmem:[%s391 + $0x20] sm:$0xff]
        %v438 = vld [vmem:[%s391 + $0x28] sm:$0xff]
        %v439 = vld [vmem:[%s391 + $0x30] sm:$0xff]
        %v440 = vld [vmem:[%s391 + $0x38] sm:$0xff]
        %v441 = vld [vmem:[%s391 + $0x40] sm:$0xff]
        %v442 = vld [vmem:[%s391 + $0x48] sm:$0xff]
        %v443 = vld [vmem:[%s391 + $0x50] sm:$0xff]
        %v444 = vld [vmem:[%s391 + $0x58] sm:$0xff]
        %v445 = vld [vmem:[%s391 + $0x60] sm:$0xff]
        %v446 = vld [vmem:[%s391 + $0x68] sm:$0xff]
        %v447 = vld [vmem:[%s391 + $0x70] sm:$0xff]
        %v448 = vld [vmem:[%s391 + $0x78] sm:$0xff]
        %v449 = vld [vmem:[%s391 + $0x80] sm:$0xff]
        %v450 = vld [vmem:[%s391 + $0x88] sm:$0xff]
        %v451 = vld [vmem:[%s391 + $0x90] sm:$0xff]
        %v452 = vld [vmem:[%s391 + $0x98] sm:$0xff]
        %v453 = vld [vmem:[%s391 + $0xa0] sm:$0xff]
        %v454 = vld [vmem:[%s391 + $0xa8] sm:$0xff]
        %v455 = vld [vmem:[%s391 + $0xb0] sm:$0xff]
        %v456 = vld [vmem:[%s391 + $0xb8] sm:$0xff]
        %v457 = vld [vmem:[%s391 + $0xc0] sm:$0xff]
        %v458 = vld [vmem:[%s391 + $0xc8] sm:$0xff]
        %v459 = vld [vmem:[%s391 + $0xd0] sm:$0xff]
        %v460 = vld [vmem:[%s391 + $0xd8] sm:$0xff]
        %v461 = vld [vmem:[%s391 + $0xe0] sm:$0xff]
        %v462 = vld [vmem:[%s391 + $0xe8] sm:$0xff]
        %v463 = vld [vmem:[%s391 + $0xf0] sm:$0xff]
        %v464 = vld [vmem:[%s391 + $0xf8] sm:$0xff]
        %v465 = vld [vmem:[%s391 + $0x100] sm:$0xff]
        %v466 = vld [vmem:[%s391 + $0x108] sm:$0xff]
        %v467 = vld [vmem:[%s391 + $0x110] sm:$0xff]
        %v468 = vld [vmem:[%s391 + $0x118] sm:$0xff]
        %v469 = vld [vmem:[%s391 + $0x120] sm:$0xff]
        %v470 = vld [vmem:[%s391 + $0x128] sm:$0xff]
        %v471 = vld [vmem:[%s391 + $0x130] sm:$0xff]
        %v472 = vld [vmem:[%s391 + $0x138] sm:$0xff]
        %v473 = vld [vmem:[%s391 + $0x140] sm:$0xff]
        %v474 = vld [vmem:[%s391 + $0x148] sm:$0xff]
        %v475 = vld [vmem:[%s391 + $0x150] sm:$0xff]
        %v476 = vld [vmem:[%s391 + $0x158] sm:$0xff]
        %v477 = vld [vmem:[%s391 + $0x160] sm:$0xff]
        %v478 = vld [vmem:[%s391 + $0x168] sm:$0xff]
        %v479 = vld [vmem:[%s391 + $0x170] sm:$0xff]
        %v480 = vld [vmem:[%s391 + $0x178] sm:$0xff]
        %v481 = vld [vmem:[%s391 + $0x180] sm:$0xff]
        %v482 = vld [vmem:[%s391 + $0x188] sm:$0xff]
        %v483 = vld [vmem:[%s391 + $0x190] sm:$0xff]
        %v484 = vld [vmem:[%s391 + $0x198] sm:$0xff]
        %v485 = vld [vmem:[%s391 + $0x1a0] sm:$0xff]
        %v486 = vld [vmem:[%s391 + $0x1a8] sm:$0xff]
        %v487 = vld [vmem:[%s391 + $0x1b0] sm:$0xff]
        %v488 = vld [vmem:[%s391 + $0x1b8] sm:$0xff]
        %v489 = vld [vmem:[%s391 + $0x1c0] sm:$0xff]
        %v490 = vld [vmem:[%s391 + $0x1c8] sm:$0xff]
        %v491 = vld [vmem:[%s391 + $0x1d0] sm:$0xff]
        %v492 = vld [vmem:[%s391 + $0x1d8] sm:$0xff]
        %v493 = vld [vmem:[%s391 + $0x1e0] sm:$0xff]
        %v494 = vld [vmem:[%s391 + $0x1e8] sm:$0xff]
        %v495 = vld [vmem:[%s391 + $0x1f0] sm:$0xff]
        %v496 = vld [vmem:[%s391 + $0x1f8] sm:$0xff]
        %v497 = vld [vmem:[%s391 + $0x200] sm:$0xff]
        %v498 = vld [vmem:[%s391 + $0x208] sm:$0xff]
        %v499 = vld [vmem:[%s391 + $0x210] sm:$0xff]
        %v500 = vld [vmem:[%s391 + $0x218] sm:$0xff]
        %v501 = vld [vmem:[%s391 + $0x220] sm:$0xff]
        %v502 = vld [vmem:[%s391 + $0x228] sm:$0xff]
        %v503 = vld [vmem:[%s391 + $0x230] sm:$0xff]
        %v504 = vld [vmem:[%s391 + $0x238] sm:$0xff]
        %v505 = vpack.c.bf16 %v434, %v433
        %v506 = vpack.c.bf16 %v436, %v435
        %v507 = vpack.c.bf16 %v438, %v437
        %v508 = vpack.c.bf16 %v440, %v439
        %v509 = vpack.c.bf16 %v442, %v441
        %v510 = vpack.c.bf16 %v444, %v443
        %v511 = vpack.c.bf16 %v446, %v445
        %v512 = vpack.c.bf16 %v448, %v447
        %v513 = vpack.c.bf16 %v450, %v449
        %v514 = vpack.c.bf16 %v452, %v451
        %v515 = vpack.c.bf16 %v454, %v453
        %v516 = vpack.c.bf16 %v456, %v455
        %v517 = vpack.c.bf16 %v458, %v457
        %v518 = vpack.c.bf16 %v460, %v459
        %v519 = vpack.c.bf16 %v462, %v461
        %v520 = vpack.c.bf16 %v464, %v463
        %v521 = vpack.c.bf16 %v466, %v465
        %v522 = vpack.c.bf16 %v468, %v467
        %v523 = vpack.c.bf16 %v470, %v469
        %v524 = vpack.c.bf16 %v472, %v471
        %v525 = vpack.c.bf16 %v474, %v473
        %v526 = vpack.c.bf16 %v476, %v475
        %v527 = vpack.c.bf16 %v478, %v477
        %v528 = vpack.c.bf16 %v480, %v479
        %v529 = vpack.c.bf16 %v482, %v481
        %v530 = vpack.c.bf16 %v484, %v483
        %v531 = vpack.c.bf16 %v486, %v485
        %v532 = vpack.c.bf16 %v488, %v487
        %v533 = vpack.c.bf16 %v490, %v489
        %v534 = vpack.c.bf16 %v492, %v491
        %v535 = vpack.c.bf16 %v494, %v493
        %v536 = vpack.c.bf16 %v496, %v495
        %v537 = vpack.c.bf16 %v498, %v497
        %v538 = vpack.c.bf16 %v500, %v499
        %v539 = vpack.c.bf16 %v502, %v501
        %v540 = vpack.c.bf16 %v504, %v503
        %v541 = vld [vmem:[%s2] sm:$0xf]
        %v542 = vld [vmem:[%s2 + $0x4] sm:$0xf]
        %v543 = vld [vmem:[%s2 + $0x8] sm:$0xf]
        %v544 = vld [vmem:[%s2 + $0xc] sm:$0xf]
        %v545 = vld [vmem:[%s2 + $0x10] sm:$0xf]
        %v546 = vld [vmem:[%s2 + $0x14] sm:$0xf]
        %v547 = vld [vmem:[%s2 + $0x18] sm:$0xf]
        %v548 = vld [vmem:[%s2 + $0x1c] sm:$0xf]
        %v549 = vld [vmem:[%s2 + $0x20] sm:$0xf]
        %v550 = vld [vmem:[%s2 + $0x24] sm:$0xf]
        %v551 = vld [vmem:[%s2 + $0x28] sm:$0xf]
        %v552 = vld [vmem:[%s2 + $0x2c] sm:$0xf]
        %v553 = vld [vmem:[%s2 + $0x30] sm:$0xf]
        %v554 = vld [vmem:[%s2 + $0x34] sm:$0xf]
        %v555 = vld [vmem:[%s2 + $0x38] sm:$0xf]
        %v556 = vld [vmem:[%s2 + $0x3c] sm:$0xf]
        %v557 = vld [vmem:[%s3] sm:$0x1]
        %v559 = vlaneseq
        %v560 = vshrl.u32 %v559, 7
        %v561 = vsub.s32 0, %v560
        %v562 = vrot.slane %v557, %v561
        %v580 = vunpack.c.l.b16 %v541
        %v581 = vunpack.c.l.b16 %v542
        %v582 = vunpack.c.l.b16 %v543
        %v583 = vunpack.c.l.b16 %v544
        %v584 = vunpack.c.l.b16 %v545
        %v585 = vunpack.c.l.b16 %v546
        %v586 = vunpack.c.l.b16 %v547
        %v587 = vunpack.c.l.b16 %v548
        %v588 = vunpack.c.l.b16 %v549
        %v589 = vunpack.c.l.b16 %v550
        %v590 = vunpack.c.l.b16 %v551
        %v591 = vunpack.c.l.b16 %v552
        %v592 = vunpack.c.l.b16 %v553
        %v593 = vunpack.c.l.b16 %v554
        %v594 = vunpack.c.l.b16 %v555
        %v595 = vunpack.c.l.b16 %v556
        %v596 = vpack.c.b16 %v581, %v580
        %v597 = vpack.c.b16 %v583, %v582
        %v598 = vpack.c.b16 %v585, %v584
        %v599 = vpack.c.b16 %v587, %v586
        %v600 = vpack.c.b16 %v589, %v588
        %v601 = vpack.c.b16 %v591, %v590
        %v602 = vpack.c.b16 %v593, %v592
        %v603 = vpack.c.b16 %v595, %v594
        %612 = vmatprep.subr.bf16.mxu0 0
        %613 = vmatpush1.bf16.msra.mxu0 %v596
        %614 = vmatprep.subr.bf16.mxu0 0
        %615 = vmatpush1.bf16.msra.mxu0 %v597
        %616 = vmatprep.subr.bf16.mxu0 0
        %617 = vmatpush1.bf16.msra.mxu0 %v598
        %618 = vmatprep.subr.bf16.mxu0 0
        %619 = vmatpush1.bf16.msra.mxu0 %v599
        %620 = vmatprep.subr.bf16.mxu0 0
        %621 = vmatpush1.bf16.msra.mxu0 %v600
        %622 = vmatprep.subr.bf16.mxu0 0
        %623 = vmatpush1.bf16.msra.mxu0 %v601
        %624 = vmatprep.subr.bf16.mxu0 0
        %625 = vmatpush1.bf16.msra.mxu0 %v602
        %626 = vmatprep.subr.bf16.mxu0 0
        %627 = vmatpush1.bf16.msra.mxu0 %v603
        %628 = vmatprep.subr.bf16.mxu0 0
        %629 = vmatpush1.bf16.msra.mxu0 0
        %630 = vmatprep.subr.bf16.mxu0 0
        %631 = vmatpush1.bf16.msra.mxu0 0
        %632 = vmatprep.subr.bf16.mxu0 0
        %633 = vmatpush1.bf16.msra.mxu0 0
        %634 = vmatprep.subr.bf16.mxu0 0
        %635 = vmatpush1.bf16.msra.mxu0 0
        %636 = vmatprep.subr.bf16.mxu0 0
        %637 = vmatpush1.bf16.msra.mxu0 0
        %638 = vmatprep.subr.bf16.mxu0 0
        %639 = vmatpush1.bf16.msra.mxu0 0
        %640 = vmatprep.subr.bf16.mxu0 0
        %641 = vmatpush1.bf16.msra.mxu0 0
        %642 = vmatprep.subr.bf16.mxu0 0
        %643 = vmatpush1.bf16.msra.mxu0 0
        %644 = vmatprep.mubr.bf16.mxu0 0
        %645 = vmatmul.mubr.bf16.gmra.mrb[0].mxu0 %v505
        %v646 = vpop.f32.mrb[0].mxu0
        %v647 = vadd.f32 %v562, %v646
        %v648 = vpop.f32.mrb[0].mxu0
        %v649 = vpop.f32.mrb[0].mxu0
        %v650 = vadd.f32 %v562, %v649
        %v651 = vpop.f32.mrb[0].mxu0
        %652 = vmatprep.mubr.bf16.mxu0 0
        %653 = vmatmul.mubr.bf16.gmra.mrb[0].mxu0 %v506
        %v654 = vpop.f32.mrb[0].mxu0
        %v655 = vadd.f32 %v562, %v654
        %v656 = vpop.f32.mrb[0].mxu0
        %v657 = vpop.f32.mrb[0].mxu0
        %v658 = vadd.f32 %v562, %v657
        %v659 = vpop.f32.mrb[0].mxu0
        %660 = vmatprep.mubr.bf16.mxu0 0
        %661 = vmatmul.mubr.bf16.gmra.mrb[0].mxu0 %v507
        %v662 = vpop.f32.mrb[0].mxu0
        %v663 = vadd.f32 %v562, %v662
        %v664 = vpop.f32.mrb[0].mxu0
        %v665 = vpop.f32.mrb[0].mxu0
        %v666 = vadd.f32 %v562, %v665
        %v667 = vpop.f32.mrb[0].mxu0
        %668 = vmatprep.mubr.bf16.mxu0 0
        %669 = vmatmul.mubr.bf16.gmra.mrb[0].mxu0 %v508
        %v670 = vpop.f32.mrb[0].mxu0
        %v671 = vadd.f32 %v562, %v670
        %v672 = vpop.f32.mrb[0].mxu0
        %v673 = vpop.f32.mrb[0].mxu0
        %v674 = vadd.f32 %v562, %v673
        %v675 = vpop.f32.mrb[0].mxu0
        %676 = vmatprep.mubr.bf16.mxu0 0
        %677 = vmatmul.mubr.bf16.gmra.mrb[0].mxu0 %v509
        %v678 = vpop.f32.mrb[0].mxu0
        %v679 = vadd.f32 %v562, %v678
        %v680 = vpop.f32.mrb[0].mxu0
        %v681 = vpop.f32.mrb[0].mxu0
        %v682 = vadd.f32 %v562, %v681
        %v683 = vpop.f32.mrb[0].mxu0
        %684 = vmatprep.mubr.bf16.mxu0 0
        %685 = vmatmul.mubr.bf16.gmra.mrb[0].mxu0 %v510
        %v686 = vpop.f32.mrb[0].mxu0
        %v687 = vadd.f32 %v562, %v686
        %v688 = vpop.f32.mrb[0].mxu0
        %v689 = vpop.f32.mrb[0].mxu0
        %v690 = vadd.f32 %v562, %v689
        %v691 = vpop.f32.mrb[0].mxu0
        %692 = vmatprep.mubr.bf16.mxu0 0
        %693 = vmatmul.mubr.bf16.gmra.mrb[0].mxu0 %v511
        %v694 = vpop.f32.mrb[0].mxu0
        %v695 = vadd.f32 %v562, %v694
        %v696 = vpop.f32.mrb[0].mxu0
        %v697 = vpop.f32.mrb[0].mxu0
        %v698 = vadd.f32 %v562, %v697
        %v699 = vpop.f32.mrb[0].mxu0
        %700 = vmatprep.mubr.bf16.mxu0 0
        %701 = vmatmul.mubr.bf16.gmra.mrb[0].mxu0 %v512
        %v702 = vpop.f32.mrb[0].mxu0
        %v703 = vadd.f32 %v562, %v702
        %v704 = vpop.f32.mrb[0].mxu0
        %v705 = vpop.f32.mrb[0].mxu0
        %v706 = vadd.f32 %v562, %v705
        %v707 = vpop.f32.mrb[0].mxu0
        %708 = vmatprep.mubr.bf16.mxu0 0
        %709 = vmatmul.mubr.bf16.gmra.mrb[0].mxu0 %v513
        %v710 = vpop.f32.mrb[0].mxu0
        %v711 = vadd.f32 %v562, %v710
        %v712 = vpop.f32.mrb[0].mxu0
        %v713 = vpop.f32.mrb[0].mxu0
        %v714 = vadd.f32 %v562, %v713
        %v715 = vpop.f32.mrb[0].mxu0
        %716 = vmatprep.mubr.bf16.mxu0 0
        %717 = vmatmul.mubr.bf16.gmra.mrb[0].mxu0 %v514
        %v718 = vpop.f32.mrb[0].mxu0
        %v719 = vadd.f32 %v562, %v718
        %v720 = vpop.f32.mrb[0].mxu0
        %v721 = vpop.f32.mrb[0].mxu0
        %v722 = vadd.f32 %v562, %v721
        %v723 = vpop.f32.mrb[0].mxu0
        %724 = vmatprep.mubr.bf16.mxu0 0
        %725 = vmatmul.mubr.bf16.gmra.mrb[0].mxu0 %v515
        %v726 = vpop.f32.mrb[0].mxu0
        %v727 = vadd.f32 %v562, %v726
        %v728 = vpop.f32.mrb[0].mxu0
        %v729 = vpop.f32.mrb[0].mxu0
        %v730 = vadd.f32 %v562, %v729
        %v731 = vpop.f32.mrb[0].mxu0
        %732 = vmatprep.mubr.bf16.mxu0 0
        %733 = vmatmul.mubr.bf16.gmra.mrb[0].mxu0 %v516
        %v734 = vpop.f32.mrb[0].mxu0
        %v735 = vadd.f32 %v562, %v734
        %v736 = vpop.f32.mrb[0].mxu0
        %v737 = vpop.f32.mrb[0].mxu0
        %v738 = vadd.f32 %v562, %v737
        %v739 = vpop.f32.mrb[0].mxu0
        %740 = vmatprep.mubr.bf16.mxu0 0
        %741 = vmatmul.mubr.bf16.gmra.mrb[0].mxu0 %v517
        %v742 = vpop.f32.mrb[0].mxu0
        %v743 = vadd.f32 %v562, %v742
        %v744 = vpop.f32.mrb[0].mxu0
        %v745 = vpop.f32.mrb[0].mxu0
        %v746 = vadd.f32 %v562, %v745
        %v747 = vpop.f32.mrb[0].mxu0
        %748 = vmatprep.mubr.bf16.mxu0 0
        %749 = vmatmul.mubr.bf16.gmra.mrb[0].mxu0 %v518
        %v750 = vpop.f32.mrb[0].mxu0
        %v751 = vadd.f32 %v562, %v750
        %v752 = vpop.f32.mrb[0].mxu0
        %v753 = vpop.f32.mrb[0].mxu0
        %v754 = vadd.f32 %v562, %v753
        %v755 = vpop.f32.mrb[0].mxu0
        %756 = vmatprep.mubr.bf16.mxu0 0
        %757 = vmatmul.mubr.bf16.gmra.mrb[0].mxu0 %v519
        %v758 = vpop.f32.mrb[0].mxu0
        %v759 = vadd.f32 %v562, %v758
        %v760 = vpop.f32.mrb[0].mxu0
        %v761 = vpop.f32.mrb[0].mxu0
        %v762 = vadd.f32 %v562, %v761
        %v763 = vpop.f32.mrb[0].mxu0
        %764 = vmatprep.mubr.bf16.mxu0 0
        %765 = vmatmul.mubr.bf16.gmra.mrb[0].mxu0 %v520
        %v766 = vpop.f32.mrb[0].mxu0
        %v767 = vadd.f32 %v562, %v766
        %v768 = vpop.f32.mrb[0].mxu0
        %v769 = vpop.f32.mrb[0].mxu0
        %v770 = vadd.f32 %v562, %v769
        %v771 = vpop.f32.mrb[0].mxu0
        %772 = vmatprep.mubr.bf16.mxu0 0
        %773 = vmatmul.mubr.bf16.gmra.mrb[0].mxu0 %v521
        %v774 = vpop.f32.mrb[0].mxu0
        %v775 = vadd.f32 %v562, %v774
        %v776 = vpop.f32.mrb[0].mxu0
        %v777 = vpop.f32.mrb[0].mxu0
        %v778 = vadd.f32 %v562, %v777
        %v779 = vpop.f32.mrb[0].mxu0
        %780 = vmatprep.mubr.bf16.mxu0 0
        %781 = vmatmul.mubr.bf16.gmra.mrb[0].mxu0 %v522
        %v782 = vpop.f32.mrb[0].mxu0
        %v783 = vadd.f32 %v562, %v782
        %v784 = vpop.f32.mrb[0].mxu0
        %v785 = vpop.f32.mrb[0].mxu0
        %v786 = vadd.f32 %v562, %v785
        %v787 = vpop.f32.mrb[0].mxu0
        %788 = vmatprep.mubr.bf16.mxu0 0
        %789 = vmatmul.mubr.bf16.gmra.mrb[0].mxu0 %v523
        %v790 = vpop.f32.mrb[0].mxu0
        %v791 = vadd.f32 %v562, %v790
        %v792 = vpop.f32.mrb[0].mxu0
        %v793 = vpop.f32.mrb[0].mxu0
        %v794 = vadd.f32 %v562, %v793
        %v795 = vpop.f32.mrb[0].mxu0
        %796 = vmatprep.mubr.bf16.mxu0 0
        %797 = vmatmul.mubr.bf16.gmra.mrb[0].mxu0 %v524
        %v798 = vpop.f32.mrb[0].mxu0
        %v799 = vadd.f32 %v562, %v798
        %v800 = vpop.f32.mrb[0].mxu0
        %v801 = vpop.f32.mrb[0].mxu0
        %v802 = vadd.f32 %v562, %v801
        %v803 = vpop.f32.mrb[0].mxu0
        %804 = vmatprep.mubr.bf16.mxu0 0
        %805 = vmatmul.mubr.bf16.gmra.mrb[0].mxu0 %v525
        %v806 = vpop.f32.mrb[0].mxu0
        %v807 = vadd.f32 %v562, %v806
        %v808 = vpop.f32.mrb[0].mxu0
        %v809 = vpop.f32.mrb[0].mxu0
        %v810 = vadd.f32 %v562, %v809
        %v811 = vpop.f32.mrb[0].mxu0
        %812 = vmatprep.mubr.bf16.mxu0 0
        %813 = vmatmul.mubr.bf16.gmra.mrb[0].mxu0 %v526
        %v814 = vpop.f32.mrb[0].mxu0
        %v815 = vadd.f32 %v562, %v814
        %v816 = vpop.f32.mrb[0].mxu0
        %v817 = vpop.f32.mrb[0].mxu0
        %v818 = vadd.f32 %v562, %v817
        %v819 = vpop.f32.mrb[0].mxu0
        %820 = vmatprep.mubr.bf16.mxu0 0
        %821 = vmatmul.mubr.bf16.gmra.mrb[0].mxu0 %v527
        %v822 = vpop.f32.mrb[0].mxu0
        %v823 = vadd.f32 %v562, %v822
        %v824 = vpop.f32.mrb[0].mxu0
        %v825 = vpop.f32.mrb[0].mxu0
        %v826 = vadd.f32 %v562, %v825
        %v827 = vpop.f32.mrb[0].mxu0
        %828 = vmatprep.mubr.bf16.mxu0 0
        %829 = vmatmul.mubr.bf16.gmra.mrb[0].mxu0 %v528
        %v830 = vpop.f32.mrb[0].mxu0
        %v831 = vadd.f32 %v562, %v830
        %v832 = vpop.f32.mrb[0].mxu0
        %v833 = vpop.f32.mrb[0].mxu0
        %v834 = vadd.f32 %v562, %v833
        %v835 = vpop.f32.mrb[0].mxu0
        %836 = vmatprep.mubr.bf16.mxu0 0
        %837 = vmatmul.mubr.bf16.gmra.mrb[0].mxu0 %v529
        %v838 = vpop.f32.mrb[0].mxu0
        %v839 = vadd.f32 %v562, %v838
        %v840 = vpop.f32.mrb[0].mxu0
        %v841 = vpop.f32.mrb[0].mxu0
        %v842 = vadd.f32 %v562, %v841
        %v843 = vpop.f32.mrb[0].mxu0
        %844 = vmatprep.mubr.bf16.mxu0 0
        %845 = vmatmul.mubr.bf16.gmra.mrb[0].mxu0 %v530
        %v846 = vpop.f32.mrb[0].mxu0
        %v847 = vadd.f32 %v562, %v846
        %v848 = vpop.f32.mrb[0].mxu0
        %v849 = vpop.f32.mrb[0].mxu0
        %v850 = vadd.f32 %v562, %v849
        %v851 = vpop.f32.mrb[0].mxu0
        %852 = vmatprep.mubr.bf16.mxu0 0
        %853 = vmatmul.mubr.bf16.gmra.mrb[0].mxu0 %v531
        %v854 = vpop.f32.mrb[0].mxu0
        %v855 = vadd.f32 %v562, %v854
        %v856 = vpop.f32.mrb[0].mxu0
        %v857 = vpop.f32.mrb[0].mxu0
        %v858 = vadd.f32 %v562, %v857
        %v859 = vpop.f32.mrb[0].mxu0
        %860 = vmatprep.mubr.bf16.mxu0 0
        %861 = vmatmul.mubr.bf16.gmra.mrb[0].mxu0 %v532
        %v862 = vpop.f32.mrb[0].mxu0
        %v863 = vadd.f32 %v562, %v862
        %v864 = vpop.f32.mrb[0].mxu0
        %v865 = vpop.f32.mrb[0].mxu0
        %v866 = vadd.f32 %v562, %v865
        %v867 = vpop.f32.mrb[0].mxu0
        %868 = vmatprep.mubr.bf16.mxu0 0
        %869 = vmatmul.mubr.bf16.gmra.mrb[0].mxu0 %v533
        %v870 = vpop.f32.mrb[0].mxu0
        %v871 = vadd.f32 %v562, %v870
        %v872 = vpop.f32.mrb[0].mxu0
        %v873 = vpop.f32.mrb[0].mxu0
        %v874 = vadd.f32 %v562, %v873
        %v875 = vpop.f32.mrb[0].mxu0
        %876 = vmatprep.mubr.bf16.mxu0 0
        %877 = vmatmul.mubr.bf16.gmra.mrb[0].mxu0 %v534
        %v878 = vpop.f32.mrb[0].mxu0
        %v879 = vadd.f32 %v562, %v878
        %v880 = vpop.f32.mrb[0].mxu0
        %v881 = vpop.f32.mrb[0].mxu0
        %v882 = vadd.f32 %v562, %v881
        %v883 = vpop.f32.mrb[0].mxu0
        %884 = vmatprep.mubr.bf16.mxu0 0
        %885 = vmatmul.mubr.bf16.gmra.mrb[0].mxu0 %v535
        %v886 = vpop.f32.mrb[0].mxu0
        %v887 = vadd.f32 %v562, %v886
        %v888 = vpop.f32.mrb[0].mxu0
        %v889 = vpop.f32.mrb[0].mxu0
        %v890 = vadd.f32 %v562, %v889
        %v891 = vpop.f32.mrb[0].mxu0
        %892 = vmatprep.mubr.bf16.mxu0 0
        %893 = vmatmul.mubr.bf16.gmra.mrb[0].mxu0 %v536
        %v894 = vpop.f32.mrb[0].mxu0
        %v895 = vadd.f32 %v562, %v894
        %v896 = vpop.f32.mrb[0].mxu0
        %v897 = vpop.f32.mrb[0].mxu0
        %v898 = vadd.f32 %v562, %v897
        %v899 = vpop.f32.mrb[0].mxu0
        %900 = vmatprep.mubr.bf16.mxu0 0
        %901 = vmatmul.mubr.bf16.gmra.mrb[0].mxu0 %v537
        %v902 = vpop.f32.mrb[0].mxu0
        %v903 = vadd.f32 %v562, %v902
        %v904 = vpop.f32.mrb[0].mxu0
        %v905 = vpop.f32.mrb[0].mxu0
        %v906 = vadd.f32 %v562, %v905
        %v907 = vpop.f32.mrb[0].mxu0
        %908 = vmatprep.mubr.bf16.mxu0 0
        %909 = vmatmul.mubr.bf16.gmra.mrb[0].mxu0 %v538
        %v910 = vpop.f32.mrb[0].mxu0
        %v911 = vadd.f32 %v562, %v910
        %v912 = vpop.f32.mrb[0].mxu0
        %v913 = vpop.f32.mrb[0].mxu0
        %v914 = vadd.f32 %v562, %v913
        %v915 = vpop.f32.mrb[0].mxu0
        %916 = vmatprep.mubr.bf16.mxu0 0
        %917 = vmatmul.mubr.bf16.gmra.mrb[0].mxu0 %v539
        %v918 = vpop.f32.mrb[0].mxu0
        %v919 = vadd.f32 %v562, %v918
        %v920 = vpop.f32.mrb[0].mxu0
        %v921 = vpop.f32.mrb[0].mxu0
        %v922 = vadd.f32 %v562, %v921
        %v923 = vpop.f32.mrb[0].mxu0
        %924 = vmatprep.mubr.bf16.mxu0 0
        %925 = vmatmul.mubr.bf16.gmra.mrb[0].mxu0 %v540
        %v926 = vpop.f32.mrb[0].mxu0
        %v927 = vadd.f32 %v562, %v926
        %v928 = vpop.f32.mrb[0].mxu0
        %v929 = vpop.f32.mrb[0].mxu0
        %v930 = vadd.f32 %v562, %v929
        %v931 = vpop.f32.mrb[0].mxu0
        %932 = vdwg.mxu0
        %v933 = vmax.f32 %v647, 0.0
        %v934 = vmax.f32 %v650, 0.0
        %v935 = vmax.f32 %v655, 0.0
        %v936 = vmax.f32 %v658, 0.0
        %v937 = vmax.f32 %v663, 0.0
        %v938 = vmax.f32 %v666, 0.0
        %v939 = vmax.f32 %v671, 0.0
        %v940 = vmax.f32 %v674, 0.0
        %v941 = vmax.f32 %v679, 0.0
        %v942 = vmax.f32 %v682, 0.0
        %v943 = vmax.f32 %v687, 0.0
        %v944 = vmax.f32 %v690, 0.0
        %v945 = vmax.f32 %v695, 0.0
        %v946 = vmax.f32 %v698, 0.0
        %v947 = vmax.f32 %v703, 0.0
        %v948 = vmax.f32 %v706, 0.0
        %v949 = vmax.f32 %v711, 0.0
        %v950 = vmax.f32 %v714, 0.0
        %v951 = vmax.f32 %v719, 0.0
        %v952 = vmax.f32 %v722, 0.0
        %v953 = vmax.f32 %v727, 0.0
        %v954 = vmax.f32 %v730, 0.0
        %v955 = vmax.f32 %v735, 0.0
        %v956 = vmax.f32 %v738, 0.0
        %v957 = vmax.f32 %v743, 0.0
        %v958 = vmax.f32 %v746, 0.0
        %v959 = vmax.f32 %v751, 0.0
        %v960 = vmax.f32 %v754, 0.0
        %v961 = vmax.f32 %v759, 0.0
        %v962 = vmax.f32 %v762, 0.0
        %v963 = vmax.f32 %v767, 0.0
        %v964 = vmax.f32 %v770, 0.0
        %v965 = vmax.f32 %v775, 0.0
        %v966 = vmax.f32 %v778, 0.0
        %v967 = vmax.f32 %v783, 0.0
        %v968 = vmax.f32 %v786, 0.0
        %v969 = vmax.f32 %v791, 0.0
        %v970 = vmax.f32 %v794, 0.0
        %v971 = vmax.f32 %v799, 0.0
        %v972 = vmax.f32 %v802, 0.0
        %v973 = vmax.f32 %v807, 0.0
        %v974 = vmax.f32 %v810, 0.0
        %v975 = vmax.f32 %v815, 0.0
        %v976 = vmax.f32 %v818, 0.0
        %v977 = vmax.f32 %v823, 0.0
        %v978 = vmax.f32 %v826, 0.0
        %v979 = vmax.f32 %v831, 0.0
        %v980 = vmax.f32 %v834, 0.0
        %v981 = vmax.f32 %v839, 0.0
        %v982 = vmax.f32 %v842, 0.0
        %v983 = vmax.f32 %v847, 0.0
        %v984 = vmax.f32 %v850, 0.0
        %v985 = vmax.f32 %v855, 0.0
        %v986 = vmax.f32 %v858, 0.0
        %v987 = vmax.f32 %v863, 0.0
        %v988 = vmax.f32 %v866, 0.0
        %v989 = vmax.f32 %v871, 0.0
        %v990 = vmax.f32 %v874, 0.0
        %v991 = vmax.f32 %v879, 0.0
        %v992 = vmax.f32 %v882, 0.0
        %v993 = vmax.f32 %v887, 0.0
        %v994 = vmax.f32 %v890, 0.0
        %v995 = vmax.f32 %v895, 0.0
        %v996 = vmax.f32 %v898, 0.0
        %v997 = vmax.f32 %v903, 0.0
        %v998 = vmax.f32 %v906, 0.0
        %v999 = vmax.f32 %v911, 0.0
        %v1000 = vmax.f32 %v914, 0.0
        %v1001 = vmax.f32 %v919, 0.0
        %v1002 = vmax.f32 %v922, 0.0
        %v1003 = vmax.f32 %v927, 0.0
        %v1004 = vmax.f32 %v930, 0.0
        %v1005 = vld [vmem:[%s1] sm:$0xff]
        %v1006 = vld [vmem:[%s1 + $0x8] sm:$0xff]
        %v1007 = vld [vmem:[%s1 + $0x10] sm:$0xff]
        %v1008 = vld [vmem:[%s1 + $0x18] sm:$0xff]
        %v1009 = vld [vmem:[%s1 + $0x20] sm:$0xff]
        %v1010 = vld [vmem:[%s1 + $0x28] sm:$0xff]
        %v1011 = vld [vmem:[%s1 + $0x30] sm:$0xff]
        %v1012 = vld [vmem:[%s1 + $0x38] sm:$0xff]
        %v1013 = vld [vmem:[%s1 + $0x40] sm:$0xff]
        %v1014 = vld [vmem:[%s1 + $0x48] sm:$0xff]
        %v1015 = vld [vmem:[%s1 + $0x50] sm:$0xff]
        %v1016 = vld [vmem:[%s1 + $0x58] sm:$0xff]
        %v1017 = vld [vmem:[%s1 + $0x60] sm:$0xff]
        %v1018 = vld [vmem:[%s1 + $0x68] sm:$0xff]
        %v1019 = vld [vmem:[%s1 + $0x70] sm:$0xff]
        %v1020 = vld [vmem:[%s1 + $0x78] sm:$0xff]
        %v1021 = vld [vmem:[%s1 + $0x80] sm:$0xff]
        %v1022 = vld [vmem:[%s1 + $0x88] sm:$0xff]
        %v1023 = vld [vmem:[%s1 + $0x90] sm:$0xff]
        %v1024 = vld [vmem:[%s1 + $0x98] sm:$0xff]
        %v1025 = vld [vmem:[%s1 + $0xa0] sm:$0xff]
        %v1026 = vld [vmem:[%s1 + $0xa8] sm:$0xff]
        %v1027 = vld [vmem:[%s1 + $0xb0] sm:$0xff]
        %v1028 = vld [vmem:[%s1 + $0xb8] sm:$0xff]
        %v1029 = vld [vmem:[%s1 + $0xc0] sm:$0xff]
        %v1030 = vld [vmem:[%s1 + $0xc8] sm:$0xff]
        %v1031 = vld [vmem:[%s1 + $0xd0] sm:$0xff]
        %v1032 = vld [vmem:[%s1 + $0xd8] sm:$0xff]
        %v1033 = vld [vmem:[%s1 + $0xe0] sm:$0xff]
        %v1034 = vld [vmem:[%s1 + $0xe8] sm:$0xff]
        %v1035 = vld [vmem:[%s1 + $0xf0] sm:$0xff]
        %v1036 = vld [vmem:[%s1 + $0xf8] sm:$0xff]
        %v1037 = vld [vmem:[%s1 + $0x100] sm:$0xff]
        %v1038 = vld [vmem:[%s1 + $0x108] sm:$0xff]
        %v1039 = vld [vmem:[%s1 + $0x110] sm:$0xff]
        %v1040 = vld [vmem:[%s1 + $0x118] sm:$0xff]
        %v1041 = vld [vmem:[%s1 + $0x120] sm:$0xff]
        %v1042 = vld [vmem:[%s1 + $0x128] sm:$0xff]
        %v1043 = vld [vmem:[%s1 + $0x130] sm:$0xff]
        %v1044 = vld [vmem:[%s1 + $0x138] sm:$0xff]
        %v1045 = vld [vmem:[%s1 + $0x140] sm:$0xff]
        %v1046 = vld [vmem:[%s1 + $0x148] sm:$0xff]
        %v1047 = vld [vmem:[%s1 + $0x150] sm:$0xff]
        %v1048 = vld [vmem:[%s1 + $0x158] sm:$0xff]
        %v1049 = vld [vmem:[%s1 + $0x160] sm:$0xff]
        %v1050 = vld [vmem:[%s1 + $0x168] sm:$0xff]
        %v1051 = vld [vmem:[%s1 + $0x170] sm:$0xff]
        %v1052 = vld [vmem:[%s1 + $0x178] sm:$0xff]
        %v1053 = vld [vmem:[%s1 + $0x180] sm:$0xff]
        %v1054 = vld [vmem:[%s1 + $0x188] sm:$0xff]
        %v1055 = vld [vmem:[%s1 + $0x190] sm:$0xff]
        %v1056 = vld [vmem:[%s1 + $0x198] sm:$0xff]
        %v1057 = vld [vmem:[%s1 + $0x1a0] sm:$0xff]
        %v1058 = vld [vmem:[%s1 + $0x1a8] sm:$0xff]
        %v1059 = vld [vmem:[%s1 + $0x1b0] sm:$0xff]
        %v1060 = vld [vmem:[%s1 + $0x1b8] sm:$0xff]
        %v1061 = vld [vmem:[%s1 + $0x1c0] sm:$0xff]
        %v1062 = vld [vmem:[%s1 + $0x1c8] sm:$0xff]
        %v1063 = vld [vmem:[%s1 + $0x1d0] sm:$0xff]
        %v1064 = vld [vmem:[%s1 + $0x1d8] sm:$0xff]
        %v1065 = vld [vmem:[%s1 + $0x1e0] sm:$0xff]
        %v1066 = vld [vmem:[%s1 + $0x1e8] sm:$0xff]
        %v1067 = vld [vmem:[%s1 + $0x1f0] sm:$0xff]
        %v1068 = vld [vmem:[%s1 + $0x1f8] sm:$0xff]
        %v1069 = vld [vmem:[%s1 + $0x200] sm:$0xff]
        %v1070 = vld [vmem:[%s1 + $0x208] sm:$0xff]
        %v1071 = vld [vmem:[%s1 + $0x210] sm:$0xff]
        %v1072 = vld [vmem:[%s1 + $0x218] sm:$0xff]
        %v1073 = vld [vmem:[%s1 + $0x220] sm:$0xff]
        %v1074 = vld [vmem:[%s1 + $0x228] sm:$0xff]
        %v1075 = vld [vmem:[%s1 + $0x230] sm:$0xff]
        %v1076 = vld [vmem:[%s1 + $0x238] sm:$0xff]
        %1078 = vset.pattern.permute.xlu0 0
        %1079 = vperm.xlu0 %1078, %v1005
        %v1080 = vpop.permute.xlu0 %1079
        %1083 = vset.pattern.permute.xlu0 0
        %1084 = vperm.xlu0 %1083, %v1006
        %v1085 = vpop.permute.xlu0 %1084
        %1088 = vset.pattern.permute.xlu0 0
        %1089 = vperm.xlu0 %1088, %v1007
        %v1090 = vpop.permute.xlu0 %1089
        %1093 = vset.pattern.permute.xlu0 0
        %1094 = vperm.xlu0 %1093, %v1008
        %v1095 = vpop.permute.xlu0 %1094
        %1098 = vset.pattern.permute.xlu0 0
        %1099 = vperm.xlu0 %1098, %v1009
        %v1100 = vpop.permute.xlu0 %1099
        %1103 = vset.pattern.permute.xlu0 0
        %1104 = vperm.xlu0 %1103, %v1010
        %v1105 = vpop.permute.xlu0 %1104
        %1108 = vset.pattern.permute.xlu0 0
        %1109 = vperm.xlu0 %1108, %v1011
        %v1110 = vpop.permute.xlu0 %1109
        %1113 = vset.pattern.permute.xlu0 0
        %1114 = vperm.xlu0 %1113, %v1012
        %v1115 = vpop.permute.xlu0 %1114
        %1118 = vset.pattern.permute.xlu0 0
        %1119 = vperm.xlu0 %1118, %v1013
        %v1120 = vpop.permute.xlu0 %1119
        %1123 = vset.pattern.permute.xlu0 0
        %1124 = vperm.xlu0 %1123, %v1014
        %v1125 = vpop.permute.xlu0 %1124
        %1128 = vset.pattern.permute.xlu0 0
        %1129 = vperm.xlu0 %1128, %v1015
        %v1130 = vpop.permute.xlu0 %1129
        %1133 = vset.pattern.permute.xlu0 0
        %1134 = vperm.xlu0 %1133, %v1016
        %v1135 = vpop.permute.xlu0 %1134
        %1138 = vset.pattern.permute.xlu0 0
        %1139 = vperm.xlu0 %1138, %v1017
        %v1140 = vpop.permute.xlu0 %1139
        %1143 = vset.pattern.permute.xlu0 0
        %1144 = vperm.xlu0 %1143, %v1018
        %v1145 = vpop.permute.xlu0 %1144
        %1148 = vset.pattern.permute.xlu0 0
        %1149 = vperm.xlu0 %1148, %v1019
        %v1150 = vpop.permute.xlu0 %1149
        %1153 = vset.pattern.permute.xlu0 0
        %1154 = vperm.xlu0 %1153, %v1020
        %v1155 = vpop.permute.xlu0 %1154
        %1158 = vset.pattern.permute.xlu0 0
        %1159 = vperm.xlu0 %1158, %v1021
        %v1160 = vpop.permute.xlu0 %1159
        %1163 = vset.pattern.permute.xlu0 0
        %1164 = vperm.xlu0 %1163, %v1022
        %v1165 = vpop.permute.xlu0 %1164
        %1168 = vset.pattern.permute.xlu0 0
        %1169 = vperm.xlu0 %1168, %v1023
        %v1170 = vpop.permute.xlu0 %1169
        %1173 = vset.pattern.permute.xlu0 0
        %1174 = vperm.xlu0 %1173, %v1024
        %v1175 = vpop.permute.xlu0 %1174
        %1178 = vset.pattern.permute.xlu0 0
        %1179 = vperm.xlu0 %1178, %v1025
        %v1180 = vpop.permute.xlu0 %1179
        %1183 = vset.pattern.permute.xlu0 0
        %1184 = vperm.xlu0 %1183, %v1026
        %v1185 = vpop.permute.xlu0 %1184
        %1188 = vset.pattern.permute.xlu0 0
        %1189 = vperm.xlu0 %1188, %v1027
        %v1190 = vpop.permute.xlu0 %1189
        %1193 = vset.pattern.permute.xlu0 0
        %1194 = vperm.xlu0 %1193, %v1028
        %v1195 = vpop.permute.xlu0 %1194
        %1198 = vset.pattern.permute.xlu0 0
        %1199 = vperm.xlu0 %1198, %v1029
        %v1200 = vpop.permute.xlu0 %1199
        %1203 = vset.pattern.permute.xlu0 0
        %1204 = vperm.xlu0 %1203, %v1030
        %v1205 = vpop.permute.xlu0 %1204
        %1208 = vset.pattern.permute.xlu0 0
        %1209 = vperm.xlu0 %1208, %v1031
        %v1210 = vpop.permute.xlu0 %1209
        %1213 = vset.pattern.permute.xlu0 0
        %1214 = vperm.xlu0 %1213, %v1032
        %v1215 = vpop.permute.xlu0 %1214
        %1218 = vset.pattern.permute.xlu0 0
        %1219 = vperm.xlu0 %1218, %v1033
        %v1220 = vpop.permute.xlu0 %1219
        %1223 = vset.pattern.permute.xlu0 0
        %1224 = vperm.xlu0 %1223, %v1034
        %v1225 = vpop.permute.xlu0 %1224
        %1228 = vset.pattern.permute.xlu0 0
        %1229 = vperm.xlu0 %1228, %v1035
        %v1230 = vpop.permute.xlu0 %1229
        %1233 = vset.pattern.permute.xlu0 0
        %1234 = vperm.xlu0 %1233, %v1036
        %v1235 = vpop.permute.xlu0 %1234
        %1238 = vset.pattern.permute.xlu0 0
        %1239 = vperm.xlu0 %1238, %v1037
        %v1240 = vpop.permute.xlu0 %1239
        %1243 = vset.pattern.permute.xlu0 0
        %1244 = vperm.xlu0 %1243, %v1038
        %v1245 = vpop.permute.xlu0 %1244
        %1248 = vset.pattern.permute.xlu0 0
        %1249 = vperm.xlu0 %1248, %v1039
        %v1250 = vpop.permute.xlu0 %1249
        %1253 = vset.pattern.permute.xlu0 0
        %1254 = vperm.xlu0 %1253, %v1040
        %v1255 = vpop.permute.xlu0 %1254
        %1258 = vset.pattern.permute.xlu0 0
        %1259 = vperm.xlu0 %1258, %v1041
        %v1260 = vpop.permute.xlu0 %1259
        %1263 = vset.pattern.permute.xlu0 0
        %1264 = vperm.xlu0 %1263, %v1042
        %v1265 = vpop.permute.xlu0 %1264
        %1268 = vset.pattern.permute.xlu0 0
        %1269 = vperm.xlu0 %1268, %v1043
        %v1270 = vpop.permute.xlu0 %1269
        %1273 = vset.pattern.permute.xlu0 0
        %1274 = vperm.xlu0 %1273, %v1044
        %v1275 = vpop.permute.xlu0 %1274
        %1278 = vset.pattern.permute.xlu0 0
        %1279 = vperm.xlu0 %1278, %v1045
        %v1280 = vpop.permute.xlu0 %1279
        %1283 = vset.pattern.permute.xlu0 0
        %1284 = vperm.xlu0 %1283, %v1046
        %v1285 = vpop.permute.xlu0 %1284
        %1288 = vset.pattern.permute.xlu0 0
        %1289 = vperm.xlu0 %1288, %v1047
        %v1290 = vpop.permute.xlu0 %1289
        %1293 = vset.pattern.permute.xlu0 0
        %1294 = vperm.xlu0 %1293, %v1048
        %v1295 = vpop.permute.xlu0 %1294
        %1298 = vset.pattern.permute.xlu0 0
        %1299 = vperm.xlu0 %1298, %v1049
        %v1300 = vpop.permute.xlu0 %1299
        %1303 = vset.pattern.permute.xlu0 0
        %1304 = vperm.xlu0 %1303, %v1050
        %v1305 = vpop.permute.xlu0 %1304
        %1308 = vset.pattern.permute.xlu0 0
        %1309 = vperm.xlu0 %1308, %v1051
        %v1310 = vpop.permute.xlu0 %1309
        %1313 = vset.pattern.permute.xlu0 0
        %1314 = vperm.xlu0 %1313, %v1052
        %v1315 = vpop.permute.xlu0 %1314
        %1318 = vset.pattern.permute.xlu0 0
        %1319 = vperm.xlu0 %1318, %v1053
        %v1320 = vpop.permute.xlu0 %1319
        %1323 = vset.pattern.permute.xlu0 0
        %1324 = vperm.xlu0 %1323, %v1054
        %v1325 = vpop.permute.xlu0 %1324
        %1328 = vset.pattern.permute.xlu0 0
        %1329 = vperm.xlu0 %1328, %v1055
        %v1330 = vpop.permute.xlu0 %1329
        %1333 = vset.pattern.permute.xlu0 0
        %1334 = vperm.xlu0 %1333, %v1056
        %v1335 = vpop.permute.xlu0 %1334
        %1338 = vset.pattern.permute.xlu0 0
        %1339 = vperm.xlu0 %1338, %v1057
        %v1340 = vpop.permute.xlu0 %1339
        %1343 = vset.pattern.permute.xlu0 0
        %1344 = vperm.xlu0 %1343, %v1058
        %v1345 = vpop.permute.xlu0 %1344
        %1348 = vset.pattern.permute.xlu0 0
        %1349 = vperm.xlu0 %1348, %v1059
        %v1350 = vpop.permute.xlu0 %1349
        %1353 = vset.pattern.permute.xlu0 0
        %1354 = vperm.xlu0 %1353, %v1060
        %v1355 = vpop.permute.xlu0 %1354
        %1358 = vset.pattern.permute.xlu0 0
        %1359 = vperm.xlu0 %1358, %v1061
        %v1360 = vpop.permute.xlu0 %1359
        %1363 = vset.pattern.permute.xlu0 0
        %1364 = vperm.xlu0 %1363, %v1062
        %v1365 = vpop.permute.xlu0 %1364
        %1368 = vset.pattern.permute.xlu0 0
        %1369 = vperm.xlu0 %1368, %v1063
        %v1370 = vpop.permute.xlu0 %1369
        %1373 = vset.pattern.permute.xlu0 0
        %1374 = vperm.xlu0 %1373, %v1064
        %v1375 = vpop.permute.xlu0 %1374
        %1378 = vset.pattern.permute.xlu0 0
        %1379 = vperm.xlu0 %1378, %v1065
        %v1380 = vpop.permute.xlu0 %1379
        %1383 = vset.pattern.permute.xlu0 0
        %1384 = vperm.xlu0 %1383, %v1066
        %v1385 = vpop.permute.xlu0 %1384
        %1388 = vset.pattern.permute.xlu0 0
        %1389 = vperm.xlu0 %1388, %v1067
        %v1390 = vpop.permute.xlu0 %1389
        %1393 = vset.pattern.permute.xlu0 0
        %1394 = vperm.xlu0 %1393, %v1068
        %v1395 = vpop.permute.xlu0 %1394
        %1398 = vset.pattern.permute.xlu0 0
        %1399 = vperm.xlu0 %1398, %v1069
        %v1400 = vpop.permute.xlu0 %1399
        %1403 = vset.pattern.permute.xlu0 0
        %1404 = vperm.xlu0 %1403, %v1070
        %v1405 = vpop.permute.xlu0 %1404
        %1408 = vset.pattern.permute.xlu0 0
        %1409 = vperm.xlu0 %1408, %v1071
        %v1410 = vpop.permute.xlu0 %1409
        %1413 = vset.pattern.permute.xlu0 0
        %1414 = vperm.xlu0 %1413, %v1072
        %v1415 = vpop.permute.xlu0 %1414
        %1418 = vset.pattern.permute.xlu0 0
        %1419 = vperm.xlu0 %1418, %v1073
        %v1420 = vpop.permute.xlu0 %1419
        %1423 = vset.pattern.permute.xlu0 0
        %1424 = vperm.xlu0 %1423, %v1074
        %v1425 = vpop.permute.xlu0 %1424
        %1428 = vset.pattern.permute.xlu0 0
        %1429 = vperm.xlu0 %1428, %v1075
        %v1430 = vpop.permute.xlu0 %1429
        %1433 = vset.pattern.permute.xlu0 0
        %1434 = vperm.xlu0 %1433, %v1076
        %v1435 = vpop.permute.xlu0 %1434
        %v1437 = vmul.f32 %v933, %v1080
        %v1438 = vmul.f32 %v934, %v1085
        %v1439 = vmul.f32 %v935, %v1090
        %v1440 = vmul.f32 %v936, %v1095
        %v1441 = vmul.f32 %v937, %v1100
        %v1442 = vmul.f32 %v938, %v1105
        %v1443 = vmul.f32 %v939, %v1110
        %v1444 = vmul.f32 %v940, %v1115
        %v1445 = vmul.f32 %v941, %v1120
        %v1446 = vmul.f32 %v942, %v1125
        %v1447 = vmul.f32 %v943, %v1130
        %v1448 = vmul.f32 %v944, %v1135
        %v1449 = vmul.f32 %v945, %v1140
        %v1450 = vmul.f32 %v946, %v1145
        %v1451 = vmul.f32 %v947, %v1150
        %v1452 = vmul.f32 %v948, %v1155
        %v1453 = vmul.f32 %v949, %v1160
        %v1454 = vmul.f32 %v950, %v1165
        %v1455 = vmul.f32 %v951, %v1170
        %v1456 = vmul.f32 %v952, %v1175
        %v1457 = vmul.f32 %v953, %v1180
        %v1458 = vmul.f32 %v954, %v1185
        %v1459 = vmul.f32 %v955, %v1190
        %v1460 = vmul.f32 %v956, %v1195
        %v1461 = vmul.f32 %v957, %v1200
        %v1462 = vmul.f32 %v958, %v1205
        %v1463 = vmul.f32 %v959, %v1210
        %v1464 = vmul.f32 %v960, %v1215
        %v1465 = vmul.f32 %v961, %v1220
        %v1466 = vmul.f32 %v962, %v1225
        %v1467 = vmul.f32 %v963, %v1230
        %v1468 = vmul.f32 %v964, %v1235
        %v1469 = vmul.f32 %v965, %v1240
        %v1470 = vmul.f32 %v966, %v1245
        %v1471 = vmul.f32 %v967, %v1250
        %v1472 = vmul.f32 %v968, %v1255
        %v1473 = vmul.f32 %v969, %v1260
        %v1474 = vmul.f32 %v970, %v1265
        %v1475 = vmul.f32 %v971, %v1270
        %v1476 = vmul.f32 %v972, %v1275
        %v1477 = vmul.f32 %v973, %v1280
        %v1478 = vmul.f32 %v974, %v1285
        %v1479 = vmul.f32 %v975, %v1290
        %v1480 = vmul.f32 %v976, %v1295
        %v1481 = vmul.f32 %v977, %v1300
        %v1482 = vmul.f32 %v978, %v1305
        %v1483 = vmul.f32 %v979, %v1310
        %v1484 = vmul.f32 %v980, %v1315
        %v1485 = vmul.f32 %v981, %v1320
        %v1486 = vmul.f32 %v982, %v1325
        %v1487 = vmul.f32 %v983, %v1330
        %v1488 = vmul.f32 %v984, %v1335
        %v1489 = vmul.f32 %v985, %v1340
        %v1490 = vmul.f32 %v986, %v1345
        %v1491 = vmul.f32 %v987, %v1350
        %v1492 = vmul.f32 %v988, %v1355
        %v1493 = vmul.f32 %v989, %v1360
        %v1494 = vmul.f32 %v990, %v1365
        %v1495 = vmul.f32 %v991, %v1370
        %v1496 = vmul.f32 %v992, %v1375
        %v1497 = vmul.f32 %v993, %v1380
        %v1498 = vmul.f32 %v994, %v1385
        %v1499 = vmul.f32 %v995, %v1390
        %v1500 = vmul.f32 %v996, %v1395
        %v1501 = vmul.f32 %v997, %v1400
        %v1502 = vmul.f32 %v998, %v1405
        %v1503 = vmul.f32 %v999, %v1410
        %v1504 = vmul.f32 %v1000, %v1415
        %v1505 = vmul.f32 %v1001, %v1420
        %v1506 = vmul.f32 %v1002, %v1425
        %v1507 = vmul.f32 %v1003, %v1430
        %v1508 = vmul.f32 %v1004, %v1435
        %v1509 = vld [vmem:[%s4] sm:$0x7]
        %v1510 = vld [vmem:[%s4 + $0x4] sm:$0x7]
        %v1511 = vld [vmem:[%s4 + $0x8] sm:$0x7]
        %v1512 = vld [vmem:[%s5] sm:$0x1]
        %v1514 = vlaneseq
        %v1515 = vshrl.u32 %v1514, 7
        %v1516 = vsub.s32 0, %v1515
        %v1517 = vrot.slane %v1512, %v1516
        %v1519 = vadd.f32 %v1517, 0.0
        %v1520 = vlaneseq
        %v1521 = vshrl.u32 %v1520, 7
        %v1522 = vsub.s32 0, %v1521
        %v1523 = vrot.slane %v1509, %v1522
        %v1524 = vmul.f32 %v1437, %v1523
        %v1525 = vmul.f32 %v1438, %v1523
        %v1526 = vmul.f32 %v1439, %v1523
        %v1527 = vmul.f32 %v1441, %v1523
        %v1528 = vmul.f32 %v1442, %v1523
        %v1529 = vmul.f32 %v1443, %v1523
        %v1530 = vmul.f32 %v1445, %v1523
        %v1531 = vmul.f32 %v1446, %v1523
        %v1532 = vmul.f32 %v1447, %v1523
        %v1533 = vmul.f32 %v1449, %v1523
        %v1534 = vmul.f32 %v1450, %v1523
        %v1535 = vmul.f32 %v1451, %v1523
        %v1536 = vmul.f32 %v1453, %v1523
        %v1537 = vmul.f32 %v1454, %v1523
        %v1538 = vmul.f32 %v1455, %v1523
        %v1539 = vmul.f32 %v1457, %v1523
        %v1540 = vmul.f32 %v1458, %v1523
        %v1541 = vmul.f32 %v1459, %v1523
        %v1542 = vmul.f32 %v1461, %v1523
        %v1543 = vmul.f32 %v1462, %v1523
        %v1544 = vmul.f32 %v1463, %v1523
        %v1545 = vmul.f32 %v1465, %v1523
        %v1546 = vmul.f32 %v1466, %v1523
        %v1547 = vmul.f32 %v1467, %v1523
        %v1548 = vmul.f32 %v1469, %v1523
        %v1549 = vmul.f32 %v1470, %v1523
        %v1550 = vmul.f32 %v1471, %v1523
        %v1551 = vmul.f32 %v1473, %v1523
        %v1552 = vmul.f32 %v1474, %v1523
        %v1553 = vmul.f32 %v1475, %v1523
        %v1554 = vmul.f32 %v1477, %v1523
        %v1555 = vmul.f32 %v1478, %v1523
        %v1556 = vmul.f32 %v1479, %v1523
        %v1557 = vmul.f32 %v1481, %v1523
        %v1558 = vmul.f32 %v1482, %v1523
        %v1559 = vmul.f32 %v1483, %v1523
        %v1560 = vmul.f32 %v1485, %v1523
        %v1561 = vmul.f32 %v1486, %v1523
        %v1562 = vmul.f32 %v1487, %v1523
        %v1563 = vmul.f32 %v1489, %v1523
        %v1564 = vmul.f32 %v1490, %v1523
        %v1565 = vmul.f32 %v1491, %v1523
        %v1566 = vmul.f32 %v1493, %v1523
        %v1567 = vmul.f32 %v1494, %v1523
        %v1568 = vmul.f32 %v1495, %v1523
        %v1569 = vmul.f32 %v1497, %v1523
        %v1570 = vmul.f32 %v1498, %v1523
        %v1571 = vmul.f32 %v1499, %v1523
        %v1572 = vadd.f32 %v1519, %v1524
        %v1573 = vadd.f32 %v1519, %v1525
        %v1574 = vadd.f32 %v1519, %v1526
        %v1575 = vadd.f32 %v1519, %v1527
        %v1576 = vadd.f32 %v1519, %v1528
        %v1577 = vadd.f32 %v1519, %v1529
        %v1578 = vadd.f32 %v1519, %v1530
        %v1579 = vadd.f32 %v1519, %v1531
        %v1580 = vadd.f32 %v1519, %v1532
        %v1581 = vadd.f32 %v1519, %v1533
        %v1582 = vadd.f32 %v1519, %v1534
        %v1583 = vadd.f32 %v1519, %v1535
        %v1584 = vadd.f32 %v1519, %v1536
        %v1585 = vadd.f32 %v1519, %v1537
        %v1586 = vadd.f32 %v1519, %v1538
        %v1587 = vadd.f32 %v1519, %v1539
        %v1588 = vadd.f32 %v1519, %v1540
        %v1589 = vadd.f32 %v1519, %v1541
        %v1590 = vadd.f32 %v1519, %v1542
        %v1591 = vadd.f32 %v1519, %v1543
        %v1592 = vadd.f32 %v1519, %v1544
        %v1593 = vadd.f32 %v1519, %v1545
        %v1594 = vadd.f32 %v1519, %v1546
        %v1595 = vadd.f32 %v1519, %v1547
        %v1596 = vadd.f32 %v1519, %v1548
        %v1597 = vadd.f32 %v1519, %v1549
        %v1598 = vadd.f32 %v1519, %v1550
        %v1599 = vadd.f32 %v1519, %v1551
        %v1600 = vadd.f32 %v1519, %v1552
        %v1601 = vadd.f32 %v1519, %v1553
        %v1602 = vadd.f32 %v1519, %v1554
        %v1603 = vadd.f32 %v1519, %v1555
        %v1604 = vadd.f32 %v1519, %v1556
        %v1605 = vadd.f32 %v1519, %v1557
        %v1606 = vadd.f32 %v1519, %v1558
        %v1607 = vadd.f32 %v1519, %v1559
        %v1608 = vadd.f32 %v1519, %v1560
        %v1609 = vadd.f32 %v1519, %v1561
        %v1610 = vadd.f32 %v1519, %v1562
        %v1611 = vadd.f32 %v1519, %v1563
        %v1612 = vadd.f32 %v1519, %v1564
        %v1613 = vadd.f32 %v1519, %v1565
        %v1614 = vadd.f32 %v1519, %v1566
        %v1615 = vadd.f32 %v1519, %v1567
        %v1616 = vadd.f32 %v1519, %v1568
        %v1617 = vadd.f32 %v1519, %v1569
        %v1618 = vadd.f32 %v1519, %v1570
        %v1619 = vadd.f32 %v1519, %v1571
        %v1620 = vlaneseq
        %v1621 = vshrl.u32 %v1620, 7
        %v1622 = vsub.s32 0, %v1621
        %v1623 = vrot.slane %v1510, %v1622
        %v1624 = vmul.f32 %v1441, %v1623
        %v1625 = vmul.f32 %v1442, %v1623
        %v1626 = vmul.f32 %v1443, %v1623
        %v1627 = vmul.f32 %v1445, %v1623
        %v1628 = vmul.f32 %v1446, %v1623
        %v1629 = vmul.f32 %v1447, %v1623
        %v1630 = vmul.f32 %v1449, %v1623
        %v1631 = vmul.f32 %v1450, %v1623
        %v1632 = vmul.f32 %v1451, %v1623
        %v1633 = vmul.f32 %v1453, %v1623
        %v1634 = vmul.f32 %v1454, %v1623
        %v1635 = vmul.f32 %v1455, %v1623
        %v1636 = vmul.f32 %v1457, %v1623
        %v1637 = vmul.f32 %v1458, %v1623
        %v1638 = vmul.f32 %v1459, %v1623
        %v1639 = vmul.f32 %v1461, %v1623
        %v1640 = vmul.f32 %v1462, %v1623
        %v1641 = vmul.f32 %v1463, %v1623
        %v1642 = vmul.f32 %v1465, %v1623
        %v1643 = vmul.f32 %v1466, %v1623
        %v1644 = vmul.f32 %v1467, %v1623
        %v1645 = vmul.f32 %v1469, %v1623
        %v1646 = vmul.f32 %v1470, %v1623
        %v1647 = vmul.f32 %v1471, %v1623
        %v1648 = vmul.f32 %v1473, %v1623
        %v1649 = vmul.f32 %v1474, %v1623
        %v1650 = vmul.f32 %v1475, %v1623
        %v1651 = vmul.f32 %v1477, %v1623
        %v1652 = vmul.f32 %v1478, %v1623
        %v1653 = vmul.f32 %v1479, %v1623
        %v1654 = vmul.f32 %v1481, %v1623
        %v1655 = vmul.f32 %v1482, %v1623
        %v1656 = vmul.f32 %v1483, %v1623
        %v1657 = vmul.f32 %v1485, %v1623
        %v1658 = vmul.f32 %v1486, %v1623
        %v1659 = vmul.f32 %v1487, %v1623
        %v1660 = vmul.f32 %v1489, %v1623
        %v1661 = vmul.f32 %v1490, %v1623
        %v1662 = vmul.f32 %v1491, %v1623
        %v1663 = vmul.f32 %v1493, %v1623
        %v1664 = vmul.f32 %v1494, %v1623
        %v1665 = vmul.f32 %v1495, %v1623
        %v1666 = vmul.f32 %v1497, %v1623
        %v1667 = vmul.f32 %v1498, %v1623
        %v1668 = vmul.f32 %v1499, %v1623
        %v1669 = vmul.f32 %v1501, %v1623
        %v1670 = vmul.f32 %v1502, %v1623
        %v1671 = vmul.f32 %v1503, %v1623
        %v1672 = vadd.f32 %v1572, %v1624
        %v1673 = vadd.f32 %v1573, %v1625
        %v1674 = vadd.f32 %v1574, %v1626
        %v1675 = vadd.f32 %v1575, %v1627
        %v1676 = vadd.f32 %v1576, %v1628
        %v1677 = vadd.f32 %v1577, %v1629
        %v1678 = vadd.f32 %v1578, %v1630
        %v1679 = vadd.f32 %v1579, %v1631
        %v1680 = vadd.f32 %v1580, %v1632
        %v1681 = vadd.f32 %v1581, %v1633
        %v1682 = vadd.f32 %v1582, %v1634
        %v1683 = vadd.f32 %v1583, %v1635
        %v1684 = vadd.f32 %v1584, %v1636
        %v1685 = vadd.f32 %v1585, %v1637
        %v1686 = vadd.f32 %v1586, %v1638
        %v1687 = vadd.f32 %v1587, %v1639
        %v1688 = vadd.f32 %v1588, %v1640
        %v1689 = vadd.f32 %v1589, %v1641
        %v1690 = vadd.f32 %v1590, %v1642
        %v1691 = vadd.f32 %v1591, %v1643
        %v1692 = vadd.f32 %v1592, %v1644
        %v1693 = vadd.f32 %v1593, %v1645
        %v1694 = vadd.f32 %v1594, %v1646
        %v1695 = vadd.f32 %v1595, %v1647
        %v1696 = vadd.f32 %v1596, %v1648
        %v1697 = vadd.f32 %v1597, %v1649
        %v1698 = vadd.f32 %v1598, %v1650
        %v1699 = vadd.f32 %v1599, %v1651
        %v1700 = vadd.f32 %v1600, %v1652
        %v1701 = vadd.f32 %v1601, %v1653
        %v1702 = vadd.f32 %v1602, %v1654
        %v1703 = vadd.f32 %v1603, %v1655
        %v1704 = vadd.f32 %v1604, %v1656
        %v1705 = vadd.f32 %v1605, %v1657
        %v1706 = vadd.f32 %v1606, %v1658
        %v1707 = vadd.f32 %v1607, %v1659
        %v1708 = vadd.f32 %v1608, %v1660
        %v1709 = vadd.f32 %v1609, %v1661
        %v1710 = vadd.f32 %v1610, %v1662
        %v1711 = vadd.f32 %v1611, %v1663
        %v1712 = vadd.f32 %v1612, %v1664
        %v1713 = vadd.f32 %v1613, %v1665
        %v1714 = vadd.f32 %v1614, %v1666
        %v1715 = vadd.f32 %v1615, %v1667
        %v1716 = vadd.f32 %v1616, %v1668
        %v1717 = vadd.f32 %v1617, %v1669
        %v1718 = vadd.f32 %v1618, %v1670
        %v1719 = vadd.f32 %v1619, %v1671
        %v1720 = vlaneseq
        %v1721 = vshrl.u32 %v1720, 7
        %v1722 = vsub.s32 0, %v1721
        %v1723 = vrot.slane %v1511, %v1722
        %v1724 = vmul.f32 %v1445, %v1723
        %v1725 = vmul.f32 %v1446, %v1723
        %v1726 = vmul.f32 %v1447, %v1723
        %v1727 = vmul.f32 %v1449, %v1723
        %v1728 = vmul.f32 %v1450, %v1723
        %v1729 = vmul.f32 %v1451, %v1723
        %v1730 = vmul.f32 %v1453, %v1723
        %v1731 = vmul.f32 %v1454, %v1723
        %v1732 = vmul.f32 %v1455, %v1723
        %v1733 = vmul.f32 %v1457, %v1723
        %v1734 = vmul.f32 %v1458, %v1723
        %v1735 = vmul.f32 %v1459, %v1723
        %v1736 = vmul.f32 %v1461, %v1723
        %v1737 = vmul.f32 %v1462, %v1723
        %v1738 = vmul.f32 %v1463, %v1723
        %v1739 = vmul.f32 %v1465, %v1723
        %v1740 = vmul.f32 %v1466, %v1723
        %v1741 = vmul.f32 %v1467, %v1723
        %v1742 = vmul.f32 %v1469, %v1723
        %v1743 = vmul.f32 %v1470, %v1723
        %v1744 = vmul.f32 %v1471, %v1723
        %v1745 = vmul.f32 %v1473, %v1723
        %v1746 = vmul.f32 %v1474, %v1723
        %v1747 = vmul.f32 %v1475, %v1723
        %v1748 = vmul.f32 %v1477, %v1723
        %v1749 = vmul.f32 %v1478, %v1723
        %v1750 = vmul.f32 %v1479, %v1723
        %v1751 = vmul.f32 %v1481, %v1723
        %v1752 = vmul.f32 %v1482, %v1723
        %v1753 = vmul.f32 %v1483, %v1723
        %v1754 = vmul.f32 %v1485, %v1723
        %v1755 = vmul.f32 %v1486, %v1723
        %v1756 = vmul.f32 %v1487, %v1723
        %v1757 = vmul.f32 %v1489, %v1723
        %v1758 = vmul.f32 %v1490, %v1723
        %v1759 = vmul.f32 %v1491, %v1723
        %v1760 = vmul.f32 %v1493, %v1723
        %v1761 = vmul.f32 %v1494, %v1723
        %v1762 = vmul.f32 %v1495, %v1723
        %v1763 = vmul.f32 %v1497, %v1723
        %v1764 = vmul.f32 %v1498, %v1723
        %v1765 = vmul.f32 %v1499, %v1723
        %v1766 = vmul.f32 %v1501, %v1723
        %v1767 = vmul.f32 %v1502, %v1723
        %v1768 = vmul.f32 %v1503, %v1723
        %v1769 = vmul.f32 %v1505, %v1723
        %v1770 = vmul.f32 %v1506, %v1723
        %v1771 = vmul.f32 %v1507, %v1723
        %v1772 = vadd.f32 %v1672, %v1724
        %v1773 = vadd.f32 %v1673, %v1725
        %v1774 = vadd.f32 %v1674, %v1726
        %v1775 = vadd.f32 %v1675, %v1727
        %v1776 = vadd.f32 %v1676, %v1728
        %v1777 = vadd.f32 %v1677, %v1729
        %v1778 = vadd.f32 %v1678, %v1730
        %v1779 = vadd.f32 %v1679, %v1731
        %v1780 = vadd.f32 %v1680, %v1732
        %v1781 = vadd.f32 %v1681, %v1733
        %v1782 = vadd.f32 %v1682, %v1734
        %v1783 = vadd.f32 %v1683, %v1735
        %v1784 = vadd.f32 %v1684, %v1736
        %v1785 = vadd.f32 %v1685, %v1737
        %v1786 = vadd.f32 %v1686, %v1738
        %v1787 = vadd.f32 %v1687, %v1739
        %v1788 = vadd.f32 %v1688, %v1740
        %v1789 = vadd.f32 %v1689, %v1741
        %v1790 = vadd.f32 %v1690, %v1742
        %v1791 = vadd.f32 %v1691, %v1743
        %v1792 = vadd.f32 %v1692, %v1744
        %v1793 = vadd.f32 %v1693, %v1745
        %v1794 = vadd.f32 %v1694, %v1746
        %v1795 = vadd.f32 %v1695, %v1747
        %v1796 = vadd.f32 %v1696, %v1748
        %v1797 = vadd.f32 %v1697, %v1749
        %v1798 = vadd.f32 %v1698, %v1750
        %v1799 = vadd.f32 %v1699, %v1751
        %v1800 = vadd.f32 %v1700, %v1752
        %v1801 = vadd.f32 %v1701, %v1753
        %v1802 = vadd.f32 %v1702, %v1754
        %v1803 = vadd.f32 %v1703, %v1755
        %v1804 = vadd.f32 %v1704, %v1756
        %v1805 = vadd.f32 %v1705, %v1757
        %v1806 = vadd.f32 %v1706, %v1758
        %v1807 = vadd.f32 %v1707, %v1759
        %v1808 = vadd.f32 %v1708, %v1760
        %v1809 = vadd.f32 %v1709, %v1761
        %v1810 = vadd.f32 %v1710, %v1762
        %v1811 = vadd.f32 %v1711, %v1763
        %v1812 = vadd.f32 %v1712, %v1764
        %v1813 = vadd.f32 %v1713, %v1765
        %v1814 = vadd.f32 %v1714, %v1766
        %v1815 = vadd.f32 %v1715, %v1767
        %v1816 = vadd.f32 %v1716, %v1768
        %v1817 = vadd.f32 %v1717, %v1769
        %v1818 = vadd.f32 %v1718, %v1770
        %v1819 = vadd.f32 %v1719, %v1771
        %v1820 = vlaneseq
        %v1821 = vshrl.u32 %v1820, 7
        %v1822 = vsub.s32 1, %v1821
        %v1823 = vrot.slane %v1509, %v1822
        %v1824 = vmul.f32 %v1438, %v1823
        %v1825 = vmul.f32 %v1439, %v1823
        %v1826 = vmul.f32 %v1442, %v1823
        %v1827 = vmul.f32 %v1443, %v1823
        %v1828 = vmul.f32 %v1446, %v1823
        %v1829 = vmul.f32 %v1447, %v1823
        %v1830 = vmul.f32 %v1450, %v1823
        %v1831 = vmul.f32 %v1451, %v1823
        %v1832 = vmul.f32 %v1454, %v1823
        %v1833 = vmul.f32 %v1455, %v1823
        %v1834 = vmul.f32 %v1458, %v1823
        %v1835 = vmul.f32 %v1459, %v1823
        %v1836 = vmul.f32 %v1462, %v1823
        %v1837 = vmul.f32 %v1463, %v1823
        %v1838 = vmul.f32 %v1466, %v1823
        %v1839 = vmul.f32 %v1467, %v1823
        %v1840 = vmul.f32 %v1470, %v1823
        %v1841 = vmul.f32 %v1471, %v1823
        %v1842 = vmul.f32 %v1474, %v1823
        %v1843 = vmul.f32 %v1475, %v1823
        %v1844 = vmul.f32 %v1478, %v1823
        %v1845 = vmul.f32 %v1479, %v1823
        %v1846 = vmul.f32 %v1482, %v1823
        %v1847 = vmul.f32 %v1483, %v1823
        %v1848 = vmul.f32 %v1486, %v1823
        %v1849 = vmul.f32 %v1487, %v1823
        %v1850 = vmul.f32 %v1490, %v1823
        %v1851 = vmul.f32 %v1491, %v1823
        %v1852 = vmul.f32 %v1494, %v1823
        %v1853 = vmul.f32 %v1495, %v1823
        %v1854 = vmul.f32 %v1498, %v1823
        %v1855 = vmul.f32 %v1499, %v1823
        %vm1888 = vcmask 1046528
        %v1889 = vrot.slane %v1824, 1
        %v1890 = vrot.slane %v1825, 1
        %v1891 = vsel %vm1888, %v1889, %v1890
        %v1892 = vrot.slane %v1826, 1
        %v1893 = vrot.slane %v1827, 1
        %v1894 = vsel %vm1888, %v1892, %v1893
        %v1895 = vrot.slane %v1828, 1
        %v1896 = vrot.slane %v1829, 1
        %v1897 = vsel %vm1888, %v1895, %v1896
        %v1898 = vrot.slane %v1830, 1
        %v1899 = vrot.slane %v1831, 1
        %v1900 = vsel %vm1888, %v1898, %v1899
        %v1901 = vrot.slane %v1832, 1
        %v1902 = vrot.slane %v1833, 1
        %v1903 = vsel %vm1888, %v1901, %v1902
        %v1904 = vrot.slane %v1834, 1
        %v1905 = vrot.slane %v1835, 1
        %v1906 = vsel %vm1888, %v1904, %v1905
        %v1907 = vrot.slane %v1836, 1
        %v1908 = vrot.slane %v1837, 1
        %v1909 = vsel %vm1888, %v1907, %v1908
        %v1910 = vrot.slane %v1838, 1
        %v1911 = vrot.slane %v1839, 1
        %v1912 = vsel %vm1888, %v1910, %v1911
        %v1913 = vrot.slane %v1840, 1
        %v1914 = vrot.slane %v1841, 1
        %v1915 = vsel %vm1888, %v1913, %v1914
        %v1916 = vrot.slane %v1842, 1
        %v1917 = vrot.slane %v1843, 1
        %v1918 = vsel %vm1888, %v1916, %v1917
        %v1919 = vrot.slane %v1844, 1
        %v1920 = vrot.slane %v1845, 1
        %v1921 = vsel %vm1888, %v1919, %v1920
        %v1922 = vrot.slane %v1846, 1
        %v1923 = vrot.slane %v1847, 1
        %v1924 = vsel %vm1888, %v1922, %v1923
        %v1925 = vrot.slane %v1848, 1
        %v1926 = vrot.slane %v1849, 1
        %v1927 = vsel %vm1888, %v1925, %v1926
        %v1928 = vrot.slane %v1850, 1
        %v1929 = vrot.slane %v1851, 1
        %v1930 = vsel %vm1888, %v1928, %v1929
        %v1931 = vrot.slane %v1852, 1
        %v1932 = vrot.slane %v1853, 1
        %v1933 = vsel %vm1888, %v1931, %v1932
        %v1934 = vrot.slane %v1854, 1
        %v1935 = vrot.slane %v1855, 1
        %v1936 = vsel %vm1888, %v1934, %v1935
        %v1985 = vadd.f32 %v1772, %v1889
        %v1986 = vadd.f32 %v1773, %v1891
        %v1987 = vadd.f32 %v1774, %v1890
        %v1988 = vadd.f32 %v1775, %v1892
        %v1989 = vadd.f32 %v1776, %v1894
        %v1990 = vadd.f32 %v1777, %v1893
        %v1991 = vadd.f32 %v1778, %v1895
        %v1992 = vadd.f32 %v1779, %v1897
        %v1993 = vadd.f32 %v1780, %v1896
        %v1994 = vadd.f32 %v1781, %v1898
        %v1995 = vadd.f32 %v1782, %v1900
        %v1996 = vadd.f32 %v1783, %v1899
        %v1997 = vadd.f32 %v1784, %v1901
        %v1998 = vadd.f32 %v1785, %v1903
        %v1999 = vadd.f32 %v1786, %v1902
        %v2000 = vadd.f32 %v1787, %v1904
        %v2001 = vadd.f32 %v1788, %v1906
        %v2002 = vadd.f32 %v1789, %v1905
        %v2003 = vadd.f32 %v1790, %v1907
        %v2004 = vadd.f32 %v1791, %v1909
        %v2005 = vadd.f32 %v1792, %v1908
        %v2006 = vadd.f32 %v1793, %v1910
        %v2007 = vadd.f32 %v1794, %v1912
        %v2008 = vadd.f32 %v1795, %v1911
        %v2009 = vadd.f32 %v1796, %v1913
        %v2010 = vadd.f32 %v1797, %v1915
        %v2011 = vadd.f32 %v1798, %v1914
        %v2012 = vadd.f32 %v1799, %v1916
        %v2013 = vadd.f32 %v1800, %v1918
        %v2014 = vadd.f32 %v1801, %v1917
        %v2015 = vadd.f32 %v1802, %v1919
        %v2016 = vadd.f32 %v1803, %v1921
        %v2017 = vadd.f32 %v1804, %v1920
        %v2018 = vadd.f32 %v1805, %v1922
        %v2019 = vadd.f32 %v1806, %v1924
        %v2020 = vadd.f32 %v1807, %v1923
        %v2021 = vadd.f32 %v1808, %v1925
        %v2022 = vadd.f32 %v1809, %v1927
        %v2023 = vadd.f32 %v1810, %v1926
        %v2024 = vadd.f32 %v1811, %v1928
        %v2025 = vadd.f32 %v1812, %v1930
        %v2026 = vadd.f32 %v1813, %v1929
        %v2027 = vadd.f32 %v1814, %v1931
        %v2028 = vadd.f32 %v1815, %v1933
        %v2029 = vadd.f32 %v1816, %v1932
        %v2030 = vadd.f32 %v1817, %v1934
        %v2031 = vadd.f32 %v1818, %v1936
        %v2032 = vadd.f32 %v1819, %v1935
        %v2033 = vlaneseq
        %v2034 = vshrl.u32 %v2033, 7
        %v2035 = vsub.s32 1, %v2034
        %v2036 = vrot.slane %v1510, %v2035
        %v2037 = vmul.f32 %v1442, %v2036
        %v2038 = vmul.f32 %v1443, %v2036
        %v2039 = vmul.f32 %v1446, %v2036
        %v2040 = vmul.f32 %v1447, %v2036
        %v2041 = vmul.f32 %v1450, %v2036
        %v2042 = vmul.f32 %v1451, %v2036
        %v2043 = vmul.f32 %v1454, %v2036
        %v2044 = vmul.f32 %v1455, %v2036
        %v2045 = vmul.f32 %v1458, %v2036
        %v2046 = vmul.f32 %v1459, %v2036
        %v2047 = vmul.f32 %v1462, %v2036
        %v2048 = vmul.f32 %v1463, %v2036
        %v2049 = vmul.f32 %v1466, %v2036
        %v2050 = vmul.f32 %v1467, %v2036
        %v2051 = vmul.f32 %v1470, %v2036
        %v2052 = vmul.f32 %v1471, %v2036
        %v2053 = vmul.f32 %v1474, %v2036
        %v2054 = vmul.f32 %v1475, %v2036
        %v2055 = vmul.f32 %v1478, %v2036
        %v2056 = vmul.f32 %v1479, %v2036
        %v2057 = vmul.f32 %v1482, %v2036
        %v2058 = vmul.f32 %v1483, %v2036
        %v2059 = vmul.f32 %v1486, %v2036
        %v2060 = vmul.f32 %v1487, %v2036
        %v2061 = vmul.f32 %v1490, %v2036
        %v2062 = vmul.f32 %v1491, %v2036
        %v2063 = vmul.f32 %v1494, %v2036
        %v2064 = vmul.f32 %v1495, %v2036
        %v2065 = vmul.f32 %v1498, %v2036
        %v2066 = vmul.f32 %v1499, %v2036
        %v2067 = vmul.f32 %v1502, %v2036
        %v2068 = vmul.f32 %v1503, %v2036
        %v2101 = vrot.slane %v2037, 1
        %v2102 = vrot.slane %v2038, 1
        %v2103 = vsel %vm1888, %v2101, %v2102
        %v2104 = vrot.slane %v2039, 1
        %v2105 = vrot.slane %v2040, 1
        %v2106 = vsel %vm1888, %v2104, %v2105
        %v2107 = vrot.slane %v2041, 1
        %v2108 = vrot.slane %v2042, 1
        %v2109 = vsel %vm1888, %v2107, %v2108
        %v2110 = vrot.slane %v2043, 1
        %v2111 = vrot.slane %v2044, 1
        %v2112 = vsel %vm1888, %v2110, %v2111
        %v2113 = vrot.slane %v2045, 1
        %v2114 = vrot.slane %v2046, 1
        %v2115 = vsel %vm1888, %v2113, %v2114
        %v2116 = vrot.slane %v2047, 1
        %v2117 = vrot.slane %v2048, 1
        %v2118 = vsel %vm1888, %v2116, %v2117
        %v2119 = vrot.slane %v2049, 1
        %v2120 = vrot.slane %v2050, 1
        %v2121 = vsel %vm1888, %v2119, %v2120
        %v2122 = vrot.slane %v2051, 1
        %v2123 = vrot.slane %v2052, 1
        %v2124 = vsel %vm1888, %v2122, %v2123
        %v2125 = vrot.slane %v2053, 1
        %v2126 = vrot.slane %v2054, 1
        %v2127 = vsel %vm1888, %v2125, %v2126
        %v2128 = vrot.slane %v2055, 1
        %v2129 = vrot.slane %v2056, 1
        %v2130 = vsel %vm1888, %v2128, %v2129
        %v2131 = vrot.slane %v2057, 1
        %v2132 = vrot.slane %v2058, 1
        %v2133 = vsel %vm1888, %v2131, %v2132
        %v2134 = vrot.slane %v2059, 1
        %v2135 = vrot.slane %v2060, 1
        %v2136 = vsel %vm1888, %v2134, %v2135
        %v2137 = vrot.slane %v2061, 1
        %v2138 = vrot.slane %v2062, 1
        %v2139 = vsel %vm1888, %v2137, %v2138
        %v2140 = vrot.slane %v2063, 1
        %v2141 = vrot.slane %v2064, 1
        %v2142 = vsel %vm1888, %v2140, %v2141
        %v2143 = vrot.slane %v2065, 1
        %v2144 = vrot.slane %v2066, 1
        %v2145 = vsel %vm1888, %v2143, %v2144
        %v2146 = vrot.slane %v2067, 1
        %v2147 = vrot.slane %v2068, 1
        %v2148 = vsel %vm1888, %v2146, %v2147
        %v2197 = vadd.f32 %v1985, %v2101
        %v2198 = vadd.f32 %v1986, %v2103
        %v2199 = vadd.f32 %v1987, %v2102
        %v2200 = vadd.f32 %v1988, %v2104
        %v2201 = vadd.f32 %v1989, %v2106
        %v2202 = vadd.f32 %v1990, %v2105
        %v2203 = vadd.f32 %v1991, %v2107
        %v2204 = vadd.f32 %v1992, %v2109
        %v2205 = vadd.f32 %v1993, %v2108
        %v2206 = vadd.f32 %v1994, %v2110
        %v2207 = vadd.f32 %v1995, %v2112
        %v2208 = vadd.f32 %v1996, %v2111
        %v2209 = vadd.f32 %v1997, %v2113
        %v2210 = vadd.f32 %v1998, %v2115
        %v2211 = vadd.f32 %v1999, %v2114
        %v2212 = vadd.f32 %v2000, %v2116
        %v2213 = vadd.f32 %v2001, %v2118
        %v2214 = vadd.f32 %v2002, %v2117
        %v2215 = vadd.f32 %v2003, %v2119
        %v2216 = vadd.f32 %v2004, %v2121
        %v2217 = vadd.f32 %v2005, %v2120
        %v2218 = vadd.f32 %v2006, %v2122
        %v2219 = vadd.f32 %v2007, %v2124
        %v2220 = vadd.f32 %v2008, %v2123
        %v2221 = vadd.f32 %v2009, %v2125
        %v2222 = vadd.f32 %v2010, %v2127
        %v2223 = vadd.f32 %v2011, %v2126
        %v2224 = vadd.f32 %v2012, %v2128
        %v2225 = vadd.f32 %v2013, %v2130
        %v2226 = vadd.f32 %v2014, %v2129
        %v2227 = vadd.f32 %v2015, %v2131
        %v2228 = vadd.f32 %v2016, %v2133
        %v2229 = vadd.f32 %v2017, %v2132
        %v2230 = vadd.f32 %v2018, %v2134
        %v2231 = vadd.f32 %v2019, %v2136
        %v2232 = vadd.f32 %v2020, %v2135
        %v2233 = vadd.f32 %v2021, %v2137
        %v2234 = vadd.f32 %v2022, %v2139
        %v2235 = vadd.f32 %v2023, %v2138
        %v2236 = vadd.f32 %v2024, %v2140
        %v2237 = vadd.f32 %v2025, %v2142
        %v2238 = vadd.f32 %v2026, %v2141
        %v2239 = vadd.f32 %v2027, %v2143
        %v2240 = vadd.f32 %v2028, %v2145
        %v2241 = vadd.f32 %v2029, %v2144
        %v2242 = vadd.f32 %v2030, %v2146
        %v2243 = vadd.f32 %v2031, %v2148
        %v2244 = vadd.f32 %v2032, %v2147
        %v2245 = vlaneseq
        %v2246 = vshrl.u32 %v2245, 7
        %v2247 = vsub.s32 1, %v2246
        %v2248 = vrot.slane %v1511, %v2247
        %v2249 = vmul.f32 %v1446, %v2248
        %v2250 = vmul.f32 %v1447, %v2248
        %v2251 = vmul.f32 %v1450, %v2248
        %v2252 = vmul.f32 %v1451, %v2248
        %v2253 = vmul.f32 %v1454, %v2248
        %v2254 = vmul.f32 %v1455, %v2248
        %v2255 = vmul.f32 %v1458, %v2248
        %v2256 = vmul.f32 %v1459, %v2248
        %v2257 = vmul.f32 %v1462, %v2248
        %v2258 = vmul.f32 %v1463, %v2248
        %v2259 = vmul.f32 %v1466, %v2248
        %v2260 = vmul.f32 %v1467, %v2248
        %v2261 = vmul.f32 %v1470, %v2248
        %v2262 = vmul.f32 %v1471, %v2248
        %v2263 = vmul.f32 %v1474, %v2248
        %v2264 = vmul.f32 %v1475, %v2248
        %v2265 = vmul.f32 %v1478, %v2248
        %v2266 = vmul.f32 %v1479, %v2248
        %v2267 = vmul.f32 %v1482, %v2248
        %v2268 = vmul.f32 %v1483, %v2248
        %v2269 = vmul.f32 %v1486, %v2248
        %v2270 = vmul.f32 %v1487, %v2248
        %v2271 = vmul.f32 %v1490, %v2248
        %v2272 = vmul.f32 %v1491, %v2248
        %v2273 = vmul.f32 %v1494, %v2248
        %v2274 = vmul.f32 %v1495, %v2248
        %v2275 = vmul.f32 %v1498, %v2248
        %v2276 = vmul.f32 %v1499, %v2248
        %v2277 = vmul.f32 %v1502, %v2248
        %v2278 = vmul.f32 %v1503, %v2248
        %v2279 = vmul.f32 %v1506, %v2248
        %v2280 = vmul.f32 %v1507, %v2248
        %v2313 = vrot.slane %v2249, 1
        %v2314 = vrot.slane %v2250, 1
        %v2315 = vsel %vm1888, %v2313, %v2314
        %v2316 = vrot.slane %v2251, 1
        %v2317 = vrot.slane %v2252, 1
        %v2318 = vsel %vm1888, %v2316, %v2317
        %v2319 = vrot.slane %v2253, 1
        %v2320 = vrot.slane %v2254, 1
        %v2321 = vsel %vm1888, %v2319, %v2320
        %v2322 = vrot.slane %v2255, 1
        %v2323 = vrot.slane %v2256, 1
        %v2324 = vsel %vm1888, %v2322, %v2323
        %v2325 = vrot.slane %v2257, 1
        %v2326 = vrot.slane %v2258, 1
        %v2327 = vsel %vm1888, %v2325, %v2326
        %v2328 = vrot.slane %v2259, 1
        %v2329 = vrot.slane %v2260, 1
        %v2330 = vsel %vm1888, %v2328, %v2329
        %v2331 = vrot.slane %v2261, 1
        %v2332 = vrot.slane %v2262, 1
        %v2333 = vsel %vm1888, %v2331, %v2332
        %v2334 = vrot.slane %v2263, 1
        %v2335 = vrot.slane %v2264, 1
        %v2336 = vsel %vm1888, %v2334, %v2335
        %v2337 = vrot.slane %v2265, 1
        %v2338 = vrot.slane %v2266, 1
        %v2339 = vsel %vm1888, %v2337, %v2338
        %v2340 = vrot.slane %v2267, 1
        %v2341 = vrot.slane %v2268, 1
        %v2342 = vsel %vm1888, %v2340, %v2341
        %v2343 = vrot.slane %v2269, 1
        %v2344 = vrot.slane %v2270, 1
        %v2345 = vsel %vm1888, %v2343, %v2344
        %v2346 = vrot.slane %v2271, 1
        %v2347 = vrot.slane %v2272, 1
        %v2348 = vsel %vm1888, %v2346, %v2347
        %v2349 = vrot.slane %v2273, 1
        %v2350 = vrot.slane %v2274, 1
        %v2351 = vsel %vm1888, %v2349, %v2350
        %v2352 = vrot.slane %v2275, 1
        %v2353 = vrot.slane %v2276, 1
        %v2354 = vsel %vm1888, %v2352, %v2353
        %v2355 = vrot.slane %v2277, 1
        %v2356 = vrot.slane %v2278, 1
        %v2357 = vsel %vm1888, %v2355, %v2356
        %v2358 = vrot.slane %v2279, 1
        %v2359 = vrot.slane %v2280, 1
        %v2360 = vsel %vm1888, %v2358, %v2359
        %v2409 = vadd.f32 %v2197, %v2313
        %v2410 = vadd.f32 %v2198, %v2315
        %v2411 = vadd.f32 %v2199, %v2314
        %v2412 = vadd.f32 %v2200, %v2316
        %v2413 = vadd.f32 %v2201, %v2318
        %v2414 = vadd.f32 %v2202, %v2317
        %v2415 = vadd.f32 %v2203, %v2319
        %v2416 = vadd.f32 %v2204, %v2321
        %v2417 = vadd.f32 %v2205, %v2320
        %v2418 = vadd.f32 %v2206, %v2322
        %v2419 = vadd.f32 %v2207, %v2324
        %v2420 = vadd.f32 %v2208, %v2323
        %v2421 = vadd.f32 %v2209, %v2325
        %v2422 = vadd.f32 %v2210, %v2327
        %v2423 = vadd.f32 %v2211, %v2326
        %v2424 = vadd.f32 %v2212, %v2328
        %v2425 = vadd.f32 %v2213, %v2330
        %v2426 = vadd.f32 %v2214, %v2329
        %v2427 = vadd.f32 %v2215, %v2331
        %v2428 = vadd.f32 %v2216, %v2333
        %v2429 = vadd.f32 %v2217, %v2332
        %v2430 = vadd.f32 %v2218, %v2334
        %v2431 = vadd.f32 %v2219, %v2336
        %v2432 = vadd.f32 %v2220, %v2335
        %v2433 = vadd.f32 %v2221, %v2337
        %v2434 = vadd.f32 %v2222, %v2339
        %v2435 = vadd.f32 %v2223, %v2338
        %v2436 = vadd.f32 %v2224, %v2340
        %v2437 = vadd.f32 %v2225, %v2342
        %v2438 = vadd.f32 %v2226, %v2341
        %v2439 = vadd.f32 %v2227, %v2343
        %v2440 = vadd.f32 %v2228, %v2345
        %v2441 = vadd.f32 %v2229, %v2344
        %v2442 = vadd.f32 %v2230, %v2346
        %v2443 = vadd.f32 %v2231, %v2348
        %v2444 = vadd.f32 %v2232, %v2347
        %v2445 = vadd.f32 %v2233, %v2349
        %v2446 = vadd.f32 %v2234, %v2351
        %v2447 = vadd.f32 %v2235, %v2350
        %v2448 = vadd.f32 %v2236, %v2352
        %v2449 = vadd.f32 %v2237, %v2354
        %v2450 = vadd.f32 %v2238, %v2353
        %v2451 = vadd.f32 %v2239, %v2355
        %v2452 = vadd.f32 %v2240, %v2357
        %v2453 = vadd.f32 %v2241, %v2356
        %v2454 = vadd.f32 %v2242, %v2358
        %v2455 = vadd.f32 %v2243, %v2360
        %v2456 = vadd.f32 %v2244, %v2359
        %v2457 = vlaneseq
        %v2458 = vshrl.u32 %v2457, 7
        %v2459 = vsub.s32 2, %v2458
        %v2460 = vrot.slane %v1509, %v2459
        %v2461 = vmul.f32 %v1438, %v2460
        %v2462 = vmul.f32 %v1439, %v2460
        %v2463 = vmul.f32 %v1440, %v2460
        %v2464 = vmul.f32 %v1442, %v2460
        %v2465 = vmul.f32 %v1443, %v2460
        %v2466 = vmul.f32 %v1444, %v2460
        %v2467 = vmul.f32 %v1446, %v2460
        %v2468 = vmul.f32 %v1447, %v2460
        %v2469 = vmul.f32 %v1448, %v2460
        %v2470 = vmul.f32 %v1450, %v2460
        %v2471 = vmul.f32 %v1451, %v2460
        %v2472 = vmul.f32 %v1452, %v2460
        %v2473 = vmul.f32 %v1454, %v2460
        %v2474 = vmul.f32 %v1455, %v2460
        %v2475 = vmul.f32 %v1456, %v2460
        %v2476 = vmul.f32 %v1458, %v2460
        %v2477 = vmul.f32 %v1459, %v2460
        %v2478 = vmul.f32 %v1460, %v2460
        %v2479 = vmul.f32 %v1462, %v2460
        %v2480 = vmul.f32 %v1463, %v2460
        %v2481 = vmul.f32 %v1464, %v2460
        %v2482 = vmul.f32 %v1466, %v2460
        %v2483 = vmul.f32 %v1467, %v2460
        %v2484 = vmul.f32 %v1468, %v2460
        %v2485 = vmul.f32 %v1470, %v2460
        %v2486 = vmul.f32 %v1471, %v2460
        %v2487 = vmul.f32 %v1472, %v2460
        %v2488 = vmul.f32 %v1474, %v2460
        %v2489 = vmul.f32 %v1475, %v2460
        %v2490 = vmul.f32 %v1476, %v2460
        %v2491 = vmul.f32 %v1478, %v2460
        %v2492 = vmul.f32 %v1479, %v2460
        %v2493 = vmul.f32 %v1480, %v2460
        %v2494 = vmul.f32 %v1482, %v2460
        %v2495 = vmul.f32 %v1483, %v2460
        %v2496 = vmul.f32 %v1484, %v2460
        %v2497 = vmul.f32 %v1486, %v2460
        %v2498 = vmul.f32 %v1487, %v2460
        %v2499 = vmul.f32 %v1488, %v2460
        %v2500 = vmul.f32 %v1490, %v2460
        %v2501 = vmul.f32 %v1491, %v2460
        %v2502 = vmul.f32 %v1492, %v2460
        %v2503 = vmul.f32 %v1494, %v2460
        %v2504 = vmul.f32 %v1495, %v2460
        %v2505 = vmul.f32 %v1496, %v2460
        %v2506 = vmul.f32 %v1498, %v2460
        %v2507 = vmul.f32 %v1499, %v2460
        %v2508 = vmul.f32 %v1500, %v2460
        %vm2557 = vcmask 1045504
        %v2558 = vrot.slane %v2461, 2
        %v2559 = vrot.slane %v2462, 2
        %v2560 = vsel %vm2557, %v2558, %v2559
        %v2561 = vrot.slane %v2463, 2
        %v2562 = vsel %vm2557, %v2559, %v2561
        %v2563 = vrot.slane %v2464, 2
        %v2564 = vrot.slane %v2465, 2
        %v2565 = vsel %vm2557, %v2563, %v2564
        %v2566 = vrot.slane %v2466, 2
        %v2567 = vsel %vm2557, %v2564, %v2566
        %v2568 = vrot.slane %v2467, 2
        %v2569 = vrot.slane %v2468, 2
        %v2570 = vsel %vm2557, %v2568, %v2569
        %v2571 = vrot.slane %v2469, 2
        %v2572 = vsel %vm2557, %v2569, %v2571
        %v2573 = vrot.slane %v2470, 2
        %v2574 = vrot.slane %v2471, 2
        %v2575 = vsel %vm2557, %v2573, %v2574
        %v2576 = vrot.slane %v2472, 2
        %v2577 = vsel %vm2557, %v2574, %v2576
        %v2578 = vrot.slane %v2473, 2
        %v2579 = vrot.slane %v2474, 2
        %v2580 = vsel %vm2557, %v2578, %v2579
        %v2581 = vrot.slane %v2475, 2
        %v2582 = vsel %vm2557, %v2579, %v2581
        %v2583 = vrot.slane %v2476, 2
        %v2584 = vrot.slane %v2477, 2
        %v2585 = vsel %vm2557, %v2583, %v2584
        %v2586 = vrot.slane %v2478, 2
        %v2587 = vsel %vm2557, %v2584, %v2586
        %v2588 = vrot.slane %v2479, 2
        %v2589 = vrot.slane %v2480, 2
        %v2590 = vsel %vm2557, %v2588, %v2589
        %v2591 = vrot.slane %v2481, 2
        %v2592 = vsel %vm2557, %v2589, %v2591
        %v2593 = vrot.slane %v2482, 2
        %v2594 = vrot.slane %v2483, 2
        %v2595 = vsel %vm2557, %v2593, %v2594
        %v2596 = vrot.slane %v2484, 2
        %v2597 = vsel %vm2557, %v2594, %v2596
        %v2598 = vrot.slane %v2485, 2
        %v2599 = vrot.slane %v2486, 2
        %v2600 = vsel %vm2557, %v2598, %v2599
        %v2601 = vrot.slane %v2487, 2
        %v2602 = vsel %vm2557, %v2599, %v2601
        %v2603 = vrot.slane %v2488, 2
        %v2604 = vrot.slane %v2489, 2
        %v2605 = vsel %vm2557, %v2603, %v2604
        %v2606 = vrot.slane %v2490, 2
        %v2607 = vsel %vm2557, %v2604, %v2606
        %v2608 = vrot.slane %v2491, 2
        %v2609 = vrot.slane %v2492, 2
        %v2610 = vsel %vm2557, %v2608, %v2609
        %v2611 = vrot.slane %v2493, 2
        %v2612 = vsel %vm2557, %v2609, %v2611
        %v2613 = vrot.slane %v2494, 2
        %v2614 = vrot.slane %v2495, 2
        %v2615 = vsel %vm2557, %v2613, %v2614
        %v2616 = vrot.slane %v2496, 2
        %v2617 = vsel %vm2557, %v2614, %v2616
        %v2618 = vrot.slane %v2497, 2
        %v2619 = vrot.slane %v2498, 2
        %v2620 = vsel %vm2557, %v2618, %v2619
        %v2621 = vrot.slane %v2499, 2
        %v2622 = vsel %vm2557, %v2619, %v2621
        %v2623 = vrot.slane %v2500, 2
        %v2624 = vrot.slane %v2501, 2
        %v2625 = vsel %vm2557, %v2623, %v2624
        %v2626 = vrot.slane %v2502, 2
        %v2627 = vsel %vm2557, %v2624, %v2626
        %v2628 = vrot.slane %v2503, 2
        %v2629 = vrot.slane %v2504, 2
        %v2630 = vsel %vm2557, %v2628, %v2629
        %v2631 = vrot.slane %v2505, 2
        %v2632 = vsel %vm2557, %v2629, %v2631
        %v2633 = vrot.slane %v2506, 2
        %v2634 = vrot.slane %v2507, 2
        %v2635 = vsel %vm2557, %v2633, %v2634
        %v2636 = vrot.slane %v2508, 2
        %v2637 = vsel %vm2557, %v2634, %v2636
        %v2686 = vadd.f32 %v2409, %v2558
        %v2687 = vadd.f32 %v2410, %v2560
        %v2688 = vadd.f32 %v2411, %v2562
        %v2689 = vadd.f32 %v2412, %v2563
        %v2690 = vadd.f32 %v2413, %v2565
        %v2691 = vadd.f32 %v2414, %v2567
        %v2692 = vadd.f32 %v2415, %v2568
        %v2693 = vadd.f32 %v2416, %v2570
        %v2694 = vadd.f32 %v2417, %v2572
        %v2695 = vadd.f32 %v2418, %v2573
        %v2696 = vadd.f32 %v2419, %v2575
        %v2697 = vadd.f32 %v2420, %v2577
        %v2698 = vadd.f32 %v2421, %v2578
        %v2699 = vadd.f32 %v2422, %v2580
        %v2700 = vadd.f32 %v2423, %v2582
        %v2701 = vadd.f32 %v2424, %v2583
        %v2702 = vadd.f32 %v2425, %v2585
        %v2703 = vadd.f32 %v2426, %v2587
        %v2704 = vadd.f32 %v2427, %v2588
        %v2705 = vadd.f32 %v2428, %v2590
        %v2706 = vadd.f32 %v2429, %v2592
        %v2707 = vadd.f32 %v2430, %v2593
        %v2708 = vadd.f32 %v2431, %v2595
        %v2709 = vadd.f32 %v2432, %v2597
        %v2710 = vadd.f32 %v2433, %v2598
        %v2711 = vadd.f32 %v2434, %v2600
        %v2712 = vadd.f32 %v2435, %v2602
        %v2713 = vadd.f32 %v2436, %v2603
        %v2714 = vadd.f32 %v2437, %v2605
        %v2715 = vadd.f32 %v2438, %v2607
        %v2716 = vadd.f32 %v2439, %v2608
        %v2717 = vadd.f32 %v2440, %v2610
        %v2718 = vadd.f32 %v2441, %v2612
        %v2719 = vadd.f32 %v2442, %v2613
        %v2720 = vadd.f32 %v2443, %v2615
        %v2721 = vadd.f32 %v2444, %v2617
        %v2722 = vadd.f32 %v2445, %v2618
        %v2723 = vadd.f32 %v2446, %v2620
        %v2724 = vadd.f32 %v2447, %v2622
        %v2725 = vadd.f32 %v2448, %v2623
        %v2726 = vadd.f32 %v2449, %v2625
        %v2727 = vadd.f32 %v2450, %v2627
        %v2728 = vadd.f32 %v2451, %v2628
        %v2729 = vadd.f32 %v2452, %v2630
        %v2730 = vadd.f32 %v2453, %v2632
        %v2731 = vadd.f32 %v2454, %v2633
        %v2732 = vadd.f32 %v2455, %v2635
        %v2733 = vadd.f32 %v2456, %v2637
        %v2734 = vlaneseq
        %v2735 = vshrl.u32 %v2734, 7
        %v2736 = vsub.s32 2, %v2735
        %v2737 = vrot.slane %v1510, %v2736
        %v2738 = vmul.f32 %v1442, %v2737
        %v2739 = vmul.f32 %v1443, %v2737
        %v2740 = vmul.f32 %v1444, %v2737
        %v2741 = vmul.f32 %v1446, %v2737
        %v2742 = vmul.f32 %v1447, %v2737
        %v2743 = vmul.f32 %v1448, %v2737
        %v2744 = vmul.f32 %v1450, %v2737
        %v2745 = vmul.f32 %v1451, %v2737
        %v2746 = vmul.f32 %v1452, %v2737
        %v2747 = vmul.f32 %v1454, %v2737
        %v2748 = vmul.f32 %v1455, %v2737
        %v2749 = vmul.f32 %v1456, %v2737
        %v2750 = vmul.f32 %v1458, %v2737
        %v2751 = vmul.f32 %v1459, %v2737
        %v2752 = vmul.f32 %v1460, %v2737
        %v2753 = vmul.f32 %v1462, %v2737
        %v2754 = vmul.f32 %v1463, %v2737
        %v2755 = vmul.f32 %v1464, %v2737
        %v2756 = vmul.f32 %v1466, %v2737
        %v2757 = vmul.f32 %v1467, %v2737
        %v2758 = vmul.f32 %v1468, %v2737
        %v2759 = vmul.f32 %v1470, %v2737
        %v2760 = vmul.f32 %v1471, %v2737
        %v2761 = vmul.f32 %v1472, %v2737
        %v2762 = vmul.f32 %v1474, %v2737
        %v2763 = vmul.f32 %v1475, %v2737
        %v2764 = vmul.f32 %v1476, %v2737
        %v2765 = vmul.f32 %v1478, %v2737
        %v2766 = vmul.f32 %v1479, %v2737
        %v2767 = vmul.f32 %v1480, %v2737
        %v2768 = vmul.f32 %v1482, %v2737
        %v2769 = vmul.f32 %v1483, %v2737
        %v2770 = vmul.f32 %v1484, %v2737
        %v2771 = vmul.f32 %v1486, %v2737
        %v2772 = vmul.f32 %v1487, %v2737
        %v2773 = vmul.f32 %v1488, %v2737
        %v2774 = vmul.f32 %v1490, %v2737
        %v2775 = vmul.f32 %v1491, %v2737
        %v2776 = vmul.f32 %v1492, %v2737
        %v2777 = vmul.f32 %v1494, %v2737
        %v2778 = vmul.f32 %v1495, %v2737
        %v2779 = vmul.f32 %v1496, %v2737
        %v2780 = vmul.f32 %v1498, %v2737
        %v2781 = vmul.f32 %v1499, %v2737
        %v2782 = vmul.f32 %v1500, %v2737
        %v2783 = vmul.f32 %v1502, %v2737
        %v2784 = vmul.f32 %v1503, %v2737
        %v2785 = vmul.f32 %v1504, %v2737
        %v2834 = vrot.slane %v2738, 2
        %v2835 = vrot.slane %v2739, 2
        %v2836 = vsel %vm2557, %v2834, %v2835
        %v2837 = vrot.slane %v2740, 2
        %v2838 = vsel %vm2557, %v2835, %v2837
        %v2839 = vrot.slane %v2741, 2
        %v2840 = vrot.slane %v2742, 2
        %v2841 = vsel %vm2557, %v2839, %v2840
        %v2842 = vrot.slane %v2743, 2
        %v2843 = vsel %vm2557, %v2840, %v2842
        %v2844 = vrot.slane %v2744, 2
        %v2845 = vrot.slane %v2745, 2
        %v2846 = vsel %vm2557, %v2844, %v2845
        %v2847 = vrot.slane %v2746, 2
        %v2848 = vsel %vm2557, %v2845, %v2847
        %v2849 = vrot.slane %v2747, 2
        %v2850 = vrot.slane %v2748, 2
        %v2851 = vsel %vm2557, %v2849, %v2850
        %v2852 = vrot.slane %v2749, 2
        %v2853 = vsel %vm2557, %v2850, %v2852
        %v2854 = vrot.slane %v2750, 2
        %v2855 = vrot.slane %v2751, 2
        %v2856 = vsel %vm2557, %v2854, %v2855
        %v2857 = vrot.slane %v2752, 2
        %v2858 = vsel %vm2557, %v2855, %v2857
        %v2859 = vrot.slane %v2753, 2
        %v2860 = vrot.slane %v2754, 2
        %v2861 = vsel %vm2557, %v2859, %v2860
        %v2862 = vrot.slane %v2755, 2
        %v2863 = vsel %vm2557, %v2860, %v2862
        %v2864 = vrot.slane %v2756, 2
        %v2865 = vrot.slane %v2757, 2
        %v2866 = vsel %vm2557, %v2864, %v2865
        %v2867 = vrot.slane %v2758, 2
        %v2868 = vsel %vm2557, %v2865, %v2867
        %v2869 = vrot.slane %v2759, 2
        %v2870 = vrot.slane %v2760, 2
        %v2871 = vsel %vm2557, %v2869, %v2870
        %v2872 = vrot.slane %v2761, 2
        %v2873 = vsel %vm2557, %v2870, %v2872
        %v2874 = vrot.slane %v2762, 2
        %v2875 = vrot.slane %v2763, 2
        %v2876 = vsel %vm2557, %v2874, %v2875
        %v2877 = vrot.slane %v2764, 2
        %v2878 = vsel %vm2557, %v2875, %v2877
        %v2879 = vrot.slane %v2765, 2
        %v2880 = vrot.slane %v2766, 2
        %v2881 = vsel %vm2557, %v2879, %v2880
        %v2882 = vrot.slane %v2767, 2
        %v2883 = vsel %vm2557, %v2880, %v2882
        %v2884 = vrot.slane %v2768, 2
        %v2885 = vrot.slane %v2769, 2
        %v2886 = vsel %vm2557, %v2884, %v2885
        %v2887 = vrot.slane %v2770, 2
        %v2888 = vsel %vm2557, %v2885, %v2887
        %v2889 = vrot.slane %v2771, 2
        %v2890 = vrot.slane %v2772, 2
        %v2891 = vsel %vm2557, %v2889, %v2890
        %v2892 = vrot.slane %v2773, 2
        %v2893 = vsel %vm2557, %v2890, %v2892
        %v2894 = vrot.slane %v2774, 2
        %v2895 = vrot.slane %v2775, 2
        %v2896 = vsel %vm2557, %v2894, %v2895
        %v2897 = vrot.slane %v2776, 2
        %v2898 = vsel %vm2557, %v2895, %v2897
        %v2899 = vrot.slane %v2777, 2
        %v2900 = vrot.slane %v2778, 2
        %v2901 = vsel %vm2557, %v2899, %v2900
        %v2902 = vrot.slane %v2779, 2
        %v2903 = vsel %vm2557, %v2900, %v2902
        %v2904 = vrot.slane %v2780, 2
        %v2905 = vrot.slane %v2781, 2
        %v2906 = vsel %vm2557, %v2904, %v2905
        %v2907 = vrot.slane %v2782, 2
        %v2908 = vsel %vm2557, %v2905, %v2907
        %v2909 = vrot.slane %v2783, 2
        %v2910 = vrot.slane %v2784, 2
        %v2911 = vsel %vm2557, %v2909, %v2910
        %v2912 = vrot.slane %v2785, 2
        %v2913 = vsel %vm2557, %v2910, %v2912
        %v2962 = vadd.f32 %v2686, %v2834
        %v2963 = vadd.f32 %v2687, %v2836
        %v2964 = vadd.f32 %v2688, %v2838
        %v2965 = vadd.f32 %v2689, %v2839
        %v2966 = vadd.f32 %v2690, %v2841
        %v2967 = vadd.f32 %v2691, %v2843
        %v2968 = vadd.f32 %v2692, %v2844
        %v2969 = vadd.f32 %v2693, %v2846
        %v2970 = vadd.f32 %v2694, %v2848
        %v2971 = vadd.f32 %v2695, %v2849
        %v2972 = vadd.f32 %v2696, %v2851
        %v2973 = vadd.f32 %v2697, %v2853
        %v2974 = vadd.f32 %v2698, %v2854
        %v2975 = vadd.f32 %v2699, %v2856
        %v2976 = vadd.f32 %v2700, %v2858
        %v2977 = vadd.f32 %v2701, %v2859
        %v2978 = vadd.f32 %v2702, %v2861
        %v2979 = vadd.f32 %v2703, %v2863
        %v2980 = vadd.f32 %v2704, %v2864
        %v2981 = vadd.f32 %v2705, %v2866
        %v2982 = vadd.f32 %v2706, %v2868
        %v2983 = vadd.f32 %v2707, %v2869
        %v2984 = vadd.f32 %v2708, %v2871
        %v2985 = vadd.f32 %v2709, %v2873
        %v2986 = vadd.f32 %v2710, %v2874
        %v2987 = vadd.f32 %v2711, %v2876
        %v2988 = vadd.f32 %v2712, %v2878
        %v2989 = vadd.f32 %v2713, %v2879
        %v2990 = vadd.f32 %v2714, %v2881
        %v2991 = vadd.f32 %v2715, %v2883
        %v2992 = vadd.f32 %v2716, %v2884
        %v2993 = vadd.f32 %v2717, %v2886
        %v2994 = vadd.f32 %v2718, %v2888
        %v2995 = vadd.f32 %v2719, %v2889
        %v2996 = vadd.f32 %v2720, %v2891
        %v2997 = vadd.f32 %v2721, %v2893
        %v2998 = vadd.f32 %v2722, %v2894
        %v2999 = vadd.f32 %v2723, %v2896
        %v3000 = vadd.f32 %v2724, %v2898
        %v3001 = vadd.f32 %v2725, %v2899
        %v3002 = vadd.f32 %v2726, %v2901
        %v3003 = vadd.f32 %v2727, %v2903
        %v3004 = vadd.f32 %v2728, %v2904
        %v3005 = vadd.f32 %v2729, %v2906
        %v3006 = vadd.f32 %v2730, %v2908
        %v3007 = vadd.f32 %v2731, %v2909
        %v3008 = vadd.f32 %v2732, %v2911
        %v3009 = vadd.f32 %v2733, %v2913
        %v3010 = vlaneseq
        %v3011 = vshrl.u32 %v3010, 7
        %v3012 = vsub.s32 2, %v3011
        %v3013 = vrot.slane %v1511, %v3012
        %v3014 = vmul.f32 %v1446, %v3013
        %v3015 = vmul.f32 %v1447, %v3013
        %v3016 = vmul.f32 %v1448, %v3013
        %v3017 = vmul.f32 %v1450, %v3013
        %v3018 = vmul.f32 %v1451, %v3013
        %v3019 = vmul.f32 %v1452, %v3013
        %v3020 = vmul.f32 %v1454, %v3013
        %v3021 = vmul.f32 %v1455, %v3013
        %v3022 = vmul.f32 %v1456, %v3013
        %v3023 = vmul.f32 %v1458, %v3013
        %v3024 = vmul.f32 %v1459, %v3013
        %v3025 = vmul.f32 %v1460, %v3013
        %v3026 = vmul.f32 %v1462, %v3013
        %v3027 = vmul.f32 %v1463, %v3013
        %v3028 = vmul.f32 %v1464, %v3013
        %v3029 = vmul.f32 %v1466, %v3013
        %v3030 = vmul.f32 %v1467, %v3013
        %v3031 = vmul.f32 %v1468, %v3013
        %v3032 = vmul.f32 %v1470, %v3013
        %v3033 = vmul.f32 %v1471, %v3013
        %v3034 = vmul.f32 %v1472, %v3013
        %v3035 = vmul.f32 %v1474, %v3013
        %v3036 = vmul.f32 %v1475, %v3013
        %v3037 = vmul.f32 %v1476, %v3013
        %v3038 = vmul.f32 %v1478, %v3013
        %v3039 = vmul.f32 %v1479, %v3013
        %v3040 = vmul.f32 %v1480, %v3013
        %v3041 = vmul.f32 %v1482, %v3013
        %v3042 = vmul.f32 %v1483, %v3013
        %v3043 = vmul.f32 %v1484, %v3013
        %v3044 = vmul.f32 %v1486, %v3013
        %v3045 = vmul.f32 %v1487, %v3013
        %v3046 = vmul.f32 %v1488, %v3013
        %v3047 = vmul.f32 %v1490, %v3013
        %v3048 = vmul.f32 %v1491, %v3013
        %v3049 = vmul.f32 %v1492, %v3013
        %v3050 = vmul.f32 %v1494, %v3013
        %v3051 = vmul.f32 %v1495, %v3013
        %v3052 = vmul.f32 %v1496, %v3013
        %v3053 = vmul.f32 %v1498, %v3013
        %v3054 = vmul.f32 %v1499, %v3013
        %v3055 = vmul.f32 %v1500, %v3013
        %v3056 = vmul.f32 %v1502, %v3013
        %v3057 = vmul.f32 %v1503, %v3013
        %v3058 = vmul.f32 %v1504, %v3013
        %v3059 = vmul.f32 %v1506, %v3013
        %v3060 = vmul.f32 %v1507, %v3013
        %v3061 = vmul.f32 %v1508, %v3013
        %v3110 = vrot.slane %v3014, 2
        %v3111 = vrot.slane %v3015, 2
        %v3112 = vsel %vm2557, %v3110, %v3111
        %v3113 = vrot.slane %v3016, 2
        %v3114 = vsel %vm2557, %v3111, %v3113
        %v3115 = vrot.slane %v3017, 2
        %v3116 = vrot.slane %v3018, 2
        %v3117 = vsel %vm2557, %v3115, %v3116
        %v3118 = vrot.slane %v3019, 2
        %v3119 = vsel %vm2557, %v3116, %v3118
        %v3120 = vrot.slane %v3020, 2
        %v3121 = vrot.slane %v3021, 2
        %v3122 = vsel %vm2557, %v3120, %v3121
        %v3123 = vrot.slane %v3022, 2
        %v3124 = vsel %vm2557, %v3121, %v3123
        %v3125 = vrot.slane %v3023, 2
        %v3126 = vrot.slane %v3024, 2
        %v3127 = vsel %vm2557, %v3125, %v3126
        %v3128 = vrot.slane %v3025, 2
        %v3129 = vsel %vm2557, %v3126, %v3128
        %v3130 = vrot.slane %v3026, 2
        %v3131 = vrot.slane %v3027, 2
        %v3132 = vsel %vm2557, %v3130, %v3131
        %v3133 = vrot.slane %v3028, 2
        %v3134 = vsel %vm2557, %v3131, %v3133
        %v3135 = vrot.slane %v3029, 2
        %v3136 = vrot.slane %v3030, 2
        %v3137 = vsel %vm2557, %v3135, %v3136
        %v3138 = vrot.slane %v3031, 2
        %v3139 = vsel %vm2557, %v3136, %v3138
        %v3140 = vrot.slane %v3032, 2
        %v3141 = vrot.slane %v3033, 2
        %v3142 = vsel %vm2557, %v3140, %v3141
        %v3143 = vrot.slane %v3034, 2
        %v3144 = vsel %vm2557, %v3141, %v3143
        %v3145 = vrot.slane %v3035, 2
        %v3146 = vrot.slane %v3036, 2
        %v3147 = vsel %vm2557, %v3145, %v3146
        %v3148 = vrot.slane %v3037, 2
        %v3149 = vsel %vm2557, %v3146, %v3148
        %v3150 = vrot.slane %v3038, 2
        %v3151 = vrot.slane %v3039, 2
        %v3152 = vsel %vm2557, %v3150, %v3151
        %v3153 = vrot.slane %v3040, 2
        %v3154 = vsel %vm2557, %v3151, %v3153
        %v3155 = vrot.slane %v3041, 2
        %v3156 = vrot.slane %v3042, 2
        %v3157 = vsel %vm2557, %v3155, %v3156
        %v3158 = vrot.slane %v3043, 2
        %v3159 = vsel %vm2557, %v3156, %v3158
        %v3160 = vrot.slane %v3044, 2
        %v3161 = vrot.slane %v3045, 2
        %v3162 = vsel %vm2557, %v3160, %v3161
        %v3163 = vrot.slane %v3046, 2
        %v3164 = vsel %vm2557, %v3161, %v3163
        %v3165 = vrot.slane %v3047, 2
        %v3166 = vrot.slane %v3048, 2
        %v3167 = vsel %vm2557, %v3165, %v3166
        %v3168 = vrot.slane %v3049, 2
        %v3169 = vsel %vm2557, %v3166, %v3168
        %v3170 = vrot.slane %v3050, 2
        %v3171 = vrot.slane %v3051, 2
        %v3172 = vsel %vm2557, %v3170, %v3171
        %v3173 = vrot.slane %v3052, 2
        %v3174 = vsel %vm2557, %v3171, %v3173
        %v3175 = vrot.slane %v3053, 2
        %v3176 = vrot.slane %v3054, 2
        %v3177 = vsel %vm2557, %v3175, %v3176
        %v3178 = vrot.slane %v3055, 2
        %v3179 = vsel %vm2557, %v3176, %v3178
        %v3180 = vrot.slane %v3056, 2
        %v3181 = vrot.slane %v3057, 2
        %v3182 = vsel %vm2557, %v3180, %v3181
        %v3183 = vrot.slane %v3058, 2
        %v3184 = vsel %vm2557, %v3181, %v3183
        %v3185 = vrot.slane %v3059, 2
        %v3186 = vrot.slane %v3060, 2
        %v3187 = vsel %vm2557, %v3185, %v3186
        %v3188 = vrot.slane %v3061, 2
        %v3189 = vsel %vm2557, %v3186, %v3188
        %v3238 = vadd.f32 %v2962, %v3110
        %v3239 = vadd.f32 %v2963, %v3112
        %v3240 = vadd.f32 %v2964, %v3114
        %v3241 = vadd.f32 %v2965, %v3115
        %v3242 = vadd.f32 %v2966, %v3117
        %v3243 = vadd.f32 %v2967, %v3119
        %v3244 = vadd.f32 %v2968, %v3120
        %v3245 = vadd.f32 %v2969, %v3122
        %v3246 = vadd.f32 %v2970, %v3124
        %v3247 = vadd.f32 %v2971, %v3125
        %v3248 = vadd.f32 %v2972, %v3127
        %v3249 = vadd.f32 %v2973, %v3129
        %v3250 = vadd.f32 %v2974, %v3130
        %v3251 = vadd.f32 %v2975, %v3132
        %v3252 = vadd.f32 %v2976, %v3134
        %v3253 = vadd.f32 %v2977, %v3135
        %v3254 = vadd.f32 %v2978, %v3137
        %v3255 = vadd.f32 %v2979, %v3139
        %v3256 = vadd.f32 %v2980, %v3140
        %v3257 = vadd.f32 %v2981, %v3142
        %v3258 = vadd.f32 %v2982, %v3144
        %v3259 = vadd.f32 %v2983, %v3145
        %v3260 = vadd.f32 %v2984, %v3147
        %v3261 = vadd.f32 %v2985, %v3149
        %v3262 = vadd.f32 %v2986, %v3150
        %v3263 = vadd.f32 %v2987, %v3152
        %v3264 = vadd.f32 %v2988, %v3154
        %v3265 = vadd.f32 %v2989, %v3155
        %v3266 = vadd.f32 %v2990, %v3157
        %v3267 = vadd.f32 %v2991, %v3159
        %v3268 = vadd.f32 %v2992, %v3160
        %v3269 = vadd.f32 %v2993, %v3162
        %v3270 = vadd.f32 %v2994, %v3164
        %v3271 = vadd.f32 %v2995, %v3165
        %v3272 = vadd.f32 %v2996, %v3167
        %v3273 = vadd.f32 %v2997, %v3169
        %v3274 = vadd.f32 %v2998, %v3170
        %v3275 = vadd.f32 %v2999, %v3172
        %v3276 = vadd.f32 %v3000, %v3174
        %v3277 = vadd.f32 %v3001, %v3175
        %v3278 = vadd.f32 %v3002, %v3177
        %v3279 = vadd.f32 %v3003, %v3179
        %v3280 = vadd.f32 %v3004, %v3180
        %v3281 = vadd.f32 %v3005, %v3182
        %v3282 = vadd.f32 %v3006, %v3184
        %v3283 = vadd.f32 %v3007, %v3185
        %v3284 = vadd.f32 %v3008, %v3187
        %v3285 = vadd.f32 %v3009, %v3189
        %v3286 = vmax.f32 %v3238, 0.0
        %v3287 = vmax.f32 %v3239, 0.0
        %v3288 = vmax.f32 %v3240, 0.0
        %v3289 = vmax.f32 %v3241, 0.0
        %v3290 = vmax.f32 %v3242, 0.0
        %v3291 = vmax.f32 %v3243, 0.0
        %v3292 = vmax.f32 %v3244, 0.0
        %v3293 = vmax.f32 %v3245, 0.0
        %v3294 = vmax.f32 %v3246, 0.0
        %v3295 = vmax.f32 %v3247, 0.0
        %v3296 = vmax.f32 %v3248, 0.0
        %v3297 = vmax.f32 %v3249, 0.0
        %v3298 = vmax.f32 %v3250, 0.0
        %v3299 = vmax.f32 %v3251, 0.0
        %v3300 = vmax.f32 %v3252, 0.0
        %v3301 = vmax.f32 %v3253, 0.0
        %v3302 = vmax.f32 %v3254, 0.0
        %v3303 = vmax.f32 %v3255, 0.0
        %v3304 = vmax.f32 %v3256, 0.0
        %v3305 = vmax.f32 %v3257, 0.0
        %v3306 = vmax.f32 %v3258, 0.0
        %v3307 = vmax.f32 %v3259, 0.0
        %v3308 = vmax.f32 %v3260, 0.0
        %v3309 = vmax.f32 %v3261, 0.0
        %v3310 = vmax.f32 %v3262, 0.0
        %v3311 = vmax.f32 %v3263, 0.0
        %v3312 = vmax.f32 %v3264, 0.0
        %v3313 = vmax.f32 %v3265, 0.0
        %v3314 = vmax.f32 %v3266, 0.0
        %v3315 = vmax.f32 %v3267, 0.0
        %v3316 = vmax.f32 %v3268, 0.0
        %v3317 = vmax.f32 %v3269, 0.0
        %v3318 = vmax.f32 %v3270, 0.0
        %v3319 = vmax.f32 %v3271, 0.0
        %v3320 = vmax.f32 %v3272, 0.0
        %v3321 = vmax.f32 %v3273, 0.0
        %v3322 = vmax.f32 %v3274, 0.0
        %v3323 = vmax.f32 %v3275, 0.0
        %v3324 = vmax.f32 %v3276, 0.0
        %v3325 = vmax.f32 %v3277, 0.0
        %v3326 = vmax.f32 %v3278, 0.0
        %v3327 = vmax.f32 %v3279, 0.0
        %v3328 = vmax.f32 %v3280, 0.0
        %v3329 = vmax.f32 %v3281, 0.0
        %v3330 = vmax.f32 %v3282, 0.0
        %v3331 = vmax.f32 %v3283, 0.0
        %v3332 = vmax.f32 %v3284, 0.0
        %v3333 = vmax.f32 %v3285, 0.0
        %vm3382 = vcmask 1040384
        %v3383 = vrot.slane %v3286, 7
        %v3384 = vrot.slane %v3287, 7
        %v3385 = vsel %vm3382, %v3383, %v3384
        %v3386 = vrot.slane %v3288, 7
        %v3387 = vsel %vm3382, %v3384, %v3386
        %v3388 = vrot.slane %v3289, 7
        %v3389 = vrot.slane %v3290, 7
        %v3390 = vsel %vm3382, %v3388, %v3389
        %v3391 = vrot.slane %v3291, 7
        %v3392 = vsel %vm3382, %v3389, %v3391
        %v3393 = vrot.slane %v3292, 7
        %v3394 = vrot.slane %v3293, 7
        %v3395 = vsel %vm3382, %v3393, %v3394
        %v3396 = vrot.slane %v3294, 7
        %v3397 = vsel %vm3382, %v3394, %v3396
        %v3398 = vrot.slane %v3295, 7
        %v3399 = vrot.slane %v3296, 7
        %v3400 = vsel %vm3382, %v3398, %v3399
        %v3401 = vrot.slane %v3297, 7
        %v3402 = vsel %vm3382, %v3399, %v3401
        %v3403 = vrot.slane %v3298, 7
        %v3404 = vrot.slane %v3299, 7
        %v3405 = vsel %vm3382, %v3403, %v3404
        %v3406 = vrot.slane %v3300, 7
        %v3407 = vsel %vm3382, %v3404, %v3406
        %v3408 = vrot.slane %v3301, 7
        %v3409 = vrot.slane %v3302, 7
        %v3410 = vsel %vm3382, %v3408, %v3409
        %v3411 = vrot.slane %v3303, 7
        %v3412 = vsel %vm3382, %v3409, %v3411
        %v3413 = vrot.slane %v3304, 7
        %v3414 = vrot.slane %v3305, 7
        %v3415 = vsel %vm3382, %v3413, %v3414
        %v3416 = vrot.slane %v3306, 7
        %v3417 = vsel %vm3382, %v3414, %v3416
        %v3418 = vrot.slane %v3307, 7
        %v3419 = vrot.slane %v3308, 7
        %v3420 = vsel %vm3382, %v3418, %v3419
        %v3421 = vrot.slane %v3309, 7
        %v3422 = vsel %vm3382, %v3419, %v3421
        %v3423 = vrot.slane %v3310, 7
        %v3424 = vrot.slane %v3311, 7
        %v3425 = vsel %vm3382, %v3423, %v3424
        %v3426 = vrot.slane %v3312, 7
        %v3427 = vsel %vm3382, %v3424, %v3426
        %v3428 = vrot.slane %v3313, 7
        %v3429 = vrot.slane %v3314, 7
        %v3430 = vsel %vm3382, %v3428, %v3429
        %v3431 = vrot.slane %v3315, 7
        %v3432 = vsel %vm3382, %v3429, %v3431
        %v3433 = vrot.slane %v3316, 7
        %v3434 = vrot.slane %v3317, 7
        %v3435 = vsel %vm3382, %v3433, %v3434
        %v3436 = vrot.slane %v3318, 7
        %v3437 = vsel %vm3382, %v3434, %v3436
        %v3438 = vrot.slane %v3319, 7
        %v3439 = vrot.slane %v3320, 7
        %v3440 = vsel %vm3382, %v3438, %v3439
        %v3441 = vrot.slane %v3321, 7
        %v3442 = vsel %vm3382, %v3439, %v3441
        %v3443 = vrot.slane %v3322, 7
        %v3444 = vrot.slane %v3323, 7
        %v3445 = vsel %vm3382, %v3443, %v3444
        %v3446 = vrot.slane %v3324, 7
        %v3447 = vsel %vm3382, %v3444, %v3446
        %v3448 = vrot.slane %v3325, 7
        %v3449 = vrot.slane %v3326, 7
        %v3450 = vsel %vm3382, %v3448, %v3449
        %v3451 = vrot.slane %v3327, 7
        %v3452 = vsel %vm3382, %v3449, %v3451
        %v3453 = vrot.slane %v3328, 7
        %v3454 = vrot.slane %v3329, 7
        %v3455 = vsel %vm3382, %v3453, %v3454
        %v3456 = vrot.slane %v3330, 7
        %v3457 = vsel %vm3382, %v3454, %v3456
        %v3458 = vrot.slane %v3331, 7
        %v3459 = vrot.slane %v3332, 7
        %v3460 = vsel %vm3382, %v3458, %v3459
        %v3461 = vrot.slane %v3333, 7
        %v3462 = vsel %vm3382, %v3459, %v3461
        %v3495 = vadd.f32 %v3385, %v3387
        %v3496 = vadd.f32 %v3495, %v3390
        %v3497 = vadd.f32 %v3496, %v3392
        %v3498 = vadd.f32 %v3497, %v3395
        %v3499 = vadd.f32 %v3498, %v3397
        %v3500 = vadd.f32 %v3499, %v3400
        %v3501 = vadd.f32 %v3500, %v3402
        %v3502 = vadd.f32 %v3501, %v3405
        %v3503 = vadd.f32 %v3502, %v3407
        %v3504 = vadd.f32 %v3503, %v3410
        %v3505 = vadd.f32 %v3504, %v3412
        %v3506 = vadd.f32 %v3505, %v3415
        %v3507 = vadd.f32 %v3506, %v3417
        %v3508 = vadd.f32 %v3507, %v3420
        %v3509 = vadd.f32 %v3508, %v3422
        %v3510 = vadd.f32 %v3509, %v3425
        %v3511 = vadd.f32 %v3510, %v3427
        %v3512 = vadd.f32 %v3511, %v3430
        %v3513 = vadd.f32 %v3512, %v3432
        %v3514 = vadd.f32 %v3513, %v3435
        %v3515 = vadd.f32 %v3514, %v3437
        %v3516 = vadd.f32 %v3515, %v3440
        %v3517 = vadd.f32 %v3516, %v3442
        %v3518 = vadd.f32 %v3517, %v3445
        %v3519 = vadd.f32 %v3518, %v3447
        %v3520 = vadd.f32 %v3519, %v3450
        %v3521 = vadd.f32 %v3520, %v3452
        %v3522 = vadd.f32 %v3521, %v3455
        %v3523 = vadd.f32 %v3522, %v3457
        %v3524 = vadd.f32 %v3523, %v3460
        %v3525 = vadd.f32 %v3524, %v3462
        %v3526 = vrot.slane %v3525, 4
        %v3527 = vadd.f32 %v3525, %v3526
        %v3528 = vrot.slane %v3527, 2
        %v3529 = vadd.f32 %v3527, %v3528
        %v3530 = vrot.slane %v3529, 1
        %v3531 = vadd.f32 %v3529, %v3530
        %v3532 = vmul.f32 %v3531, 0.00390625
        %v3533 = vpack.c.bf16 %v3532, %v3532
        %v3534 = vld [vmem:[%s6] sm:$0xf]
        %v3535 = vld [vmem:[%s6 + $0x4] sm:$0xf]
        %v3536 = vld [vmem:[%s6 + $0x8] sm:$0xf]
        %v3537 = vld [vmem:[%s6 + $0xc] sm:$0xf]
        %v3538 = vld [vmem:[%s6 + $0x10] sm:$0xf]
        %v3539 = vld [vmem:[%s6 + $0x14] sm:$0xf]
        %v3540 = vld [vmem:[%s6 + $0x18] sm:$0xf]
        %v3541 = vld [vmem:[%s6 + $0x1c] sm:$0xf]
        %v3542 = vld [vmem:[%s6 + $0x20] sm:$0xf]
        %v3543 = vld [vmem:[%s6 + $0x24] sm:$0xf]
        %v3544 = vld [vmem:[%s6 + $0x28] sm:$0xf]
        %v3545 = vld [vmem:[%s6 + $0x2c] sm:$0xf]
        %v3546 = vld [vmem:[%s6 + $0x30] sm:$0xf]
        %v3547 = vld [vmem:[%s6 + $0x34] sm:$0xf]
        %v3548 = vld [vmem:[%s6 + $0x38] sm:$0xf]
        %v3549 = vld [vmem:[%s6 + $0x3c] sm:$0xf]
        %v3550 = vld [vmem:[%s7] sm:$0x1]
        %v3567 = vunpack.c.l.b16 %v3534
        %v3568 = vunpack.c.l.b16 %v3535
        %v3569 = vunpack.c.l.b16 %v3536
        %v3570 = vunpack.c.l.b16 %v3537
        %v3571 = vunpack.c.l.b16 %v3538
        %v3572 = vunpack.c.l.b16 %v3539
        %v3573 = vunpack.c.l.b16 %v3540
        %v3574 = vunpack.c.l.b16 %v3541
        %v3575 = vunpack.c.l.b16 %v3542
        %v3576 = vunpack.c.l.b16 %v3543
        %v3577 = vunpack.c.l.b16 %v3544
        %v3578 = vunpack.c.l.b16 %v3545
        %v3579 = vunpack.c.l.b16 %v3546
        %v3580 = vunpack.c.l.b16 %v3547
        %v3581 = vunpack.c.l.b16 %v3548
        %v3582 = vunpack.c.l.b16 %v3549
        %v3583 = vpack.c.b16 %v3568, %v3567
        %v3584 = vpack.c.b16 %v3570, %v3569
        %v3585 = vpack.c.b16 %v3572, %v3571
        %v3586 = vpack.c.b16 %v3574, %v3573
        %v3587 = vpack.c.b16 %v3576, %v3575
        %v3588 = vpack.c.b16 %v3578, %v3577
        %v3589 = vpack.c.b16 %v3580, %v3579
        %v3590 = vpack.c.b16 %v3582, %v3581
        %3599 = vmatprep.subr.bf16.mxu0 0
        %3600 = vmatpush1.bf16.msra.mxu0 %v3583
        %3601 = vmatprep.subr.bf16.mxu0 0
        %3602 = vmatpush1.bf16.msra.mxu0 %v3584
        %3603 = vmatprep.subr.bf16.mxu0 0
        %3604 = vmatpush1.bf16.msra.mxu0 %v3585
        %3605 = vmatprep.subr.bf16.mxu0 0
        %3606 = vmatpush1.bf16.msra.mxu0 %v3586
        %3607 = vmatprep.subr.bf16.mxu0 0
        %3608 = vmatpush1.bf16.msra.mxu0 %v3587
        %3609 = vmatprep.subr.bf16.mxu0 0
        %3610 = vmatpush1.bf16.msra.mxu0 %v3588
        %3611 = vmatprep.subr.bf16.mxu0 0
        %3612 = vmatpush1.bf16.msra.mxu0 %v3589
        %3613 = vmatprep.subr.bf16.mxu0 0
        %3614 = vmatpush1.bf16.msra.mxu0 %v3590
        %3615 = vmatprep.subr.bf16.mxu0 0
        %3616 = vmatpush1.bf16.msra.mxu0 0
        %3617 = vmatprep.subr.bf16.mxu0 0
        %3618 = vmatpush1.bf16.msra.mxu0 0
        %3619 = vmatprep.subr.bf16.mxu0 0
        %3620 = vmatpush1.bf16.msra.mxu0 0
        %3621 = vmatprep.subr.bf16.mxu0 0
        %3622 = vmatpush1.bf16.msra.mxu0 0
        %3623 = vmatprep.subr.bf16.mxu0 0
        %3624 = vmatpush1.bf16.msra.mxu0 0
        %3625 = vmatprep.subr.bf16.mxu0 0
        %3626 = vmatpush1.bf16.msra.mxu0 0
        %3627 = vmatprep.subr.bf16.mxu0 0
        %3628 = vmatpush1.bf16.msra.mxu0 0
        %3629 = vmatprep.subr.bf16.mxu0 0
        %3630 = vmatpush1.bf16.msra.mxu0 0
        %3631 = vmatprep.mubr.bf16.mxu0 0
        %3632 = vmatmul.mubr.bf16.gmra.mrb[0].mxu0 %v3533
        %v3633 = vpop.f32.mrb[0].mxu0
        %v3634 = vadd.f32 %v3550, %v3633
        %v3635 = vpop.f32.mrb[0].mxu0
        %v3636 = vpop.f32.mrb[0].mxu0
        %v3637 = vpop.f32.mrb[0].mxu0
        %3638 = vdwg.mxu0
        %v3639 = vmax.f32 %v3634, 0.0
        %v3640 = vpack.c.bf16 %v3639, %v3639
        %v3641 = vld [vmem:[%s8] sm:$0xf]
        %v3642 = vld [vmem:[%s8 + $0x4] sm:$0xf]
        %v3643 = vld [vmem:[%s8 + $0x8] sm:$0xf]
        %v3644 = vld [vmem:[%s8 + $0xc] sm:$0xf]
        %v3645 = vld [vmem:[%s8 + $0x10] sm:$0xf]
        %v3646 = vld [vmem:[%s8 + $0x14] sm:$0xf]
        %v3647 = vld [vmem:[%s8 + $0x18] sm:$0xf]
        %v3648 = vld [vmem:[%s8 + $0x1c] sm:$0xf]
        %v3649 = vld [vmem:[%s8 + $0x20] sm:$0xf]
        %v3650 = vld [vmem:[%s8 + $0x24] sm:$0xf]
        %v3651 = vld [vmem:[%s8 + $0x28] sm:$0xf]
        %v3652 = vld [vmem:[%s8 + $0x2c] sm:$0xf]
        %v3653 = vld [vmem:[%s8 + $0x30] sm:$0xf]
        %v3654 = vld [vmem:[%s8 + $0x34] sm:$0xf]
        %v3655 = vld [vmem:[%s8 + $0x38] sm:$0xf]
        %v3656 = vld [vmem:[%s8 + $0x3c] sm:$0xf]
        %v3657 = vld [vmem:[%s9] sm:$0x1]
        %v3674 = vunpack.c.l.b16 %v3641
        %v3675 = vunpack.c.l.b16 %v3642
        %v3676 = vunpack.c.l.b16 %v3643
        %v3677 = vunpack.c.l.b16 %v3644
        %v3678 = vunpack.c.l.b16 %v3645
        %v3679 = vunpack.c.l.b16 %v3646
        %v3680 = vunpack.c.l.b16 %v3647
        %v3681 = vunpack.c.l.b16 %v3648
        %v3682 = vunpack.c.l.b16 %v3649
        %v3683 = vunpack.c.l.b16 %v3650
        %v3684 = vunpack.c.l.b16 %v3651
        %v3685 = vunpack.c.l.b16 %v3652
        %v3686 = vunpack.c.l.b16 %v3653
        %v3687 = vunpack.c.l.b16 %v3654
        %v3688 = vunpack.c.l.b16 %v3655
        %v3689 = vunpack.c.l.b16 %v3656
        %v3690 = vpack.c.b16 %v3675, %v3674
        %v3691 = vpack.c.b16 %v3677, %v3676
        %v3692 = vpack.c.b16 %v3679, %v3678
        %v3693 = vpack.c.b16 %v3681, %v3680
        %v3694 = vpack.c.b16 %v3683, %v3682
        %v3695 = vpack.c.b16 %v3685, %v3684
        %v3696 = vpack.c.b16 %v3687, %v3686
        %v3697 = vpack.c.b16 %v3689, %v3688
        %3706 = vmatprep.subr.bf16.mxu0 0
        %3707 = vmatpush1.bf16.msra.mxu0 %v3690
        %3708 = vmatprep.subr.bf16.mxu0 0
        %3709 = vmatpush1.bf16.msra.mxu0 %v3691
        %3710 = vmatprep.subr.bf16.mxu0 0
        %3711 = vmatpush1.bf16.msra.mxu0 %v3692
        %3712 = vmatprep.subr.bf16.mxu0 0
        %3713 = vmatpush1.bf16.msra.mxu0 %v3693
        %3714 = vmatprep.subr.bf16.mxu0 0
        %3715 = vmatpush1.bf16.msra.mxu0 %v3694
        %3716 = vmatprep.subr.bf16.mxu0 0
        %3717 = vmatpush1.bf16.msra.mxu0 %v3695
        %3718 = vmatprep.subr.bf16.mxu0 0
        %3719 = vmatpush1.bf16.msra.mxu0 %v3696
        %3720 = vmatprep.subr.bf16.mxu0 0
        %3721 = vmatpush1.bf16.msra.mxu0 %v3697
        %3722 = vmatprep.subr.bf16.mxu0 0
        %3723 = vmatpush1.bf16.msra.mxu0 0
        %3724 = vmatprep.subr.bf16.mxu0 0
        %3725 = vmatpush1.bf16.msra.mxu0 0
        %3726 = vmatprep.subr.bf16.mxu0 0
        %3727 = vmatpush1.bf16.msra.mxu0 0
        %3728 = vmatprep.subr.bf16.mxu0 0
        %3729 = vmatpush1.bf16.msra.mxu0 0
        %3730 = vmatprep.subr.bf16.mxu0 0
        %3731 = vmatpush1.bf16.msra.mxu0 0
        %3732 = vmatprep.subr.bf16.mxu0 0
        %3733 = vmatpush1.bf16.msra.mxu0 0
        %3734 = vmatprep.subr.bf16.mxu0 0
        %3735 = vmatpush1.bf16.msra.mxu0 0
        %3736 = vmatprep.subr.bf16.mxu0 0
        %3737 = vmatpush1.bf16.msra.mxu0 0
        %3738 = vmatprep.mubr.bf16.mxu0 0
        %3739 = vmatmul.mubr.bf16.gmra.mrb[0].mxu0 %v3640
        %v3740 = vpop.f32.mrb[0].mxu0
        %v3741 = vadd.f32 %v3657, %v3740
        %v3742 = vpop.f32.mrb[0].mxu0
        %v3743 = vpop.f32.mrb[0].mxu0
        %v3744 = vpop.f32.mrb[0].mxu0
        %3745 = vdwg.mxu0
        %v3746 = vadd.f32 %v3741, 3.0
        %v3747 = vmax.f32 %v3746, 0.0
        %v3748 = vmin.f32 %v3747, 6.0
        %v3749 = vmul.f32 %v3748, 0.16666667
        %v3750 = vlaneseq
        %v3751 = vshrl.u32 %v3750, 7
        %v3752 = vsub.s32 0, %v3751
        %v3753 = vrot.slane %v3749, %v3752
        %v3754 = vmul.f32 %v3286, %v3753
        %v3755 = vmul.f32 %v3287, %v3753
        %v3756 = vmul.f32 %v3288, %v3753
        %v3757 = vmul.f32 %v3289, %v3753
        %v3758 = vmul.f32 %v3290, %v3753
        %v3759 = vmul.f32 %v3291, %v3753
        %v3760 = vmul.f32 %v3292, %v3753
        %v3761 = vmul.f32 %v3293, %v3753
        %v3762 = vmul.f32 %v3294, %v3753
        %v3763 = vmul.f32 %v3295, %v3753
        %v3764 = vmul.f32 %v3296, %v3753
        %v3765 = vmul.f32 %v3297, %v3753
        %v3766 = vmul.f32 %v3298, %v3753
        %v3767 = vmul.f32 %v3299, %v3753
        %v3768 = vmul.f32 %v3300, %v3753
        %v3769 = vmul.f32 %v3301, %v3753
        %v3770 = vmul.f32 %v3302, %v3753
        %v3771 = vmul.f32 %v3303, %v3753
        %v3772 = vmul.f32 %v3304, %v3753
        %v3773 = vmul.f32 %v3305, %v3753
        %v3774 = vmul.f32 %v3306, %v3753
        %v3775 = vmul.f32 %v3307, %v3753
        %v3776 = vmul.f32 %v3308, %v3753
        %v3777 = vmul.f32 %v3309, %v3753
        %v3778 = vmul.f32 %v3310, %v3753
        %v3779 = vmul.f32 %v3311, %v3753
        %v3780 = vmul.f32 %v3312, %v3753
        %v3781 = vmul.f32 %v3313, %v3753
        %v3782 = vmul.f32 %v3314, %v3753
        %v3783 = vmul.f32 %v3315, %v3753
        %v3784 = vmul.f32 %v3316, %v3753
        %v3785 = vmul.f32 %v3317, %v3753
        %v3786 = vmul.f32 %v3318, %v3753
        %v3787 = vmul.f32 %v3319, %v3753
        %v3788 = vmul.f32 %v3320, %v3753
        %v3789 = vmul.f32 %v3321, %v3753
        %v3790 = vmul.f32 %v3322, %v3753
        %v3791 = vmul.f32 %v3323, %v3753
        %v3792 = vmul.f32 %v3324, %v3753
        %v3793 = vmul.f32 %v3325, %v3753
        %v3794 = vmul.f32 %v3326, %v3753
        %v3795 = vmul.f32 %v3327, %v3753
        %v3796 = vmul.f32 %v3328, %v3753
        %v3797 = vmul.f32 %v3329, %v3753
        %v3798 = vmul.f32 %v3330, %v3753
        %v3799 = vmul.f32 %v3331, %v3753
        %v3800 = vmul.f32 %v3332, %v3753
        %v3801 = vmul.f32 %v3333, %v3753
        %v3850 = vrot.slane %v3754, 7
        %v3851 = vrot.slane %v3755, 7
        %v3852 = vsel %vm3382, %v3850, %v3851
        %v3853 = vrot.slane %v3756, 7
        %v3854 = vsel %vm3382, %v3851, %v3853
        %v3855 = vrot.slane %v3757, 7
        %v3856 = vrot.slane %v3758, 7
        %v3857 = vsel %vm3382, %v3855, %v3856
        %v3858 = vrot.slane %v3759, 7
        %v3859 = vsel %vm3382, %v3856, %v3858
        %v3860 = vrot.slane %v3760, 7
        %v3861 = vrot.slane %v3761, 7
        %v3862 = vsel %vm3382, %v3860, %v3861
        %v3863 = vrot.slane %v3762, 7
        %v3864 = vsel %vm3382, %v3861, %v3863
        %v3865 = vrot.slane %v3763, 7
        %v3866 = vrot.slane %v3764, 7
        %v3867 = vsel %vm3382, %v3865, %v3866
        %v3868 = vrot.slane %v3765, 7
        %v3869 = vsel %vm3382, %v3866, %v3868
        %v3870 = vrot.slane %v3766, 7
        %v3871 = vrot.slane %v3767, 7
        %v3872 = vsel %vm3382, %v3870, %v3871
        %v3873 = vrot.slane %v3768, 7
        %v3874 = vsel %vm3382, %v3871, %v3873
        %v3875 = vrot.slane %v3769, 7
        %v3876 = vrot.slane %v3770, 7
        %v3877 = vsel %vm3382, %v3875, %v3876
        %v3878 = vrot.slane %v3771, 7
        %v3879 = vsel %vm3382, %v3876, %v3878
        %v3880 = vrot.slane %v3772, 7
        %v3881 = vrot.slane %v3773, 7
        %v3882 = vsel %vm3382, %v3880, %v3881
        %v3883 = vrot.slane %v3774, 7
        %v3884 = vsel %vm3382, %v3881, %v3883
        %v3885 = vrot.slane %v3775, 7
        %v3886 = vrot.slane %v3776, 7
        %v3887 = vsel %vm3382, %v3885, %v3886
        %v3888 = vrot.slane %v3777, 7
        %v3889 = vsel %vm3382, %v3886, %v3888
        %v3890 = vrot.slane %v3778, 7
        %v3891 = vrot.slane %v3779, 7
        %v3892 = vsel %vm3382, %v3890, %v3891
        %v3893 = vrot.slane %v3780, 7
        %v3894 = vsel %vm3382, %v3891, %v3893
        %v3895 = vrot.slane %v3781, 7
        %v3896 = vrot.slane %v3782, 7
        %v3897 = vsel %vm3382, %v3895, %v3896
        %v3898 = vrot.slane %v3783, 7
        %v3899 = vsel %vm3382, %v3896, %v3898
        %v3900 = vrot.slane %v3784, 7
        %v3901 = vrot.slane %v3785, 7
        %v3902 = vsel %vm3382, %v3900, %v3901
        %v3903 = vrot.slane %v3786, 7
        %v3904 = vsel %vm3382, %v3901, %v3903
        %v3905 = vrot.slane %v3787, 7
        %v3906 = vrot.slane %v3788, 7
        %v3907 = vsel %vm3382, %v3905, %v3906
        %v3908 = vrot.slane %v3789, 7
        %v3909 = vsel %vm3382, %v3906, %v3908
        %v3910 = vrot.slane %v3790, 7
        %v3911 = vrot.slane %v3791, 7
        %v3912 = vsel %vm3382, %v3910, %v3911
        %v3913 = vrot.slane %v3792, 7
        %v3914 = vsel %vm3382, %v3911, %v3913
        %v3915 = vrot.slane %v3793, 7
        %v3916 = vrot.slane %v3794, 7
        %v3917 = vsel %vm3382, %v3915, %v3916
        %v3918 = vrot.slane %v3795, 7
        %v3919 = vsel %vm3382, %v3916, %v3918
        %v3920 = vrot.slane %v3796, 7
        %v3921 = vrot.slane %v3797, 7
        %v3922 = vsel %vm3382, %v3920, %v3921
        %v3923 = vrot.slane %v3798, 7
        %v3924 = vsel %vm3382, %v3921, %v3923
        %v3925 = vrot.slane %v3799, 7
        %v3926 = vrot.slane %v3800, 7
        %v3927 = vsel %vm3382, %v3925, %v3926
        %v3928 = vrot.slane %v3801, 7
        %v3929 = vsel %vm3382, %v3926, %v3928
        %v3962 = vpack.c.bf16 %v3854, %v3852
        %v3963 = vpack.c.bf16 %v3859, %v3857
        %v3964 = vpack.c.bf16 %v3864, %v3862
        %v3965 = vpack.c.bf16 %v3869, %v3867
        %v3966 = vpack.c.bf16 %v3874, %v3872
        %v3967 = vpack.c.bf16 %v3879, %v3877
        %v3968 = vpack.c.bf16 %v3884, %v3882
        %v3969 = vpack.c.bf16 %v3889, %v3887
        %v3970 = vpack.c.bf16 %v3894, %v3892
        %v3971 = vpack.c.bf16 %v3899, %v3897
        %v3972 = vpack.c.bf16 %v3904, %v3902
        %v3973 = vpack.c.bf16 %v3909, %v3907
        %v3974 = vpack.c.bf16 %v3914, %v3912
        %v3975 = vpack.c.bf16 %v3919, %v3917
        %v3976 = vpack.c.bf16 %v3924, %v3922
        %v3977 = vpack.c.bf16 %v3929, %v3927
        %v3978 = vld [vmem:[%s10] sm:$0xf]
        %v3979 = vld [vmem:[%s10 + $0x4] sm:$0xf]
        %v3980 = vld [vmem:[%s10 + $0x8] sm:$0xf]
        %v3981 = vld [vmem:[%s10 + $0xc] sm:$0xf]
        %v3982 = vld [vmem:[%s10 + $0x10] sm:$0xf]
        %v3983 = vld [vmem:[%s10 + $0x14] sm:$0xf]
        %v3984 = vld [vmem:[%s10 + $0x18] sm:$0xf]
        %v3985 = vld [vmem:[%s10 + $0x1c] sm:$0xf]
        %v3986 = vld [vmem:[%s10 + $0x20] sm:$0xf]
        %v3987 = vld [vmem:[%s10 + $0x24] sm:$0xf]
        %v3988 = vld [vmem:[%s10 + $0x28] sm:$0xf]
        %v3989 = vld [vmem:[%s10 + $0x2c] sm:$0xf]
        %v3990 = vld [vmem:[%s10 + $0x30] sm:$0xf]
        %v3991 = vld [vmem:[%s10 + $0x34] sm:$0xf]
        %v3992 = vld [vmem:[%s10 + $0x38] sm:$0xf]
        %v3993 = vld [vmem:[%s10 + $0x3c] sm:$0xf]
        %v3994 = vld [vmem:[%s11] sm:$0x1]
        %v3996 = vlaneseq
        %v3997 = vshrl.u32 %v3996, 7
        %v3998 = vsub.s32 0, %v3997
        %v3999 = vrot.slane %v3994, %v3998
        %v4017 = vunpack.c.l.b16 %v3978
        %v4018 = vunpack.c.l.b16 %v3979
        %v4019 = vunpack.c.l.b16 %v3980
        %v4020 = vunpack.c.l.b16 %v3981
        %v4021 = vunpack.c.l.b16 %v3982
        %v4022 = vunpack.c.l.b16 %v3983
        %v4023 = vunpack.c.l.b16 %v3984
        %v4024 = vunpack.c.l.b16 %v3985
        %v4025 = vunpack.c.l.b16 %v3986
        %v4026 = vunpack.c.l.b16 %v3987
        %v4027 = vunpack.c.l.b16 %v3988
        %v4028 = vunpack.c.l.b16 %v3989
        %v4029 = vunpack.c.l.b16 %v3990
        %v4030 = vunpack.c.l.b16 %v3991
        %v4031 = vunpack.c.l.b16 %v3992
        %v4032 = vunpack.c.l.b16 %v3993
        %v4033 = vpack.c.b16 %v4018, %v4017
        %v4034 = vpack.c.b16 %v4020, %v4019
        %v4035 = vpack.c.b16 %v4022, %v4021
        %v4036 = vpack.c.b16 %v4024, %v4023
        %v4037 = vpack.c.b16 %v4026, %v4025
        %v4038 = vpack.c.b16 %v4028, %v4027
        %v4039 = vpack.c.b16 %v4030, %v4029
        %v4040 = vpack.c.b16 %v4032, %v4031
        %4049 = vmatprep.subr.bf16.mxu0 0
        %4050 = vmatpush1.bf16.msra.mxu0 %v4033
        %4051 = vmatprep.subr.bf16.mxu0 0
        %4052 = vmatpush1.bf16.msra.mxu0 %v4034
        %4053 = vmatprep.subr.bf16.mxu0 0
        %4054 = vmatpush1.bf16.msra.mxu0 %v4035
        %4055 = vmatprep.subr.bf16.mxu0 0
        %4056 = vmatpush1.bf16.msra.mxu0 %v4036
        %4057 = vmatprep.subr.bf16.mxu0 0
        %4058 = vmatpush1.bf16.msra.mxu0 %v4037
        %4059 = vmatprep.subr.bf16.mxu0 0
        %4060 = vmatpush1.bf16.msra.mxu0 %v4038
        %4061 = vmatprep.subr.bf16.mxu0 0
        %4062 = vmatpush1.bf16.msra.mxu0 %v4039
        %4063 = vmatprep.subr.bf16.mxu0 0
        %4064 = vmatpush1.bf16.msra.mxu0 %v4040
        %4065 = vmatprep.subr.bf16.mxu0 0
        %4066 = vmatpush1.bf16.msra.mxu0 0
        %4067 = vmatprep.subr.bf16.mxu0 0
        %4068 = vmatpush1.bf16.msra.mxu0 0
        %4069 = vmatprep.subr.bf16.mxu0 0
        %4070 = vmatpush1.bf16.msra.mxu0 0
        %4071 = vmatprep.subr.bf16.mxu0 0
        %4072 = vmatpush1.bf16.msra.mxu0 0
        %4073 = vmatprep.subr.bf16.mxu0 0
        %4074 = vmatpush1.bf16.msra.mxu0 0
        %4075 = vmatprep.subr.bf16.mxu0 0
        %4076 = vmatpush1.bf16.msra.mxu0 0
        %4077 = vmatprep.subr.bf16.mxu0 0
        %4078 = vmatpush1.bf16.msra.mxu0 0
        %4079 = vmatprep.subr.bf16.mxu0 0
        %4080 = vmatpush1.bf16.msra.mxu0 0
        %4081 = vmatprep.mubr.bf16.mxu0 0
        %4082 = vmatmul.mubr.bf16.gmra.mrb[0].mxu0 %v3962
        %v4083 = vpop.f32.mrb[0].mxu0
        %v4084 = vadd.f32 %v3999, %v4083
        %v4085 = vpop.f32.mrb[0].mxu0
        %v4086 = vpop.f32.mrb[0].mxu0
        %v4087 = vadd.f32 %v3999, %v4086
        %v4088 = vpop.f32.mrb[0].mxu0
        %4089 = vmatprep.mubr.bf16.mxu0 0
        %4090 = vmatmul.mubr.bf16.gmra.mrb[0].mxu0 %v3963
        %v4091 = vpop.f32.mrb[0].mxu0
        %v4092 = vadd.f32 %v3999, %v4091
        %v4093 = vpop.f32.mrb[0].mxu0
        %v4094 = vpop.f32.mrb[0].mxu0
        %v4095 = vadd.f32 %v3999, %v4094
        %v4096 = vpop.f32.mrb[0].mxu0
        %4097 = vmatprep.mubr.bf16.mxu0 0
        %4098 = vmatmul.mubr.bf16.gmra.mrb[0].mxu0 %v3964
        %v4099 = vpop.f32.mrb[0].mxu0
        %v4100 = vadd.f32 %v3999, %v4099
        %v4101 = vpop.f32.mrb[0].mxu0
        %v4102 = vpop.f32.mrb[0].mxu0
        %v4103 = vadd.f32 %v3999, %v4102
        %v4104 = vpop.f32.mrb[0].mxu0
        %4105 = vmatprep.mubr.bf16.mxu0 0
        %4106 = vmatmul.mubr.bf16.gmra.mrb[0].mxu0 %v3965
        %v4107 = vpop.f32.mrb[0].mxu0
        %v4108 = vadd.f32 %v3999, %v4107
        %v4109 = vpop.f32.mrb[0].mxu0
        %v4110 = vpop.f32.mrb[0].mxu0
        %v4111 = vadd.f32 %v3999, %v4110
        %v4112 = vpop.f32.mrb[0].mxu0
        %4113 = vmatprep.mubr.bf16.mxu0 0
        %4114 = vmatmul.mubr.bf16.gmra.mrb[0].mxu0 %v3966
        %v4115 = vpop.f32.mrb[0].mxu0
        %v4116 = vadd.f32 %v3999, %v4115
        %v4117 = vpop.f32.mrb[0].mxu0
        %v4118 = vpop.f32.mrb[0].mxu0
        %v4119 = vadd.f32 %v3999, %v4118
        %v4120 = vpop.f32.mrb[0].mxu0
        %4121 = vmatprep.mubr.bf16.mxu0 0
        %4122 = vmatmul.mubr.bf16.gmra.mrb[0].mxu0 %v3967
        %v4123 = vpop.f32.mrb[0].mxu0
        %v4124 = vadd.f32 %v3999, %v4123
        %v4125 = vpop.f32.mrb[0].mxu0
        %v4126 = vpop.f32.mrb[0].mxu0
        %v4127 = vadd.f32 %v3999, %v4126
        %v4128 = vpop.f32.mrb[0].mxu0
        %4129 = vmatprep.mubr.bf16.mxu0 0
        %4130 = vmatmul.mubr.bf16.gmra.mrb[0].mxu0 %v3968
        %v4131 = vpop.f32.mrb[0].mxu0
        %v4132 = vadd.f32 %v3999, %v4131
        %v4133 = vpop.f32.mrb[0].mxu0
        %v4134 = vpop.f32.mrb[0].mxu0
        %v4135 = vadd.f32 %v3999, %v4134
        %v4136 = vpop.f32.mrb[0].mxu0
        %4137 = vmatprep.mubr.bf16.mxu0 0
        %4138 = vmatmul.mubr.bf16.gmra.mrb[0].mxu0 %v3969
        %v4139 = vpop.f32.mrb[0].mxu0
        %v4140 = vadd.f32 %v3999, %v4139
        %v4141 = vpop.f32.mrb[0].mxu0
        %v4142 = vpop.f32.mrb[0].mxu0
        %v4143 = vadd.f32 %v3999, %v4142
        %v4144 = vpop.f32.mrb[0].mxu0
        %4145 = vmatprep.mubr.bf16.mxu0 0
        %4146 = vmatmul.mubr.bf16.gmra.mrb[0].mxu0 %v3970
        %v4147 = vpop.f32.mrb[0].mxu0
        %v4148 = vadd.f32 %v3999, %v4147
        %v4149 = vpop.f32.mrb[0].mxu0
        %v4150 = vpop.f32.mrb[0].mxu0
        %v4151 = vadd.f32 %v3999, %v4150
        %v4152 = vpop.f32.mrb[0].mxu0
        %4153 = vmatprep.mubr.bf16.mxu0 0
        %4154 = vmatmul.mubr.bf16.gmra.mrb[0].mxu0 %v3971
        %v4155 = vpop.f32.mrb[0].mxu0
        %v4156 = vadd.f32 %v3999, %v4155
        %v4157 = vpop.f32.mrb[0].mxu0
        %v4158 = vpop.f32.mrb[0].mxu0
        %v4159 = vadd.f32 %v3999, %v4158
        %v4160 = vpop.f32.mrb[0].mxu0
        %4161 = vmatprep.mubr.bf16.mxu0 0
        %4162 = vmatmul.mubr.bf16.gmra.mrb[0].mxu0 %v3972
        %v4163 = vpop.f32.mrb[0].mxu0
        %v4164 = vadd.f32 %v3999, %v4163
        %v4165 = vpop.f32.mrb[0].mxu0
        %v4166 = vpop.f32.mrb[0].mxu0
        %v4167 = vadd.f32 %v3999, %v4166
        %v4168 = vpop.f32.mrb[0].mxu0
        %4169 = vmatprep.mubr.bf16.mxu0 0
        %4170 = vmatmul.mubr.bf16.gmra.mrb[0].mxu0 %v3973
        %v4171 = vpop.f32.mrb[0].mxu0
        %v4172 = vadd.f32 %v3999, %v4171
        %v4173 = vpop.f32.mrb[0].mxu0
        %v4174 = vpop.f32.mrb[0].mxu0
        %v4175 = vadd.f32 %v3999, %v4174
        %v4176 = vpop.f32.mrb[0].mxu0
        %4177 = vmatprep.mubr.bf16.mxu0 0
        %4178 = vmatmul.mubr.bf16.gmra.mrb[0].mxu0 %v3974
        %v4179 = vpop.f32.mrb[0].mxu0
        %v4180 = vadd.f32 %v3999, %v4179
        %v4181 = vpop.f32.mrb[0].mxu0
        %v4182 = vpop.f32.mrb[0].mxu0
        %v4183 = vadd.f32 %v3999, %v4182
        %v4184 = vpop.f32.mrb[0].mxu0
        %4185 = vmatprep.mubr.bf16.mxu0 0
        %4186 = vmatmul.mubr.bf16.gmra.mrb[0].mxu0 %v3975
        %v4187 = vpop.f32.mrb[0].mxu0
        %v4188 = vadd.f32 %v3999, %v4187
        %v4189 = vpop.f32.mrb[0].mxu0
        %v4190 = vpop.f32.mrb[0].mxu0
        %v4191 = vadd.f32 %v3999, %v4190
        %v4192 = vpop.f32.mrb[0].mxu0
        %4193 = vmatprep.mubr.bf16.mxu0 0
        %4194 = vmatmul.mubr.bf16.gmra.mrb[0].mxu0 %v3976
        %v4195 = vpop.f32.mrb[0].mxu0
        %v4196 = vadd.f32 %v3999, %v4195
        %v4197 = vpop.f32.mrb[0].mxu0
        %v4198 = vpop.f32.mrb[0].mxu0
        %v4199 = vadd.f32 %v3999, %v4198
        %v4200 = vpop.f32.mrb[0].mxu0
        %4201 = vmatprep.mubr.bf16.mxu0 0
        %4202 = vmatmul.mubr.bf16.gmra.mrb[0].mxu0 %v3977
        %v4203 = vpop.f32.mrb[0].mxu0
        %v4204 = vadd.f32 %v3999, %v4203
        %v4205 = vpop.f32.mrb[0].mxu0
        %v4206 = vpop.f32.mrb[0].mxu0
        %v4207 = vadd.f32 %v3999, %v4206
        %v4208 = vpop.f32.mrb[0].mxu0
        %4209 = vdwg.mxu0
        %v4210 = vadd.f32 %v4084, %v438
        %v4211 = vadd.f32 %v4087, %v439
        %v4212 = vadd.f32 %v4092, %v442
        %v4213 = vadd.f32 %v4095, %v443
        %v4214 = vadd.f32 %v4100, %v446
        %v4215 = vadd.f32 %v4103, %v447
        %v4216 = vadd.f32 %v4108, %v450
        %v4217 = vadd.f32 %v4111, %v451
        %v4218 = vadd.f32 %v4116, %v454
        %v4219 = vadd.f32 %v4119, %v455
        %v4220 = vadd.f32 %v4124, %v458
        %v4221 = vadd.f32 %v4127, %v459
        %v4222 = vadd.f32 %v4132, %v462
        %v4223 = vadd.f32 %v4135, %v463
        %v4224 = vadd.f32 %v4140, %v466
        %v4225 = vadd.f32 %v4143, %v467
        %v4226 = vadd.f32 %v4148, %v470
        %v4227 = vadd.f32 %v4151, %v471
        %v4228 = vadd.f32 %v4156, %v474
        %v4229 = vadd.f32 %v4159, %v475
        %v4230 = vadd.f32 %v4164, %v478
        %v4231 = vadd.f32 %v4167, %v479
        %v4232 = vadd.f32 %v4172, %v482
        %v4233 = vadd.f32 %v4175, %v483
        %v4234 = vadd.f32 %v4180, %v486
        %v4235 = vadd.f32 %v4183, %v487
        %v4236 = vadd.f32 %v4188, %v490
        %v4237 = vadd.f32 %v4191, %v491
        %v4238 = vadd.f32 %v4196, %v494
        %v4239 = vadd.f32 %v4199, %v495
        %v4240 = vadd.f32 %v4204, %v498
        %v4241 = vadd.f32 %v4207, %v499
        %4242 = vst [vmem:[%s431] sm:$0xff] %v4210
        %4243 = vst [vmem:[%s431 + $0x8] sm:$0xff] %v4211
        %4244 = vst [vmem:[%s431 + $0x10] sm:$0xff] %v4212
        %4245 = vst [vmem:[%s431 + $0x18] sm:$0xff] %v4213
        %4246 = vst [vmem:[%s431 + $0x20] sm:$0xff] %v4214
        %4247 = vst [vmem:[%s431 + $0x28] sm:$0xff] %v4215
        %4248 = vst [vmem:[%s431 + $0x30] sm:$0xff] %v4216
        %4249 = vst [vmem:[%s431 + $0x38] sm:$0xff] %v4217
        %4250 = vst [vmem:[%s431 + $0x40] sm:$0xff] %v4218
        %4251 = vst [vmem:[%s431 + $0x48] sm:$0xff] %v4219
        %4252 = vst [vmem:[%s431 + $0x50] sm:$0xff] %v4220
        %4253 = vst [vmem:[%s431 + $0x58] sm:$0xff] %v4221
        %4254 = vst [vmem:[%s431 + $0x60] sm:$0xff] %v4222
        %4255 = vst [vmem:[%s431 + $0x68] sm:$0xff] %v4223
        %4256 = vst [vmem:[%s431 + $0x70] sm:$0xff] %v4224
        %4257 = vst [vmem:[%s431 + $0x78] sm:$0xff] %v4225
        %4258 = vst [vmem:[%s431 + $0x80] sm:$0xff] %v4226
        %4259 = vst [vmem:[%s431 + $0x88] sm:$0xff] %v4227
        %4260 = vst [vmem:[%s431 + $0x90] sm:$0xff] %v4228
        %4261 = vst [vmem:[%s431 + $0x98] sm:$0xff] %v4229
        %4262 = vst [vmem:[%s431 + $0xa0] sm:$0xff] %v4230
        %4263 = vst [vmem:[%s431 + $0xa8] sm:$0xff] %v4231
        %4264 = vst [vmem:[%s431 + $0xb0] sm:$0xff] %v4232
        %4265 = vst [vmem:[%s431 + $0xb8] sm:$0xff] %v4233
        %4266 = vst [vmem:[%s431 + $0xc0] sm:$0xff] %v4234
        %4267 = vst [vmem:[%s431 + $0xc8] sm:$0xff] %v4235
        %4268 = vst [vmem:[%s431 + $0xd0] sm:$0xff] %v4236
        %4269 = vst [vmem:[%s431 + $0xd8] sm:$0xff] %v4237
        %4270 = vst [vmem:[%s431 + $0xe0] sm:$0xff] %v4238
        %4271 = vst [vmem:[%s431 + $0xe8] sm:$0xff] %v4239
        %4272 = vst [vmem:[%s431 + $0xf0] sm:$0xff] %v4240
        %4273 = vst [vmem:[%s431 + $0xf8] sm:$0xff] %v4241
        %s4274 = sand.u32 %s294, 1
        %s4275 = scalar_lea.sflag [#allocation4], %s4274
        %s4276 = sand.u32 %s294, 1
        %s4277 = smul.addr %s4276, 256
        %s4278 = scalar_lea.vmem [#allocation5], %s4277
        // Predicated region
        $region73: #{tpu_custom_call.1} parent=67 // pred_check
          %p4279 = pneg %p304
        $region74: #{tpu_custom_call.1} parent=67 // pred_check_branch
          %4281 = sbr.rel (%p4279) target = $region76
        $region75: #{tpu_custom_call.1} parent=67 // pred_region
          %s4283 = ssub.s32 4096, 4096
          %4284 = vsyncadd %s4275, %s4283
          %s4285 = smul.addr %s29, 32
          %s4286 = smul.addr %s4285, 128
          %s4287 = scalar_lea.hbm %s12, %s4286
          %s4288 = sshll.u32 %s4278, 4
          %s4289 = int_to_ptr.vmem [resolvable:$true] %s4288
          %4294 = dma.vmem_to_hbm [thread:$0]  %s4289, 4096, %s4287, %s4275, 128, 128, 8
        $region76: #{tpu_custom_call.1} parent=67 // pred_fallthru
          _
      $region68: #{tpu_custom_call.1} parent=5 // pred_fallthru
        _
      %p4295 = scmp.le.s32.totalorder 2, %s24
      // Predicated region
      $region77: #{tpu_custom_call.1} parent=5 // pred_check
        %p4296 = pneg %p4295
      $region78: #{tpu_custom_call.1} parent=5 // pred_check_branch
        %4298 = sbr.rel (%p4296) target = $region80
      $region79: #{tpu_custom_call.1} parent=5 // pred_region
        %s4299 = ssub.s32 %s24, 2
        // Predicated region
        $region81: #{tpu_custom_call.1} parent=79 // pred_check
          %p4300 = pneg %p310
        $region82: #{tpu_custom_call.1} parent=79 // pred_check_branch
          %4302 = sbr.rel (%p4300) target = $region84
        $region83: #{tpu_custom_call.1} parent=79 // pred_region
          %s4303 = sand.u32 %s295, 1
          %s4304 = scalar_lea.sflag [#allocation4], %s4303
          %s4305 = sand.u32 %s295, 1
          %s4306 = smul.addr %s4305, 256
          %s4307 = scalar_lea.vmem [#allocation5], %s4306
          %4308 = dma.done %s4304, 4096
        $region84: #{tpu_custom_call.1} parent=79 // pred_fallthru
          _
      $region80: #{tpu_custom_call.1} parent=5 // pred_fallthru
        _
    $region6: #{tpu_custom_call.1} parent=1 // loop_footer
      %s28 = sadd.s32 1, %s24
    $region7: #{tpu_custom_call.1} parent=1 // loop_footer_branch
      %23 = sbr.rel target = $region3
    $region8: #{tpu_custom_call.1} parent=1 // loop_exit
      _
    %4309 = vsyncpa [#allocation3], 1
    %s4310 = scalar_lea.sflag [#allocation3], 1
    %4311 = vsyncpa %s4310, 1
    %4312 = vsyncpa [#allocation4], 1
    %s4313 = scalar_lea.sflag [#allocation4], 1
    %4314 = vsyncpa %s4313, 1

</llo_original>
